<compile_context>
chip_gen: v7x
topology: tpu7x:2x2x1
jax: 0.10.0
libtpu: 0.0.40
codegen_flags: <defaults>
</compile_context>

<pallas_src>
import jax
import jax.numpy as jnp
from jax.experimental import pallas as pl
from jax.experimental.pallas import tpu as pltpu


# -----------------------------------------------------------------------------
# Per-generation tuning helpers
# -----------------------------------------------------------------------------
def _vmem_budget_bytes():
    """Scoped-VMEM budget with headroom below physical capacity."""
    try:
        info = pltpu.get_tpu_info()
        cap = int(getattr(info, "vmem_capacity_bytes", 0) or 0)
    except Exception:
        cap = 0
    if cap <= 0:
        cap = 64 * 1024 * 1024          # conservative default (v7x per-TC VMEM)
    return min(cap - 16 * 1024 * 1024, int(cap * 0.8))


_BUFFERED_PROBE = None                  # (supported: bool, mode or None)


def _single_buffer_mode():
    """pl.Buffered(1) for grid-invariant operands, if this build supports it."""
    global _BUFFERED_PROBE
    if _BUFFERED_PROBE is not None:
        return _BUFFERED_PROBE

    def _copy(x_ref, o_ref):
        o_ref[...] = x_ref[...]

    try:
        mode = pl.Buffered(1)
        f = pl.pallas_call(
            _copy,
            out_shape=jax.ShapeDtypeStruct((8, 128), jnp.float32),
            grid=(2,),
            in_specs=[pl.BlockSpec((8, 128), lambda i: (0, 0),
                                   pipeline_mode=mode)],
            out_specs=pl.BlockSpec((8, 128), lambda i: (0, 0)),
        )
        jax.block_until_ready(f(jnp.zeros((8, 128), jnp.float32)))
        _BUFFERED_PROBE = (True, mode)
    except Exception:
        _BUFFERED_PROBE = (False, None)
    return _BUFFERED_PROBE


def _invariant_spec(block_shape, index_map):
    """BlockSpec for a grid-invariant operand (constant index map)."""
    ok, mode = _single_buffer_mode()
    if ok:
        return pl.BlockSpec(block_shape, index_map, pipeline_mode=mode)
    return pl.BlockSpec(block_shape, index_map)


def _round_up(x, m):
    return ((x + m - 1) // m) * m


def _pick_time_chunk(T, B, in_max, H, vmem_budget, max_tc):
    """Largest time chunk (multiple of 8, <= max_tc) whose working set fits VMEM."""
    if T < 8:
        return T

    def vmem_need(tc):
        x_io = 2 * tc * B * in_max * 2        # bf16 input chunk, double-buffered
        y_io = 2 * tc * B * H * 2             # bf16 output chunk, double-buffered
        xp = tc * B * 4 * H * 4               # f32 pre-activation scratch
        wts = 2 * (in_max + H) * 4 * H * 2    # W_ih + W_hh bf16 (worst case x2)
        misc = 6 * B * H * 4 + 4 * H * 8
        return x_io + y_io + xp + wts + misc

    tc = min(max_tc, _round_up(min(T, max_tc), 8))
    tc = max(8, (tc // 8) * 8)
    while tc > 8 and vmem_need(tc) > vmem_budget:
        tc -= 8
    return tc


# -----------------------------------------------------------------------------
# Fused (input projection + recurrence) LSTM layer kernel
# -----------------------------------------------------------------------------
def _make_lstm_layer_kernel(tc, H, last_chunk, t_last, batch_major_out, out_dtype):
    def kernel(x_ref, h0_ref, c0_ref, w_ih_ref, w_hh_ref, b_ref,
               y_ref, hT_ref, cT_ref, h_scr, c_scr, xp_scr):
        chunk = pl.program_id(0)

        @pl.when(chunk == 0)
        def _():
            h_scr[...] = h0_ref[...]
            c_scr[...] = c0_ref[...]

        B = h_scr.shape[0]
        In = x_ref.shape[-1]

        # Chunk-wide input projection (+ fused bias): one MXU GEMM, result kept
        # in VMEM scratch -- never materialized in HBM.
        x2 = x_ref[...].reshape(tc * B, In)                       # bf16
        xp = jnp.dot(x2, w_ih_ref[...],
                     preferred_element_type=jnp.float32) + b_ref[...]
        xp_scr[...] = xp.reshape(tc, B, 4 * H)

        w_hh = w_hh_ref[...]                                      # (H, 4H) bf16

        # One-tanh gate slab: sigmoid(x) = 0.5*tanh(0.5*x) + 0.5 for i/f/o,
        # plain tanh for g.  scale/offset are per-gate-column constants.
        def gate_row(i_v, f_v, g_v, o_v):
            return jnp.concatenate(
                [jnp.full((1, H), i_v, jnp.float32),
                 jnp.full((1, H), f_v, jnp.float32),
                 jnp.full((1, H), g_v, jnp.float32),
                 jnp.full((1, H), o_v, jnp.float32)], axis=1)
        scale = gate_row(0.5, 0.5, 1.0, 0.5)
        offset = gate_row(0.5, 0.5, 0.0, 0.5)

        h = h_scr[...]                                            # (B, H) f32
        c = c_scr[...]
        for t in range(tc):        # fully unrolled straight-line recurrence
            gates = xp_scr[t] + jnp.dot(h.astype(jnp.bfloat16), w_hh,
                                        preferred_element_type=jnp.float32)
            act = jnp.tanh(gates * scale) * scale + offset
            i_g = act[:, 0 * H:1 * H]
            f_g = act[:, 1 * H:2 * H]
            g_g = act[:, 2 * H:3 * H]
            o_g = act[:, 3 * H:4 * H]
            c = f_g * c + i_g * g_g
            h = o_g * jnp.tanh(c)

            if batch_major_out:
                # Last layer: write (B, T, H) directly -> the final linear needs
                # no activation transpose (fold the transpose into the store).
                y_ref[:, t, :] = h.astype(out_dtype)
            else:
                y_ref[t] = h.astype(out_dtype)                    # lane-dense store

            if t == t_last:       # statically-known last REAL timestep
                @pl.when(chunk == last_chunk)
                def _(h=h, c=c):
                    hT_ref[...] = h
                    cT_ref[...] = c

        h_scr[...] = h
        c_scr[...] = c

    return kernel


def lstm_layer_pallas(x, h0, c0, w_ih, w_hh, bias, *, t_real, tc,
                      batch_major_out, vmem_limit):
    """One LSTM layer (fused input projection + recurrence).

    x: (T_pad, B, In) bf16 time-major; h0, c0: (B, H) f32
    w_ih: (In, 4H) bf16; w_hh: (H, 4H) bf16; bias: (1, 4H) f32
    Returns y (bf16, time-major (T_pad,B,H) or batch-major (B,T_pad,H)),
    hT (B,H) f32, cT (B,H) f32 taken at the last REAL timestep.
    """
    T_pad, B, In = x.shape
    H = h0.shape[-1]
    n_chunks = T_pad // tc
    last_chunk = (t_real - 1) // tc
    t_last = (t_real - 1) % tc

    kernel = _make_lstm_layer_kernel(tc, H, last_chunk, t_last,
                                     batch_major_out, jnp.bfloat16)

    if batch_major_out:
        y_shape = (B, T_pad, H)
        y_spec = pl.BlockSpec((B, tc, H), lambda i: (0, i, 0))
    else:
        y_shape = (T_pad, B, H)
        y_spec = pl.BlockSpec((tc, B, H), lambda i: (i, 0, 0))

    grid_spec = pltpu.PrefetchScalarGridSpec(
        num_scalar_prefetch=0,
        grid=(n_chunks,),
        in_specs=[
            pl.BlockSpec((tc, B, In), lambda i: (i, 0, 0)),        # x chunk
            _invariant_spec((B, H), lambda i: (0, 0)),             # h0
            _invariant_spec((B, H), lambda i: (0, 0)),             # c0
            _invariant_spec((In, 4 * H), lambda i: (0, 0)),        # W_ih
            _invariant_spec((H, 4 * H), lambda i: (0, 0)),         # W_hh
            _invariant_spec((1, 4 * H), lambda i: (0, 0)),         # bias
        ],
        out_specs=[
            y_spec,
            pl.BlockSpec((B, H), lambda i: (0, 0)),                # hT
            pl.BlockSpec((B, H), lambda i: (0, 0)),                # cT
        ],
        scratch_shapes=[
            pltpu.VMEM((B, H), jnp.float32),            # h carry (f32)
            pltpu.VMEM((B, H), jnp.float32),            # c carry (f32)
            pltpu.VMEM((tc, B, 4 * H), jnp.float32),    # chunk pre-activations
        ],
    )
    out_shapes = (
        jax.ShapeDtypeStruct(y_shape, jnp.bfloat16),
        jax.ShapeDtypeStruct((B, H), jnp.float32),
        jax.ShapeDtypeStruct((B, H), jnp.float32),
    )
    return pl.pallas_call(
        kernel,
        out_shape=out_shapes,
        grid_spec=grid_spec,
        compiler_params=pltpu.CompilerParams(
            # Sequential recurrence: this axis MUST stay "arbitrary".
            dimension_semantics=("arbitrary",),
            vmem_limit_bytes=vmem_limit),
    )(x, h0, c0, w_ih, w_hh, bias)


# -----------------------------------------------------------------------------
# Tiled GEMM + bias (final linear)
# -----------------------------------------------------------------------------
def _matmul_bias_kernel(x_ref, w_ref, b_ref, o_ref):
    o_ref[...] = (jnp.dot(x_ref[...], w_ref[...],
                          preferred_element_type=jnp.float32) + b_ref[...])


def matmul_bias_pallas(x, w, b, *, vmem_limit, tm_target=256, tn_target=512):
    """x: (M, K) bf16, w: (K, N) bf16, b: (1, N) f32 -> (M, N) f32.

    M must be a multiple of 8 and K, N multiples of 128 (caller pads).  M/N are
    padded up to the tile size here (no gcd-degenerate tiny tiles).
    """
    M, K = x.shape
    _, N = w.shape
    tm = M if M <= tm_target else tm_target
    tn = N if N <= tn_target else tn_target
    Mp = _round_up(M, tm)
    Np = _round_up(N, tn)
    if Mp != M:
        x = jnp.pad(x, ((0, Mp - M), (0, 0)))
    if Np != N:
        w = jnp.pad(w, ((0, 0), (0, Np - N)))
        b = jnp.pad(b, ((0, 0), (0, Np - N)))

    grid_spec = pltpu.PrefetchScalarGridSpec(
        num_scalar_prefetch=0,
        grid=(Mp // tm, Np // tn),
        in_specs=[
            pl.BlockSpec((tm, K), lambda i, j: (i, 0)),
            pl.BlockSpec((K, tn), lambda i, j: (0, j)),
            pl.BlockSpec((1, tn), lambda i, j: (0, j)),
        ],
        out_specs=pl.BlockSpec((tm, tn), lambda i, j: (i, j)),
    )
    out = pl.pallas_call(
        _matmul_bias_kernel,
        out_shape=jax.ShapeDtypeStruct((Mp, Np), jnp.float32),
        grid_spec=grid_spec,
        compiler_params=pltpu.CompilerParams(
            dimension_semantics=("parallel", "parallel"),
            vmem_limit_bytes=vmem_limit),
    )(x, w, b)
    if Mp != M or Np != N:
        out = out[:M, :N]
    return out


# -----------------------------------------------------------------------------
# Padding helpers ((8, 128) alignment; zero padding is exact for the LSTM math)
# -----------------------------------------------------------------------------
def _pad_to(a, shape):
    return jnp.pad(a, [(0, s - d) for d, s in zip(a.shape, shape)])


def _pad_gate_matrix(w, in_p, h_p):
    """(in_dim, 4H) -> (in_p, 4*h_p), padding each gate block independently."""
    in_dim, g = w.shape
    h = g // 4
    w4 = w.reshape(in_dim, 4, h)
    w4 = jnp.pad(w4, ((0, in_p - in_dim), (0, 0), (0, h_p - h)))
    return w4.reshape(in_p, 4 * h_p)


def _pad_gate_bias(b, h_p):
    """(4H,) -> (1, 4*h_p), padding each gate block independently."""
    h = b.shape[0] // 4
    b4 = jnp.pad(b.reshape(4, h), ((0, 0), (0, h_p - h)))
    return b4.reshape(1, 4 * h_p)


# -----------------------------------------------------------------------------
# WordLSTM forward (JAX glue around the Pallas kernels)
# -----------------------------------------------------------------------------
def word_lstm_forward(params, x_ids, hidden):
    """
    x_ids: (B, T) int32 token indices
    hidden: (h0, c0), each (n_layers, B, H)
    returns (logits (B*T, V), (hN, cN))
    """
    h0_all, c0_all = hidden
    n_layers = len(params["lstm"])
    B, T = x_ids.shape
    H, V = params["fc_w"].shape
    F = params["emb"].shape[1]

    B_p = _round_up(B, 8)
    H_p = _round_up(H, 128)
    F_p = _round_up(F, 128)
    V_p = _round_up(V, 128)

    vmem_limit = _vmem_budget_bytes()
    max_tc = 32 if vmem_limit >= 80 * 1024 * 1024 else 16
    tc = _pick_time_chunk(T, B_p, max(F_p, H_p), H_p, vmem_limit, max_tc)
    T_pad = pl.cdiv(T, tc) * tc

    # Embedding gather, emitted directly time-major and in bf16 (no activation
    # transpose and no standalone cast pass).
    emb_p = _pad_to(params["emb"],
                    (params["emb"].shape[0], F_p)).astype(jnp.bfloat16)
    ids_p = jnp.zeros((B_p, T), jnp.int32).at[:B].set(x_ids)
    layer_in = jnp.take(emb_p, ids_p.T, axis=0)                  # (T, B_p, F_p)
    if T_pad != T:
        layer_in = jnp.pad(layer_in, ((0, T_pad - T), (0, 0), (0, 0)))

    h_finals, c_finals = [], []
    for l in range(n_layers):
        w_ih, w_hh, bias = params["lstm"][l]
        in_p = F_p if l == 0 else H_p
        last = (l == n_layers - 1)

        w_ih_p = _pad_gate_matrix(w_ih, in_p, H_p).astype(jnp.bfloat16)
        w_hh_p = _pad_gate_matrix(w_hh, H_p, H_p).astype(jnp.bfloat16)
        bias_p = _pad_gate_bias(bias, H_p)                       # f32 (1, 4H_p)
        h0_p = _pad_to(h0_all[l], (B_p, H_p))
        c0_p = _pad_to(c0_all[l], (B_p, H_p))

        y, h_f, c_f = lstm_layer_pallas(
            layer_in, h0_p, c0_p, w_ih_p, w_hh_p, bias_p,
            t_real=T, tc=tc, batch_major_out=last, vmem_limit=vmem_limit)
        h_finals.append(h_f[:B, :H])
        c_finals.append(c_f[:B, :H])
        # inter-layer dropout: identity in eval mode
        layer_in = y

    # Last layer's y is batch-major (B_p, T_pad, H_p) bf16: the reshape below is
    # a free contiguous view, so the final linear is a plain lane-dense GEMM.
    flat = layer_in.reshape(B_p * T_pad, H_p)
    # self.dropout: identity in eval mode
    fc_w_p = _pad_to(params["fc_w"], (H_p, V_p)).astype(jnp.bfloat16)
    fc_b_p = _pad_to(params["fc_b"], (1, V_p))
    logits_p = matmul_bias_pallas(flat, fc_w_p, fc_b_p, vmem_limit=vmem_limit)
    logits = logits_p.reshape(B_p, T_pad, V_p)[:B, :T, :V].reshape(B * T, V)

    return logits, (jnp.stack(h_finals), jnp.stack(c_finals))


# -----------------------------------------------------------------------------
# Deterministic parameter init (shapes follow the PyTorch module __init__)
# -----------------------------------------------------------------------------
def init_params(key, vocab_size, feature_size, n_hidden, n_layers):
    keys = jax.random.split(key, 3 + 4 * n_layers)
    scale = 0.1
    params = {
        "emb": scale * jax.random.normal(keys[0], (vocab_size, feature_size),
                                         jnp.float32),
        "fc_w": scale * jax.random.normal(keys[1], (n_hidden, vocab_size),
                                          jnp.float32),
        "fc_b": scale * jax.random.normal(keys[2], (1, vocab_size), jnp.float32),
        "lstm": [],
    }
    for l in range(n_layers):
        in_dim = feature_size if l == 0 else n_hidden
        k = keys[3 + 4 * l: 3 + 4 * (l + 1)]
        w_ih = scale * jax.random.normal(k[0], (in_dim, 4 * n_hidden), jnp.float32)
        w_hh = scale * jax.random.normal(k[1], (n_hidden, 4 * n_hidden), jnp.float32)
        b_ih = scale * jax.random.normal(k[2], (4 * n_hidden,), jnp.float32)
        b_hh = scale * jax.random.normal(k[3], (4 * n_hidden,), jnp.float32)
        params["lstm"].append((w_ih, w_hh, b_ih + b_hh))   # PyTorch gate order [i,f,g,o]
    return params


# -----------------------------------------------------------------------------
# Pure-JAX reference with matching numerics (bf16 matmuls/activations, f32 acc,
# same tanh-based sigmoid formulation as the kernel)
# -----------------------------------------------------------------------------
def _sigmoid_like_kernel(x):
    return jnp.tanh(x * 0.5) * 0.5 + 0.5


def word_lstm_reference(params, x_ids, hidden):
    h0_all, c0_all = hidden
    H = params["fc_w"].shape[0]
    emb = jnp.take(params["emb"].astype(jnp.bfloat16), x_ids, axis=0)  # (B,T,F)
    layer_in = jnp.transpose(emb, (1, 0, 2))                           # (T,B,F)
    h_fin, c_fin = [], []
    for l, (w_ih, w_hh, bias) in enumerate(params["lstm"]):
        w_ih_b = w_ih.astype(jnp.bfloat16)
        w_hh_b = w_hh.astype(jnp.bfloat16)
        xp = jnp.dot(layer_in, w_ih_b, preferred_element_type=jnp.float32) + bias

        def step(carry, xp_t):
            h, c = carry
            g = xp_t + jnp.dot(h.astype(jnp.bfloat16), w_hh_b,
                               preferred_element_type=jnp.float32)
            i = _sigmoid_like_kernel(g[:, 0 * H:1 * H])
            f = _sigmoid_like_kernel(g[:, 1 * H:2 * H])
            gg = jnp.tanh(g[:, 2 * H:3 * H])
            o = _sigmoid_like_kernel(g[:, 3 * H:4 * H])
            c_new = f * c + i * gg
            h_new = o * jnp.tanh(c_new)
            return (h_new, c_new), h_new.astype(jnp.bfloat16)

        (h_T, c_T), y = jax.lax.scan(step, (h0_all[l], c0_all[l]), xp)
        h_fin.append(h_T)
        c_fin.append(c_T)
        layer_in = y                                                   # bf16
    lstm_out = jnp.transpose(layer_in, (1, 0, 2)).reshape(-1, H)
    logits = (jnp.dot(lstm_out, params["fc_w"].astype(jnp.bfloat16),
                      preferred_element_type=jnp.float32) + params["fc_b"])
    return logits, (jnp.stack(h_fin), jnp.stack(c_fin))


# -----------------------------------------------------------------------------
# Main
# -----------------------------------------------------------------------------
if __name__ == "__main__":
    VOCAB = 64
    FEATURE = 32
    HIDDEN = 32
    N_LAYERS = 2
    BATCH = 2
    SEQ = 8

    key = jax.random.PRNGKey(0)
    k_param, k_ids = jax.random.split(key)

    params = init_params(k_param, VOCAB, FEATURE, HIDDEN, N_LAYERS)
    x_ids = jax.random.randint(k_ids, (BATCH, SEQ), 0, VOCAB, dtype=jnp.int32)

    # init_hidden equivalent: zeros of (n_layers, B, H)
    h0 = jnp.zeros((N_LAYERS, BATCH, HIDDEN), jnp.float32)
    c0 = jnp.zeros((N_LAYERS, BATCH, HIDDEN), jnp.float32)

    _single_buffer_mode()   # probe Buffered(1) support once, outside jit tracing

    fwd = jax.jit(word_lstm_forward)
    logits, (hN, cN) = fwd(params, x_ids, (h0, c0))
    jax.block_until_ready((logits, hN, cN))

    ref_logits, (ref_h, ref_c) = word_lstm_reference(params, x_ids, (h0, c0))
    assert logits.shape == (BATCH * SEQ, VOCAB)
    assert hN.shape == (N_LAYERS, BATCH, HIDDEN)
    assert cN.shape == (N_LAYERS, BATCH, HIDDEN)
    assert jnp.allclose(logits, ref_logits, atol=5e-3, rtol=5e-3), "logits mismatch"
    assert jnp.allclose(hN, ref_h, atol=5e-3, rtol=5e-3), "h_n mismatch"
    assert jnp.allclose(cN, ref_c, atol=5e-3, rtol=5e-3), "c_n mismatch"

    print("KERNEL_OK")
</pallas_src>

<mosaic_0001>
module attributes {stable_mosaic.version = 11 : i64} {
  func.func @_copy(%arg0: i32, %arg1: memref<8x128xf32, #tpu.memory_space<vmem>>, %arg2: memref<8x128xf32, #tpu.memory_space<vmem>>) attributes {dimension_semantics = [#tpu.dimension_semantics<arbitrary>], iteration_bounds = array<i64: 2>, scalar_prefetch = 0 : i64, scratch_operands = 0 : i64, tpu.core_type = #tpu.core_type<tc>, window_params = [{pipeline_mode = #tpu.pipeline_mode<synchronous>, transform_indices = @transform_0, window_bounds = array<i64: 8, 128>}, {pipeline_mode = #tpu.pipeline_mode<synchronous>, transform_indices = @transform_1, window_bounds = array<i64: 8, 128>}]} {
    %c0 = arith.constant 0 : index
    %c0_0 = arith.constant 0 : index
    %0 = vector.load %arg1[%c0, %c0_0] : memref<8x128xf32, #tpu.memory_space<vmem>>, vector<8x128xf32>
    %c0_1 = arith.constant 0 : index
    %c0_2 = arith.constant 0 : index
    %1 = vector.load %arg2[%c0_1, %c0_2] : memref<8x128xf32, #tpu.memory_space<vmem>>, vector<8x128xf32>
    tpu.vector_store %arg2[%c0_1, %c0_2], %0 {strides = array<i32>} : memref<8x128xf32, #tpu.memory_space<vmem>>, vector<8x128xf32>,
    return
  }
  func.func @transform_0(%arg0: i32) -> (i32, i32) {
    %c0_i32 = arith.constant 0 : i32
    %c0_i32_0 = arith.constant 0 : i32
    %c0_i32_1 = arith.constant 0 : i32
    return %c0_i32, %c0_i32_0 : i32, i32
  }
  func.func @transform_1(%arg0: i32) -> (i32, i32) {
    %c0_i32 = arith.constant 0 : i32
    %c0_i32_0 = arith.constant 0 : i32
    %c0_i32_1 = arith.constant 0 : i32
    return %c0_i32, %c0_i32_0 : i32, i32
  }
}

module attributes {stable_mosaic.version = 11 : i64} {
  func.func @kernel(%arg0: i32, %arg1: memref<8x8x128xbf16, #tpu.memory_space<vmem>>, %arg2: memref<8x128xf32, #tpu.memory_space<vmem>>, %arg3: memref<8x128xf32, #tpu.memory_space<vmem>>, %arg4: memref<128x512xbf16, #tpu.memory_space<vmem>>, %arg5: memref<128x512xbf16, #tpu.memory_space<vmem>>, %arg6: memref<1x512xf32, #tpu.memory_space<vmem>>, %arg7: memref<8x8x128xbf16, #tpu.memory_space<vmem>>, %arg8: memref<8x128xf32, #tpu.memory_space<vmem>>, %arg9: memref<8x128xf32, #tpu.memory_space<vmem>>, %arg10: memref<8x128xf32, #tpu.memory_space<vmem>>, %arg11: memref<8x128xf32, #tpu.memory_space<vmem>>, %arg12: memref<8x8x512xf32, #tpu.memory_space<vmem>>) attributes {dimension_semantics = [#tpu.dimension_semantics<arbitrary>], iteration_bounds = array<i64: 1>, scalar_prefetch = 0 : i64, scratch_operands = 3 : i64, tpu.core_type = #tpu.core_type<tc>, window_params = [{transform_indices = @transform_0, window_bounds = array<i64: 8, 8, 128>}, {pipeline_mode = #tpu.pipeline_mode<synchronous>, transform_indices = @transform_1, window_bounds = array<i64: 8, 128>}, {pipeline_mode = #tpu.pipeline_mode<synchronous>, transform_indices = @transform_2, window_bounds = array<i64: 8, 128>}, {pipeline_mode = #tpu.pipeline_mode<synchronous>, transform_indices = @transform_3, window_bounds = array<i64: 128, 512>}, {pipeline_mode = #tpu.pipeline_mode<synchronous>, transform_indices = @transform_4, window_bounds = array<i64: 128, 512>}, {pipeline_mode = #tpu.pipeline_mode<synchronous>, transform_indices = @transform_5, window_bounds = array<i64: 1, 512>}, {transform_indices = @transform_6, window_bounds = array<i64: 8, 8, 128>}, {pipeline_mode = #tpu.pipeline_mode<synchronous>, transform_indices = @transform_7, window_bounds = array<i64: 8, 128>}, {pipeline_mode = #tpu.pipeline_mode<synchronous>, transform_indices = @transform_8, window_bounds = array<i64: 8, 128>}]} {
    %c0_i32 = arith.constant 0 : i32
    %0 = arith.cmpi eq, %arg0, %c0_i32 : i32
    %1 = arith.extui %0 : i1 to i32
    %c0_i32_0 = arith.constant 0 : i32
    %2 = arith.cmpi ne, %1, %c0_i32_0 : i32
    scf.if %2 {
      %c0_79 = arith.constant 0 : index
      %c0_80 = arith.constant 0 : index
      %230 = vector.load %arg2[%c0_79, %c0_80] : memref<8x128xf32, #tpu.memory_space<vmem>>, vector<8x128xf32>
      %c0_81 = arith.constant 0 : index
      %c0_82 = arith.constant 0 : index
      %231 = vector.load %arg10[%c0_81, %c0_82] : memref<8x128xf32, #tpu.memory_space<vmem>>, vector<8x128xf32>
      tpu.vector_store %arg10[%c0_81, %c0_82], %230 {strides = array<i32>} : memref<8x128xf32, #tpu.memory_space<vmem>>, vector<8x128xf32>,
      %c0_83 = arith.constant 0 : index
      %c0_84 = arith.constant 0 : index
      %232 = vector.load %arg3[%c0_83, %c0_84] : memref<8x128xf32, #tpu.memory_space<vmem>>, vector<8x128xf32>
      %c0_85 = arith.constant 0 : index
      %c0_86 = arith.constant 0 : index
      %233 = vector.load %arg11[%c0_85, %c0_86] : memref<8x128xf32, #tpu.memory_space<vmem>>, vector<8x128xf32>
      tpu.vector_store %arg11[%c0_85, %c0_86], %232 {strides = array<i32>} : memref<8x128xf32, #tpu.memory_space<vmem>>, vector<8x128xf32>,
    } else {
    }
    %c0 = arith.constant 0 : index
    %c0_1 = arith.constant 0 : index
    %c0_2 = arith.constant 0 : index
    %3 = vector.load %arg1[%c0, %c0_1, %c0_2] : memref<8x8x128xbf16, #tpu.memory_space<vmem>>, vector<8x8x128xbf16>
    %4 = vector.shape_cast %3 : vector<8x8x128xbf16> to vector<64x128xbf16>
    %c0_3 = arith.constant 0 : index
    %c0_4 = arith.constant 0 : index
    %5 = vector.load %arg4[%c0_3, %c0_4] : memref<128x512xbf16, #tpu.memory_space<vmem>>, vector<128x512xbf16>
    %cst = arith.constant dense<0.000000e+00> : vector<64x512xf32>
    %6 = tpu.matmul %4, %5, %cst {dimension_numbers = #tpu.dot_dimension_numbers<[1], [0], [0], [1], [0, 0, 1, 1], [], []>} : vector<64x128xbf16>, vector<128x512xbf16>, vector<64x512xf32> -> vector<64x512xf32>
    %c0_5 = arith.constant 0 : index
    %c0_6 = arith.constant 0 : index
    %7 = vector.load %arg6[%c0_5, %c0_6] : memref<1x512xf32, #tpu.memory_space<vmem>>, vector<1x512xf32>
    %8 = vector.broadcast %7 : vector<1x512xf32> to vector<64x512xf32>
    %9 = arith.addf %6, %8 : vector<64x512xf32>
    %10 = vector.shape_cast %9 : vector<64x512xf32> to vector<8x8x512xf32>
    %c0_7 = arith.constant 0 : index
    %c0_8 = arith.constant 0 : index
    %c0_9 = arith.constant 0 : index
    %11 = vector.load %arg12[%c0_7, %c0_8, %c0_9] : memref<8x8x512xf32, #tpu.memory_space<vmem>>, vector<8x8x512xf32>
    tpu.vector_store %arg12[%c0_7, %c0_8, %c0_9], %10 {strides = array<i32>} : memref<8x8x512xf32, #tpu.memory_space<vmem>>, vector<8x8x512xf32>,
    %c0_10 = arith.constant 0 : index
    %c0_11 = arith.constant 0 : index
    %12 = vector.load %arg5[%c0_10, %c0_11] : memref<128x512xbf16, #tpu.memory_space<vmem>>, vector<128x512xbf16>
    %cst_12 = arith.constant 5.000000e-01 : f32
    %13 = vector.broadcast %cst_12 : f32 to vector<1x128xf32>
    %cst_13 = arith.constant 5.000000e-01 : f32
    %14 = vector.broadcast %cst_13 : f32 to vector<1x128xf32>
    %cst_14 = arith.constant 1.000000e+00 : f32
    %15 = vector.broadcast %cst_14 : f32 to vector<1x128xf32>
    %cst_15 = arith.constant 5.000000e-01 : f32
    %16 = vector.broadcast %cst_15 : f32 to vector<1x128xf32>
    %17 = tpu.concatenate %13, %14, %15, %16 in 1 : vector<1x128xf32>, vector<1x128xf32>, vector<1x128xf32>, vector<1x128xf32> -> vector<1x512xf32>
    %cst_16 = arith.constant 5.000000e-01 : f32
    %18 = vector.broadcast %cst_16 : f32 to vector<1x128xf32>
    %cst_17 = arith.constant 5.000000e-01 : f32
    %19 = vector.broadcast %cst_17 : f32 to vector<1x128xf32>
    %cst_18 = arith.constant 0.000000e+00 : f32
    %20 = vector.broadcast %cst_18 : f32 to vector<1x128xf32>
    %cst_19 = arith.constant 5.000000e-01 : f32
    %21 = vector.broadcast %cst_19 : f32 to vector<1x128xf32>
    %22 = tpu.concatenate %18, %19, %20, %21 in 1 : vector<1x128xf32>, vector<1x128xf32>, vector<1x128xf32>, vector<1x128xf32> -> vector<1x512xf32>
    %c0_20 = arith.constant 0 : index
    %c0_21 = arith.constant 0 : index
    %23 = vector.load %arg10[%c0_20, %c0_21] : memref<8x128xf32, #tpu.memory_space<vmem>>, vector<8x128xf32>
    %c0_22 = arith.constant 0 : index
    %c0_23 = arith.constant 0 : index
    %24 = vector.load %arg11[%c0_22, %c0_23] : memref<8x128xf32, #tpu.memory_space<vmem>>, vector<8x128xf32>
    %c0_24 = arith.constant 0 : index
    %c0_25 = arith.constant 0 : index
    %c0_26 = arith.constant 0 : index
    %25 = vector.load %arg12[%c0_24, %c0_25, %c0_26] : memref<8x8x512xf32, #tpu.memory_space<vmem>>, vector<1x8x512xf32>
    %26 = vector.shape_cast %25 : vector<1x8x512xf32> to vector<8x512xf32>
    %27 = arith.truncf %23 : vector<8x128xf32> to vector<8x128xbf16>
    %cst_27 = arith.constant dense<0.000000e+00> : vector<8x512xf32>
    %28 = tpu.matmul %27, %12, %cst_27 {dimension_numbers = #tpu.dot_dimension_numbers<[1], [0], [0], [1], [0, 0, 1, 1], [], []>} : vector<8x128xbf16>, vector<128x512xbf16>, vector<8x512xf32> -> vector<8x512xf32>
    %29 = arith.addf %26, %28 : vector<8x512xf32>
    %30 = vector.broadcast %17 : vector<1x512xf32> to vector<8x512xf32>
    %31 = arith.mulf %29, %30 : vector<8x512xf32>
    %32 = math.tanh %31 : vector<8x512xf32>
    %33 = vector.broadcast %17 : vector<1x512xf32> to vector<8x512xf32>
    %34 = arith.mulf %32, %33 : vector<8x512xf32>
    %35 = vector.broadcast %22 : vector<1x512xf32> to vector<8x512xf32>
    %36 = arith.addf %34, %35 : vector<8x512xf32>
    %37 = vector.extract_strided_slice %36 {offsets = [0, 0], sizes = [8, 128], strides = [1, 1]} : vector<8x512xf32> to vector<8x128xf32>
    %38 = vector.extract_strided_slice %36 {offsets = [0, 128], sizes = [8, 128], strides = [1, 1]} : vector<8x512xf32> to vector<8x128xf32>
    %39 = vector.extract_strided_slice %36 {offsets = [0, 256], sizes = [8, 128], strides = [1, 1]} : vector<8x512xf32> to vector<8x128xf32>
    %40 = vector.extract_strided_slice %36 {offsets = [0, 384], sizes = [8, 128], strides = [1, 1]} : vector<8x512xf32> to vector<8x128xf32>
    %41 = arith.mulf %38, %24 : vector<8x128xf32>
    %42 = arith.mulf %37, %39 : vector<8x128xf32>
    %43 = arith.addf %41, %42 : vector<8x128xf32>
    %44 = math.tanh %43 : vector<8x128xf32>
    %45 = arith.mulf %40, %44 : vector<8x128xf32>
    %46 = arith.truncf %45 : vector<8x128xf32> to vector<8x128xbf16>
    %c0_28 = arith.constant 0 : index
    %c0_29 = arith.constant 0 : index
    %c0_30 = arith.constant 0 : index
    %47 = vector.load %arg7[%c0_28, %c0_29, %c0_30] : memref<8x8x128xbf16, #tpu.memory_space<vmem>>, vector<8x1x128xbf16>
    %48 = vector.shape_cast %47 : vector<8x1x128xbf16> to vector<8x128xbf16>
    %49 = vector.shape_cast %46 : vector<8x128xbf16> to vector<8x1x128xbf16>
    tpu.vector_store %arg7[%c0_28, %c0_29, %c0_30], %49 {strides = array<i32>} : memref<8x8x128xbf16, #tpu.memory_space<vmem>>, vector<8x1x128xbf16>,
    %c1 = arith.constant 1 : index
    %c0_31 = arith.constant 0 : index
    %c0_32 = arith.constant 0 : index
    %50 = vector.load %arg12[%c1, %c0_31, %c0_32] : memref<8x8x512xf32, #tpu.memory_space<vmem>>, vector<1x8x512xf32>
    %51 = vector.shape_cast %50 : vector<1x8x512xf32> to vector<8x512xf32>
    %52 = arith.truncf %45 : vector<8x128xf32> to vector<8x128xbf16>
    %cst_33 = arith.constant dense<0.000000e+00> : vector<8x512xf32>
    %53 = tpu.matmul %52, %12, %cst_33 {dimension_numbers = #tpu.dot_dimension_numbers<[1], [0], [0], [1], [0, 0, 1, 1], [], []>} : vector<8x128xbf16>, vector<128x512xbf16>, vector<8x512xf32> -> vector<8x512xf32>
    %54 = arith.addf %51, %53 : vector<8x512xf32>
    %55 = vector.broadcast %17 : vector<1x512xf32> to vector<8x512xf32>
    %56 = arith.mulf %54, %55 : vector<8x512xf32>
    %57 = math.tanh %56 : vector<8x512xf32>
    %58 = vector.broadcast %17 : vector<1x512xf32> to vector<8x512xf32>
    %59 = arith.mulf %57, %58 : vector<8x512xf32>
    %60 = vector.broadcast %22 : vector<1x512xf32> to vector<8x512xf32>
    %61 = arith.addf %59, %60 : vector<8x512xf32>
    %62 = vector.extract_strided_slice %61 {offsets = [0, 0], sizes = [8, 128], strides = [1, 1]} : vector<8x512xf32> to vector<8x128xf32>
    %63 = vector.extract_strided_slice %61 {offsets = [0, 128], sizes = [8, 128], strides = [1, 1]} : vector<8x512xf32> to vector<8x128xf32>
    %64 = vector.extract_strided_slice %61 {offsets = [0, 256], sizes = [8, 128], strides = [1, 1]} : vector<8x512xf32> to vector<8x128xf32>
    %65 = vector.extract_strided_slice %61 {offsets = [0, 384], sizes = [8, 128], strides = [1, 1]} : vector<8x512xf32> to vector<8x128xf32>
    %66 = arith.mulf %63, %43 : vector<8x128xf32>
    %67 = arith.mulf %62, %64 : vector<8x128xf32>
    %68 = arith.addf %66, %67 : vector<8x128xf32>
    %69 = math.tanh %68 : vector<8x128xf32>
    %70 = arith.mulf %65, %69 : vector<8x128xf32>
    %71 = arith.truncf %70 : vector<8x128xf32> to vector<8x128xbf16>
    %c0_34 = arith.constant 0 : index
    %c1_35 = arith.constant 1 : index
    %c0_36 = arith.constant 0 : index
    %72 = vector.load %arg7[%c0_34, %c1_35, %c0_36] : memref<8x8x128xbf16, #tpu.memory_space<vmem>>, vector<8x1x128xbf16>
    %73 = vector.shape_cast %72 : vector<8x1x128xbf16> to vector<8x128xbf16>
    %74 = vector.shape_cast %71 : vector<8x128xbf16> to vector<8x1x128xbf16>
    tpu.vector_store %arg7[%c0_34, %c1_35, %c0_36], %74 {strides = array<i32>} : memref<8x8x128xbf16, #tpu.memory_space<vmem>>, vector<8x1x128xbf16>,
    %c2 = arith.constant 2 : index
    %c0_37 = arith.constant 0 : index
    %c0_38 = arith.constant 0 : index
    %75 = vector.load %arg12[%c2, %c0_37, %c0_38] : memref<8x8x512xf32, #tpu.memory_space<vmem>>, vector<1x8x512xf32>
    %76 = vector.shape_cast %75 : vector<1x8x512xf32> to vector<8x512xf32>
    %77 = arith.truncf %70 : vector<8x128xf32> to vector<8x128xbf16>
    %cst_39 = arith.constant dense<0.000000e+00> : vector<8x512xf32>
    %78 = tpu.matmul %77, %12, %cst_39 {dimension_numbers = #tpu.dot_dimension_numbers<[1], [0], [0], [1], [0, 0, 1, 1], [], []>} : vector<8x128xbf16>, vector<128x512xbf16>, vector<8x512xf32> -> vector<8x512xf32>
    %79 = arith.addf %76, %78 : vector<8x512xf32>
    %80 = vector.broadcast %17 : vector<1x512xf32> to vector<8x512xf32>
    %81 = arith.mulf %79, %80 : vector<8x512xf32>
    %82 = math.tanh %81 : vector<8x512xf32>
    %83 = vector.broadcast %17 : vector<1x512xf32> to vector<8x512xf32>
    %84 = arith.mulf %82, %83 : vector<8x512xf32>
    %85 = vector.broadcast %22 : vector<1x512xf32> to vector<8x512xf32>
    %86 = arith.addf %84, %85 : vector<8x512xf32>
    %87 = vector.extract_strided_slice %86 {offsets = [0, 0], sizes = [8, 128], strides = [1, 1]} : vector<8x512xf32> to vector<8x128xf32>
    %88 = vector.extract_strided_slice %86 {offsets = [0, 128], sizes = [8, 128], strides = [1, 1]} : vector<8x512xf32> to vector<8x128xf32>
    %89 = vector.extract_strided_slice %86 {offsets = [0, 256], sizes = [8, 128], strides = [1, 1]} : vector<8x512xf32> to vector<8x128xf32>
    %90 = vector.extract_strided_slice %86 {offsets = [0, 384], sizes = [8, 128], strides = [1, 1]} : vector<8x512xf32> to vector<8x128xf32>
    %91 = arith.mulf %88, %68 : vector<8x128xf32>
    %92 = arith.mulf %87, %89 : vector<8x128xf32>
    %93 = arith.addf %91, %92 : vector<8x128xf32>
    %94 = math.tanh %93 : vector<8x128xf32>
    %95 = arith.mulf %90, %94 : vector<8x128xf32>
    %96 = arith.truncf %95 : vector<8x128xf32> to vector<8x128xbf16>
    %c0_40 = arith.constant 0 : index
    %c2_41 = arith.constant 2 : index
    %c0_42 = arith.constant 0 : index
    %97 = vector.load %arg7[%c0_40, %c2_41, %c0_42] : memref<8x8x128xbf16, #tpu.memory_space<vmem>>, vector<8x1x128xbf16>
    %98 = vector.shape_cast %97 : vector<8x1x128xbf16> to vector<8x128xbf16>
    %99 = vector.shape_cast %96 : vector<8x128xbf16> to vector<8x1x128xbf16>
    tpu.vector_store %arg7[%c0_40, %c2_41, %c0_42], %99 {strides = array<i32>} : memref<8x8x128xbf16, #tpu.memory_space<vmem>>, vector<8x1x128xbf16>,
    %c3 = arith.constant 3 : index
    %c0_43 = arith.constant 0 : index
    %c0_44 = arith.constant 0 : index
    %100 = vector.load %arg12[%c3, %c0_43, %c0_44] : memref<8x8x512xf32, #tpu.memory_space<vmem>>, vector<1x8x512xf32>
    %101 = vector.shape_cast %100 : vector<1x8x512xf32> to vector<8x512xf32>
    %102 = arith.truncf %95 : vector<8x128xf32> to vector<8x128xbf16>
    %cst_45 = arith.constant dense<0.000000e+00> : vector<8x512xf32>
    %103 = tpu.matmul %102, %12, %cst_45 {dimension_numbers = #tpu.dot_dimension_numbers<[1], [0], [0], [1], [0, 0, 1, 1], [], []>} : vector<8x128xbf16>, vector<128x512xbf16>, vector<8x512xf32> -> vector<8x512xf32>
    %104 = arith.addf %101, %103 : vector<8x512xf32>
    %105 = vector.broadcast %17 : vector<1x512xf32> to vector<8x512xf32>
    %106 = arith.mulf %104, %105 : vector<8x512xf32>
    %107 = math.tanh %106 : vector<8x512xf32>
    %108 = vector.broadcast %17 : vector<1x512xf32> to vector<8x512xf32>
    %109 = arith.mulf %107, %108 : vector<8x512xf32>
    %110 = vector.broadcast %22 : vector<1x512xf32> to vector<8x512xf32>
    %111 = arith.addf %109, %110 : vector<8x512xf32>
    %112 = vector.extract_strided_slice %111 {offsets = [0, 0], sizes = [8, 128], strides = [1, 1]} : vector<8x512xf32> to vector<8x128xf32>
    %113 = vector.extract_strided_slice %111 {offsets = [0, 128], sizes = [8, 128], strides = [1, 1]} : vector<8x512xf32> to vector<8x128xf32>
    %114 = vector.extract_strided_slice %111 {offsets = [0, 256], sizes = [8, 128], strides = [1, 1]} : vector<8x512xf32> to vector<8x128xf32>
    %115 = vector.extract_strided_slice %111 {offsets = [0, 384], sizes = [8, 128], strides = [1, 1]} : vector<8x512xf32> to vector<8x128xf32>
    %116 = arith.mulf %113, %93 : vector<8x128xf32>
    %117 = arith.mulf %112, %114 : vector<8x128xf32>
    %118 = arith.addf %116, %117 : vector<8x128xf32>
    %119 = math.tanh %118 : vector<8x128xf32>
    %120 = arith.mulf %115, %119 : vector<8x128xf32>
    %121 = arith.truncf %120 : vector<8x128xf32> to vector<8x128xbf16>
    %c0_46 = arith.constant 0 : index
    %c3_47 = arith.constant 3 : index
    %c0_48 = arith.constant 0 : index
    %122 = vector.load %arg7[%c0_46, %c3_47, %c0_48] : memref<8x8x128xbf16, #tpu.memory_space<vmem>>, vector<8x1x128xbf16>
    %123 = vector.shape_cast %122 : vector<8x1x128xbf16> to vector<8x128xbf16>
    %124 = vector.shape_cast %121 : vector<8x128xbf16> to vector<8x1x128xbf16>
    tpu.vector_store %arg7[%c0_46, %c3_47, %c0_48], %124 {strides = array<i32>} : memref<8x8x128xbf16, #tpu.memory_space<vmem>>, vector<8x1x128xbf16>,
    %c4 = arith.constant 4 : index
    %c0_49 = arith.constant 0 : index
    %c0_50 = arith.constant 0 : index
    %125 = vector.load %arg12[%c4, %c0_49, %c0_50] : memref<8x8x512xf32, #tpu.memory_space<vmem>>, vector<1x8x512xf32>
    %126 = vector.shape_cast %125 : vector<1x8x512xf32> to vector<8x512xf32>
    %127 = arith.truncf %120 : vector<8x128xf32> to vector<8x128xbf16>
    %cst_51 = arith.constant dense<0.000000e+00> : vector<8x512xf32>
    %128 = tpu.matmul %127, %12, %cst_51 {dimension_numbers = #tpu.dot_dimension_numbers<[1], [0], [0], [1], [0, 0, 1, 1], [], []>} : vector<8x128xbf16>, vector<128x512xbf16>, vector<8x512xf32> -> vector<8x512xf32>
    %129 = arith.addf %126, %128 : vector<8x512xf32>
    %130 = vector.broadcast %17 : vector<1x512xf32> to vector<8x512xf32>
    %131 = arith.mulf %129, %130 : vector<8x512xf32>
    %132 = math.tanh %131 : vector<8x512xf32>
    %133 = vector.broadcast %17 : vector<1x512xf32> to vector<8x512xf32>
    %134 = arith.mulf %132, %133 : vector<8x512xf32>
    %135 = vector.broadcast %22 : vector<1x512xf32> to vector<8x512xf32>
    %136 = arith.addf %134, %135 : vector<8x512xf32>
    %137 = vector.extract_strided_slice %136 {offsets = [0, 0], sizes = [8, 128], strides = [1, 1]} : vector<8x512xf32> to vector<8x128xf32>
    %138 = vector.extract_strided_slice %136 {offsets = [0, 128], sizes = [8, 128], strides = [1, 1]} : vector<8x512xf32> to vector<8x128xf32>
    %139 = vector.extract_strided_slice %136 {offsets = [0, 256], sizes = [8, 128], strides = [1, 1]} : vector<8x512xf32> to vector<8x128xf32>
    %140 = vector.extract_strided_slice %136 {offsets = [0, 384], sizes = [8, 128], strides = [1, 1]} : vector<8x512xf32> to vector<8x128xf32>
    %141 = arith.mulf %138, %118 : vector<8x128xf32>
    %142 = arith.mulf %137, %139 : vector<8x128xf32>
    %143 = arith.addf %141, %142 : vector<8x128xf32>
    %144 = math.tanh %143 : vector<8x128xf32>
    %145 = arith.mulf %140, %144 : vector<8x128xf32>
    %146 = arith.truncf %145 : vector<8x128xf32> to vector<8x128xbf16>
    %c0_52 = arith.constant 0 : index
    %c4_53 = arith.constant 4 : index
    %c0_54 = arith.constant 0 : index
    %147 = vector.load %arg7[%c0_52, %c4_53, %c0_54] : memref<8x8x128xbf16, #tpu.memory_space<vmem>>, vector<8x1x128xbf16>
    %148 = vector.shape_cast %147 : vector<8x1x128xbf16> to vector<8x128xbf16>
    %149 = vector.shape_cast %146 : vector<8x128xbf16> to vector<8x1x128xbf16>
    tpu.vector_store %arg7[%c0_52, %c4_53, %c0_54], %149 {strides = array<i32>} : memref<8x8x128xbf16, #tpu.memory_space<vmem>>, vector<8x1x128xbf16>,
    %c5 = arith.constant 5 : index
    %c0_55 = arith.constant 0 : index
    %c0_56 = arith.constant 0 : index
    %150 = vector.load %arg12[%c5, %c0_55, %c0_56] : memref<8x8x512xf32, #tpu.memory_space<vmem>>, vector<1x8x512xf32>
    %151 = vector.shape_cast %150 : vector<1x8x512xf32> to vector<8x512xf32>
    %152 = arith.truncf %145 : vector<8x128xf32> to vector<8x128xbf16>
    %cst_57 = arith.constant dense<0.000000e+00> : vector<8x512xf32>
    %153 = tpu.matmul %152, %12, %cst_57 {dimension_numbers = #tpu.dot_dimension_numbers<[1], [0], [0], [1], [0, 0, 1, 1], [], []>} : vector<8x128xbf16>, vector<128x512xbf16>, vector<8x512xf32> -> vector<8x512xf32>
    %154 = arith.addf %151, %153 : vector<8x512xf32>
    %155 = vector.broadcast %17 : vector<1x512xf32> to vector<8x512xf32>
    %156 = arith.mulf %154, %155 : vector<8x512xf32>
    %157 = math.tanh %156 : vector<8x512xf32>
    %158 = vector.broadcast %17 : vector<1x512xf32> to vector<8x512xf32>
    %159 = arith.mulf %157, %158 : vector<8x512xf32>
    %160 = vector.broadcast %22 : vector<1x512xf32> to vector<8x512xf32>
    %161 = arith.addf %159, %160 : vector<8x512xf32>
    %162 = vector.extract_strided_slice %161 {offsets = [0, 0], sizes = [8, 128], strides = [1, 1]} : vector<8x512xf32> to vector<8x128xf32>
    %163 = vector.extract_strided_slice %161 {offsets = [0, 128], sizes = [8, 128], strides = [1, 1]} : vector<8x512xf32> to vector<8x128xf32>
    %164 = vector.extract_strided_slice %161 {offsets = [0, 256], sizes = [8, 128], strides = [1, 1]} : vector<8x512xf32> to vector<8x128xf32>
    %165 = vector.extract_strided_slice %161 {offsets = [0, 384], sizes = [8, 128], strides = [1, 1]} : vector<8x512xf32> to vector<8x128xf32>
    %166 = arith.mulf %163, %143 : vector<8x128xf32>
    %167 = arith.mulf %162, %164 : vector<8x128xf32>
    %168 = arith.addf %166, %167 : vector<8x128xf32>
    %169 = math.tanh %168 : vector<8x128xf32>
    %170 = arith.mulf %165, %169 : vector<8x128xf32>
    %171 = arith.truncf %170 : vector<8x128xf32> to vector<8x128xbf16>
    %c0_58 = arith.constant 0 : index
    %c5_59 = arith.constant 5 : index
    %c0_60 = arith.constant 0 : index
    %172 = vector.load %arg7[%c0_58, %c5_59, %c0_60] : memref<8x8x128xbf16, #tpu.memory_space<vmem>>, vector<8x1x128xbf16>
    %173 = vector.shape_cast %172 : vector<8x1x128xbf16> to vector<8x128xbf16>
    %174 = vector.shape_cast %171 : vector<8x128xbf16> to vector<8x1x128xbf16>
    tpu.vector_store %arg7[%c0_58, %c5_59, %c0_60], %174 {strides = array<i32>} : memref<8x8x128xbf16, #tpu.memory_space<vmem>>, vector<8x1x128xbf16>,
    %c6 = arith.constant 6 : index
    %c0_61 = arith.constant 0 : index
    %c0_62 = arith.constant 0 : index
    %175 = vector.load %arg12[%c6, %c0_61, %c0_62] : memref<8x8x512xf32, #tpu.memory_space<vmem>>, vector<1x8x512xf32>
    %176 = vector.shape_cast %175 : vector<1x8x512xf32> to vector<8x512xf32>
    %177 = arith.truncf %170 : vector<8x128xf32> to vector<8x128xbf16>
    %cst_63 = arith.constant dense<0.000000e+00> : vector<8x512xf32>
    %178 = tpu.matmul %177, %12, %cst_63 {dimension_numbers = #tpu.dot_dimension_numbers<[1], [0], [0], [1], [0, 0, 1, 1], [], []>} : vector<8x128xbf16>, vector<128x512xbf16>, vector<8x512xf32> -> vector<8x512xf32>
    %179 = arith.addf %176, %178 : vector<8x512xf32>
    %180 = vector.broadcast %17 : vector<1x512xf32> to vector<8x512xf32>
    %181 = arith.mulf %179, %180 : vector<8x512xf32>
    %182 = math.tanh %181 : vector<8x512xf32>
    %183 = vector.broadcast %17 : vector<1x512xf32> to vector<8x512xf32>
    %184 = arith.mulf %182, %183 : vector<8x512xf32>
    %185 = vector.broadcast %22 : vector<1x512xf32> to vector<8x512xf32>
    %186 = arith.addf %184, %185 : vector<8x512xf32>
    %187 = vector.extract_strided_slice %186 {offsets = [0, 0], sizes = [8, 128], strides = [1, 1]} : vector<8x512xf32> to vector<8x128xf32>
    %188 = vector.extract_strided_slice %186 {offsets = [0, 128], sizes = [8, 128], strides = [1, 1]} : vector<8x512xf32> to vector<8x128xf32>
    %189 = vector.extract_strided_slice %186 {offsets = [0, 256], sizes = [8, 128], strides = [1, 1]} : vector<8x512xf32> to vector<8x128xf32>
    %190 = vector.extract_strided_slice %186 {offsets = [0, 384], sizes = [8, 128], strides = [1, 1]} : vector<8x512xf32> to vector<8x128xf32>
    %191 = arith.mulf %188, %168 : vector<8x128xf32>
    %192 = arith.mulf %187, %189 : vector<8x128xf32>
    %193 = arith.addf %191, %192 : vector<8x128xf32>
    %194 = math.tanh %193 : vector<8x128xf32>
    %195 = arith.mulf %190, %194 : vector<8x128xf32>
    %196 = arith.truncf %195 : vector<8x128xf32> to vector<8x128xbf16>
    %c0_64 = arith.constant 0 : index
    %c6_65 = arith.constant 6 : index
    %c0_66 = arith.constant 0 : index
    %197 = vector.load %arg7[%c0_64, %c6_65, %c0_66] : memref<8x8x128xbf16, #tpu.memory_space<vmem>>, vector<8x1x128xbf16>
    %198 = vector.shape_cast %197 : vector<8x1x128xbf16> to vector<8x128xbf16>
    %199 = vector.shape_cast %196 : vector<8x128xbf16> to vector<8x1x128xbf16>
    tpu.vector_store %arg7[%c0_64, %c6_65, %c0_66], %199 {strides = array<i32>} : memref<8x8x128xbf16, #tpu.memory_space<vmem>>, vector<8x1x128xbf16>,
    %c7 = arith.constant 7 : index
    %c0_67 = arith.constant 0 : index
    %c0_68 = arith.constant 0 : index
    %200 = vector.load %arg12[%c7, %c0_67, %c0_68] : memref<8x8x512xf32, #tpu.memory_space<vmem>>, vector<1x8x512xf32>
    %201 = vector.shape_cast %200 : vector<1x8x512xf32> to vector<8x512xf32>
    %202 = arith.truncf %195 : vector<8x128xf32> to vector<8x128xbf16>
    %cst_69 = arith.constant dense<0.000000e+00> : vector<8x512xf32>
    %203 = tpu.matmul %202, %12, %cst_69 {dimension_numbers = #tpu.dot_dimension_numbers<[1], [0], [0], [1], [0, 0, 1, 1], [], []>} : vector<8x128xbf16>, vector<128x512xbf16>, vector<8x512xf32> -> vector<8x512xf32>
    %204 = arith.addf %201, %203 : vector<8x512xf32>
    %205 = vector.broadcast %17 : vector<1x512xf32> to vector<8x512xf32>
    %206 = arith.mulf %204, %205 : vector<8x512xf32>
    %207 = math.tanh %206 : vector<8x512xf32>
    %208 = vector.broadcast %17 : vector<1x512xf32> to vector<8x512xf32>
    %209 = arith.mulf %207, %208 : vector<8x512xf32>
    %210 = vector.broadcast %22 : vector<1x512xf32> to vector<8x512xf32>
    %211 = arith.addf %209, %210 : vector<8x512xf32>
    %212 = vector.extract_strided_slice %211 {offsets = [0, 0], sizes = [8, 128], strides = [1, 1]} : vector<8x512xf32> to vector<8x128xf32>
    %213 = vector.extract_strided_slice %211 {offsets = [0, 128], sizes = [8, 128], strides = [1, 1]} : vector<8x512xf32> to vector<8x128xf32>
    %214 = vector.extract_strided_slice %211 {offsets = [0, 256], sizes = [8, 128], strides = [1, 1]} : vector<8x512xf32> to vector<8x128xf32>
    %215 = vector.extract_strided_slice %211 {offsets = [0, 384], sizes = [8, 128], strides = [1, 1]} : vector<8x512xf32> to vector<8x128xf32>
    %216 = arith.mulf %213, %193 : vector<8x128xf32>
    %217 = arith.mulf %212, %214 : vector<8x128xf32>
    %218 = arith.addf %216, %217 : vector<8x128xf32>
    %219 = math.tanh %218 : vector<8x128xf32>
    %220 = arith.mulf %215, %219 : vector<8x128xf32>
    %221 = arith.truncf %220 : vector<8x128xf32> to vector<8x128xbf16>
    %c0_70 = arith.constant 0 : index
    %c7_71 = arith.constant 7 : index
    %c0_72 = arith.constant 0 : index
    %222 = vector.load %arg7[%c0_70, %c7_71, %c0_72] : memref<8x8x128xbf16, #tpu.memory_space<vmem>>, vector<8x1x128xbf16>
    %223 = vector.shape_cast %222 : vector<8x1x128xbf16> to vector<8x128xbf16>
    %224 = vector.shape_cast %221 : vector<8x128xbf16> to vector<8x1x128xbf16>
    tpu.vector_store %arg7[%c0_70, %c7_71, %c0_72], %224 {strides = array<i32>} : memref<8x8x128xbf16, #tpu.memory_space<vmem>>, vector<8x1x128xbf16>,
    %c0_i32_73 = arith.constant 0 : i32
    %225 = arith.cmpi eq, %arg0, %c0_i32_73 : i32
    %226 = arith.extui %225 : i1 to i32
    %c0_i32_74 = arith.constant 0 : i32
    %227 = arith.cmpi ne, %226, %c0_i32_74 : i32
    scf.if %227 {
      %c0_79 = arith.constant 0 : index
      %c0_80 = arith.constant 0 : index
      %230 = vector.load %arg8[%c0_79, %c0_80] : memref<8x128xf32, #tpu.memory_space<vmem>>, vector<8x128xf32>
      tpu.vector_store %arg8[%c0_79, %c0_80], %220 {strides = array<i32>} : memref<8x128xf32, #tpu.memory_space<vmem>>, vector<8x128xf32>,
      %c0_81 = arith.constant 0 : index
      %c0_82 = arith.constant 0 : index
      %231 = vector.load %arg9[%c0_81, %c0_82] : memref<8x128xf32, #tpu.memory_space<vmem>>, vector<8x128xf32>
      tpu.vector_store %arg9[%c0_81, %c0_82], %218 {strides = array<i32>} : memref<8x128xf32, #tpu.memory_space<vmem>>, vector<8x128xf32>,
    } else {
    }
    %c0_75 = arith.constant 0 : index
    %c0_76 = arith.constant 0 : index
    %228 = vector.load %arg10[%c0_75, %c0_76] : memref<8x128xf32, #tpu.memory_space<vmem>>, vector<8x128xf32>
    tpu.vector_store %arg10[%c0_75, %c0_76], %220 {strides = array<i32>} : memref<8x128xf32, #tpu.memory_space<vmem>>, vector<8x128xf32>,
    %c0_77 = arith.constant 0 : index
    %c0_78 = arith.constant 0 : index
    %229 = vector.load %arg11[%c0_77, %c0_78] : memref<8x128xf32, #tpu.memory_space<vmem>>, vector<8x128xf32>
    tpu.vector_store %arg11[%c0_77, %c0_78], %218 {strides = array<i32>} : memref<8x128xf32, #tpu.memory_space<vmem>>, vector<8x128xf32>,
    return
  }
  func.func @transform_0(%arg0: i32) -> (i32, i32, i32) {
    %c0_i32 = arith.constant 0 : i32
    %c0_i32_0 = arith.constant 0 : i32
    %c0_i32_1 = arith.constant 0 : i32
    return %arg0, %c0_i32, %c0_i32_0 : i32, i32, i32
  }
  func.func @transform_1(%arg0: i32) -> (i32, i32) {
    %c0_i32 = arith.constant 0 : i32
    %c0_i32_0 = arith.constant 0 : i32
    %c0_i32_1 = arith.constant 0 : i32
    return %c0_i32, %c0_i32_0 : i32, i32
  }
  func.func @transform_2(%arg0: i32) -> (i32, i32) {
    %c0_i32 = arith.constant 0 : i32
    %c0_i32_0 = arith.constant 0 : i32
    %c0_i32_1 = arith.constant 0 : i32
    return %c0_i32, %c0_i32_0 : i32, i32
  }
  func.func @transform_3(%arg0: i32) -> (i32, i32) {
    %c0_i32 = arith.constant 0 : i32
    %c0_i32_0 = arith.constant 0 : i32
    %c0_i32_1 = arith.constant 0 : i32
    return %c0_i32, %c0_i32_0 : i32, i32
  }
  func.func @transform_4(%arg0: i32) -> (i32, i32) {
    %c0_i32 = arith.constant 0 : i32
    %c0_i32_0 = arith.constant 0 : i32
    %c0_i32_1 = arith.constant 0 : i32
    return %c0_i32, %c0_i32_0 : i32, i32
  }
  func.func @transform_5(%arg0: i32) -> (i32, i32) {
    %c0_i32 = arith.constant 0 : i32
    %c0_i32_0 = arith.constant 0 : i32
    %c0_i32_1 = arith.constant 0 : i32
    return %c0_i32, %c0_i32_0 : i32, i32
  }
  func.func @transform_6(%arg0: i32) -> (i32, i32, i32) {
    %c0_i32 = arith.constant 0 : i32
    %c0_i32_0 = arith.constant 0 : i32
    %c0_i32_1 = arith.constant 0 : i32
    return %c0_i32, %arg0, %c0_i32_0 : i32, i32, i32
  }
  func.func @transform_7(%arg0: i32) -> (i32, i32) {
    %c0_i32 = arith.constant 0 : i32
    %c0_i32_0 = arith.constant 0 : i32
    %c0_i32_1 = arith.constant 0 : i32
    return %c0_i32, %c0_i32_0 : i32, i32
  }
  func.func @transform_8(%arg0: i32) -> (i32, i32) {
    %c0_i32 = arith.constant 0 : i32
    %c0_i32_0 = arith.constant 0 : i32
    %c0_i32_1 = arith.constant 0 : i32
    return %c0_i32, %c0_i32_0 : i32, i32
  }
}

module attributes {stable_mosaic.version = 11 : i64} {
  func.func @kernel(%arg0: i32, %arg1: memref<8x8x128xbf16, #tpu.memory_space<vmem>>, %arg2: memref<8x128xf32, #tpu.memory_space<vmem>>, %arg3: memref<8x128xf32, #tpu.memory_space<vmem>>, %arg4: memref<128x512xbf16, #tpu.memory_space<vmem>>, %arg5: memref<128x512xbf16, #tpu.memory_space<vmem>>, %arg6: memref<1x512xf32, #tpu.memory_space<vmem>>, %arg7: memref<8x8x128xbf16, #tpu.memory_space<vmem>>, %arg8: memref<8x128xf32, #tpu.memory_space<vmem>>, %arg9: memref<8x128xf32, #tpu.memory_space<vmem>>, %arg10: memref<8x128xf32, #tpu.memory_space<vmem>>, %arg11: memref<8x128xf32, #tpu.memory_space<vmem>>, %arg12: memref<8x8x512xf32, #tpu.memory_space<vmem>>) attributes {dimension_semantics = [#tpu.dimension_semantics<arbitrary>], iteration_bounds = array<i64: 1>, scalar_prefetch = 0 : i64, scratch_operands = 3 : i64, tpu.core_type = #tpu.core_type<tc>, window_params = [{transform_indices = @transform_0, window_bounds = array<i64: 8, 8, 128>}, {pipeline_mode = #tpu.pipeline_mode<synchronous>, transform_indices = @transform_1, window_bounds = array<i64: 8, 128>}, {pipeline_mode = #tpu.pipeline_mode<synchronous>, transform_indices = @transform_2, window_bounds = array<i64: 8, 128>}, {pipeline_mode = #tpu.pipeline_mode<synchronous>, transform_indices = @transform_3, window_bounds = array<i64: 128, 512>}, {pipeline_mode = #tpu.pipeline_mode<synchronous>, transform_indices = @transform_4, window_bounds = array<i64: 128, 512>}, {pipeline_mode = #tpu.pipeline_mode<synchronous>, transform_indices = @transform_5, window_bounds = array<i64: 1, 512>}, {transform_indices = @transform_6, window_bounds = array<i64: 8, 8, 128>}, {pipeline_mode = #tpu.pipeline_mode<synchronous>, transform_indices = @transform_7, window_bounds = array<i64: 8, 128>}, {pipeline_mode = #tpu.pipeline_mode<synchronous>, transform_indices = @transform_8, window_bounds = array<i64: 8, 128>}]} {
    %c0_i32 = arith.constant 0 : i32
    %0 = arith.cmpi eq, %arg0, %c0_i32 : i32
    %1 = arith.extui %0 : i1 to i32
    %c0_i32_0 = arith.constant 0 : i32
    %2 = arith.cmpi ne, %1, %c0_i32_0 : i32
    scf.if %2 {
      %c0_79 = arith.constant 0 : index
      %c0_80 = arith.constant 0 : index
      %230 = vector.load %arg2[%c0_79, %c0_80] : memref<8x128xf32, #tpu.memory_space<vmem>>, vector<8x128xf32>
      %c0_81 = arith.constant 0 : index
      %c0_82 = arith.constant 0 : index
      %231 = vector.load %arg10[%c0_81, %c0_82] : memref<8x128xf32, #tpu.memory_space<vmem>>, vector<8x128xf32>
      tpu.vector_store %arg10[%c0_81, %c0_82], %230 {strides = array<i32>} : memref<8x128xf32, #tpu.memory_space<vmem>>, vector<8x128xf32>,
      %c0_83 = arith.constant 0 : index
      %c0_84 = arith.constant 0 : index
      %232 = vector.load %arg3[%c0_83, %c0_84] : memref<8x128xf32, #tpu.memory_space<vmem>>, vector<8x128xf32>
      %c0_85 = arith.constant 0 : index
      %c0_86 = arith.constant 0 : index
      %233 = vector.load %arg11[%c0_85, %c0_86] : memref<8x128xf32, #tpu.memory_space<vmem>>, vector<8x128xf32>
      tpu.vector_store %arg11[%c0_85, %c0_86], %232 {strides = array<i32>} : memref<8x128xf32, #tpu.memory_space<vmem>>, vector<8x128xf32>,
    } else {
    }
    %c0 = arith.constant 0 : index
    %c0_1 = arith.constant 0 : index
    %c0_2 = arith.constant 0 : index
    %3 = vector.load %arg1[%c0, %c0_1, %c0_2] : memref<8x8x128xbf16, #tpu.memory_space<vmem>>, vector<8x8x128xbf16>
    %4 = vector.shape_cast %3 : vector<8x8x128xbf16> to vector<64x128xbf16>
    %c0_3 = arith.constant 0 : index
    %c0_4 = arith.constant 0 : index
    %5 = vector.load %arg4[%c0_3, %c0_4] : memref<128x512xbf16, #tpu.memory_space<vmem>>, vector<128x512xbf16>
    %cst = arith.constant dense<0.000000e+00> : vector<64x512xf32>
    %6 = tpu.matmul %4, %5, %cst {dimension_numbers = #tpu.dot_dimension_numbers<[1], [0], [0], [1], [0, 0, 1, 1], [], []>} : vector<64x128xbf16>, vector<128x512xbf16>, vector<64x512xf32> -> vector<64x512xf32>
    %c0_5 = arith.constant 0 : index
    %c0_6 = arith.constant 0 : index
    %7 = vector.load %arg6[%c0_5, %c0_6] : memref<1x512xf32, #tpu.memory_space<vmem>>, vector<1x512xf32>
    %8 = vector.broadcast %7 : vector<1x512xf32> to vector<64x512xf32>
    %9 = arith.addf %6, %8 : vector<64x512xf32>
    %10 = vector.shape_cast %9 : vector<64x512xf32> to vector<8x8x512xf32>
    %c0_7 = arith.constant 0 : index
    %c0_8 = arith.constant 0 : index
    %c0_9 = arith.constant 0 : index
    %11 = vector.load %arg12[%c0_7, %c0_8, %c0_9] : memref<8x8x512xf32, #tpu.memory_space<vmem>>, vector<8x8x512xf32>
    tpu.vector_store %arg12[%c0_7, %c0_8, %c0_9], %10 {strides = array<i32>} : memref<8x8x512xf32, #tpu.memory_space<vmem>>, vector<8x8x512xf32>,
    %c0_10 = arith.constant 0 : index
    %c0_11 = arith.constant 0 : index
    %12 = vector.load %arg5[%c0_10, %c0_11] : memref<128x512xbf16, #tpu.memory_space<vmem>>, vector<128x512xbf16>
    %cst_12 = arith.constant 5.000000e-01 : f32
    %13 = vector.broadcast %cst_12 : f32 to vector<1x128xf32>
    %cst_13 = arith.constant 5.000000e-01 : f32
    %14 = vector.broadcast %cst_13 : f32 to vector<1x128xf32>
    %cst_14 = arith.constant 1.000000e+00 : f32
    %15 = vector.broadcast %cst_14 : f32 to vector<1x128xf32>
    %cst_15 = arith.constant 5.000000e-01 : f32
    %16 = vector.broadcast %cst_15 : f32 to vector<1x128xf32>
    %17 = tpu.concatenate %13, %14, %15, %16 in 1 : vector<1x128xf32>, vector<1x128xf32>, vector<1x128xf32>, vector<1x128xf32> -> vector<1x512xf32>
    %cst_16 = arith.constant 5.000000e-01 : f32
    %18 = vector.broadcast %cst_16 : f32 to vector<1x128xf32>
    %cst_17 = arith.constant 5.000000e-01 : f32
    %19 = vector.broadcast %cst_17 : f32 to vector<1x128xf32>
    %cst_18 = arith.constant 0.000000e+00 : f32
    %20 = vector.broadcast %cst_18 : f32 to vector<1x128xf32>
    %cst_19 = arith.constant 5.000000e-01 : f32
    %21 = vector.broadcast %cst_19 : f32 to vector<1x128xf32>
    %22 = tpu.concatenate %18, %19, %20, %21 in 1 : vector<1x128xf32>, vector<1x128xf32>, vector<1x128xf32>, vector<1x128xf32> -> vector<1x512xf32>
    %c0_20 = arith.constant 0 : index
    %c0_21 = arith.constant 0 : index
    %23 = vector.load %arg10[%c0_20, %c0_21] : memref<8x128xf32, #tpu.memory_space<vmem>>, vector<8x128xf32>
    %c0_22 = arith.constant 0 : index
    %c0_23 = arith.constant 0 : index
    %24 = vector.load %arg11[%c0_22, %c0_23] : memref<8x128xf32, #tpu.memory_space<vmem>>, vector<8x128xf32>
    %c0_24 = arith.constant 0 : index
    %c0_25 = arith.constant 0 : index
    %c0_26 = arith.constant 0 : index
    %25 = vector.load %arg12[%c0_24, %c0_25, %c0_26] : memref<8x8x512xf32, #tpu.memory_space<vmem>>, vector<1x8x512xf32>
    %26 = vector.shape_cast %25 : vector<1x8x512xf32> to vector<8x512xf32>
    %27 = arith.truncf %23 : vector<8x128xf32> to vector<8x128xbf16>
    %cst_27 = arith.constant dense<0.000000e+00> : vector<8x512xf32>
    %28 = tpu.matmul %27, %12, %cst_27 {dimension_numbers = #tpu.dot_dimension_numbers<[1], [0], [0], [1], [0, 0, 1, 1], [], []>} : vector<8x128xbf16>, vector<128x512xbf16>, vector<8x512xf32> -> vector<8x512xf32>
    %29 = arith.addf %26, %28 : vector<8x512xf32>
    %30 = vector.broadcast %17 : vector<1x512xf32> to vector<8x512xf32>
    %31 = arith.mulf %29, %30 : vector<8x512xf32>
    %32 = math.tanh %31 : vector<8x512xf32>
    %33 = vector.broadcast %17 : vector<1x512xf32> to vector<8x512xf32>
    %34 = arith.mulf %32, %33 : vector<8x512xf32>
    %35 = vector.broadcast %22 : vector<1x512xf32> to vector<8x512xf32>
    %36 = arith.addf %34, %35 : vector<8x512xf32>
    %37 = vector.extract_strided_slice %36 {offsets = [0, 0], sizes = [8, 128], strides = [1, 1]} : vector<8x512xf32> to vector<8x128xf32>
    %38 = vector.extract_strided_slice %36 {offsets = [0, 128], sizes = [8, 128], strides = [1, 1]} : vector<8x512xf32> to vector<8x128xf32>
    %39 = vector.extract_strided_slice %36 {offsets = [0, 256], sizes = [8, 128], strides = [1, 1]} : vector<8x512xf32> to vector<8x128xf32>
    %40 = vector.extract_strided_slice %36 {offsets = [0, 384], sizes = [8, 128], strides = [1, 1]} : vector<8x512xf32> to vector<8x128xf32>
    %41 = arith.mulf %38, %24 : vector<8x128xf32>
    %42 = arith.mulf %37, %39 : vector<8x128xf32>
    %43 = arith.addf %41, %42 : vector<8x128xf32>
    %44 = math.tanh %43 : vector<8x128xf32>
    %45 = arith.mulf %40, %44 : vector<8x128xf32>
    %46 = arith.truncf %45 : vector<8x128xf32> to vector<8x128xbf16>
    %c0_28 = arith.constant 0 : index
    %c0_29 = arith.constant 0 : index
    %c0_30 = arith.constant 0 : index
    %47 = vector.load %arg7[%c0_28, %c0_29, %c0_30] : memref<8x8x128xbf16, #tpu.memory_space<vmem>>, vector<1x8x128xbf16>
    %48 = vector.shape_cast %47 : vector<1x8x128xbf16> to vector<8x128xbf16>
    %49 = vector.shape_cast %46 : vector<8x128xbf16> to vector<1x8x128xbf16>
    tpu.vector_store %arg7[%c0_28, %c0_29, %c0_30], %49 {strides = array<i32>} : memref<8x8x128xbf16, #tpu.memory_space<vmem>>, vector<1x8x128xbf16>,
    %c1 = arith.constant 1 : index
    %c0_31 = arith.constant 0 : index
    %c0_32 = arith.constant 0 : index
    %50 = vector.load %arg12[%c1, %c0_31, %c0_32] : memref<8x8x512xf32, #tpu.memory_space<vmem>>, vector<1x8x512xf32>
    %51 = vector.shape_cast %50 : vector<1x8x512xf32> to vector<8x512xf32>
    %52 = arith.truncf %45 : vector<8x128xf32> to vector<8x128xbf16>
    %cst_33 = arith.constant dense<0.000000e+00> : vector<8x512xf32>
    %53 = tpu.matmul %52, %12, %cst_33 {dimension_numbers = #tpu.dot_dimension_numbers<[1], [0], [0], [1], [0, 0, 1, 1], [], []>} : vector<8x128xbf16>, vector<128x512xbf16>, vector<8x512xf32> -> vector<8x512xf32>
    %54 = arith.addf %51, %53 : vector<8x512xf32>
    %55 = vector.broadcast %17 : vector<1x512xf32> to vector<8x512xf32>
    %56 = arith.mulf %54, %55 : vector<8x512xf32>
    %57 = math.tanh %56 : vector<8x512xf32>
    %58 = vector.broadcast %17 : vector<1x512xf32> to vector<8x512xf32>
    %59 = arith.mulf %57, %58 : vector<8x512xf32>
    %60 = vector.broadcast %22 : vector<1x512xf32> to vector<8x512xf32>
    %61 = arith.addf %59, %60 : vector<8x512xf32>
    %62 = vector.extract_strided_slice %61 {offsets = [0, 0], sizes = [8, 128], strides = [1, 1]} : vector<8x512xf32> to vector<8x128xf32>
    %63 = vector.extract_strided_slice %61 {offsets = [0, 128], sizes = [8, 128], strides = [1, 1]} : vector<8x512xf32> to vector<8x128xf32>
    %64 = vector.extract_strided_slice %61 {offsets = [0, 256], sizes = [8, 128], strides = [1, 1]} : vector<8x512xf32> to vector<8x128xf32>
    %65 = vector.extract_strided_slice %61 {offsets = [0, 384], sizes = [8, 128], strides = [1, 1]} : vector<8x512xf32> to vector<8x128xf32>
    %66 = arith.mulf %63, %43 : vector<8x128xf32>
    %67 = arith.mulf %62, %64 : vector<8x128xf32>
    %68 = arith.addf %66, %67 : vector<8x128xf32>
    %69 = math.tanh %68 : vector<8x128xf32>
    %70 = arith.mulf %65, %69 : vector<8x128xf32>
    %71 = arith.truncf %70 : vector<8x128xf32> to vector<8x128xbf16>
    %c1_34 = arith.constant 1 : index
    %c0_35 = arith.constant 0 : index
    %c0_36 = arith.constant 0 : index
    %72 = vector.load %arg7[%c1_34, %c0_35, %c0_36] : memref<8x8x128xbf16, #tpu.memory_space<vmem>>, vector<1x8x128xbf16>
    %73 = vector.shape_cast %72 : vector<1x8x128xbf16> to vector<8x128xbf16>
    %74 = vector.shape_cast %71 : vector<8x128xbf16> to vector<1x8x128xbf16>
    tpu.vector_store %arg7[%c1_34, %c0_35, %c0_36], %74 {strides = array<i32>} : memref<8x8x128xbf16, #tpu.memory_space<vmem>>, vector<1x8x128xbf16>,
    %c2 = arith.constant 2 : index
    %c0_37 = arith.constant 0 : index
    %c0_38 = arith.constant 0 : index
    %75 = vector.load %arg12[%c2, %c0_37, %c0_38] : memref<8x8x512xf32, #tpu.memory_space<vmem>>, vector<1x8x512xf32>
    %76 = vector.shape_cast %75 : vector<1x8x512xf32> to vector<8x512xf32>
    %77 = arith.truncf %70 : vector<8x128xf32> to vector<8x128xbf16>
    %cst_39 = arith.constant dense<0.000000e+00> : vector<8x512xf32>
    %78 = tpu.matmul %77, %12, %cst_39 {dimension_numbers = #tpu.dot_dimension_numbers<[1], [0], [0], [1], [0, 0, 1, 1], [], []>} : vector<8x128xbf16>, vector<128x512xbf16>, vector<8x512xf32> -> vector<8x512xf32>
    %79 = arith.addf %76, %78 : vector<8x512xf32>
    %80 = vector.broadcast %17 : vector<1x512xf32> to vector<8x512xf32>
    %81 = arith.mulf %79, %80 : vector<8x512xf32>
    %82 = math.tanh %81 : vector<8x512xf32>
    %83 = vector.broadcast %17 : vector<1x512xf32> to vector<8x512xf32>
    %84 = arith.mulf %82, %83 : vector<8x512xf32>
    %85 = vector.broadcast %22 : vector<1x512xf32> to vector<8x512xf32>
    %86 = arith.addf %84, %85 : vector<8x512xf32>
    %87 = vector.extract_strided_slice %86 {offsets = [0, 0], sizes = [8, 128], strides = [1, 1]} : vector<8x512xf32> to vector<8x128xf32>
    %88 = vector.extract_strided_slice %86 {offsets = [0, 128], sizes = [8, 128], strides = [1, 1]} : vector<8x512xf32> to vector<8x128xf32>
    %89 = vector.extract_strided_slice %86 {offsets = [0, 256], sizes = [8, 128], strides = [1, 1]} : vector<8x512xf32> to vector<8x128xf32>
    %90 = vector.extract_strided_slice %86 {offsets = [0, 384], sizes = [8, 128], strides = [1, 1]} : vector<8x512xf32> to vector<8x128xf32>
    %91 = arith.mulf %88, %68 : vector<8x128xf32>
    %92 = arith.mulf %87, %89 : vector<8x128xf32>
    %93 = arith.addf %91, %92 : vector<8x128xf32>
    %94 = math.tanh %93 : vector<8x128xf32>
    %95 = arith.mulf %90, %94 : vector<8x128xf32>
    %96 = arith.truncf %95 : vector<8x128xf32> to vector<8x128xbf16>
    %c2_40 = arith.constant 2 : index
    %c0_41 = arith.constant 0 : index
    %c0_42 = arith.constant 0 : index
    %97 = vector.load %arg7[%c2_40, %c0_41, %c0_42] : memref<8x8x128xbf16, #tpu.memory_space<vmem>>, vector<1x8x128xbf16>
    %98 = vector.shape_cast %97 : vector<1x8x128xbf16> to vector<8x128xbf16>
    %99 = vector.shape_cast %96 : vector<8x128xbf16> to vector<1x8x128xbf16>
    tpu.vector_store %arg7[%c2_40, %c0_41, %c0_42], %99 {strides = array<i32>} : memref<8x8x128xbf16, #tpu.memory_space<vmem>>, vector<1x8x128xbf16>,
    %c3 = arith.constant 3 : index
    %c0_43 = arith.constant 0 : index
    %c0_44 = arith.constant 0 : index
    %100 = vector.load %arg12[%c3, %c0_43, %c0_44] : memref<8x8x512xf32, #tpu.memory_space<vmem>>, vector<1x8x512xf32>
    %101 = vector.shape_cast %100 : vector<1x8x512xf32> to vector<8x512xf32>
    %102 = arith.truncf %95 : vector<8x128xf32> to vector<8x128xbf16>
    %cst_45 = arith.constant dense<0.000000e+00> : vector<8x512xf32>
    %103 = tpu.matmul %102, %12, %cst_45 {dimension_numbers = #tpu.dot_dimension_numbers<[1], [0], [0], [1], [0, 0, 1, 1], [], []>} : vector<8x128xbf16>, vector<128x512xbf16>, vector<8x512xf32> -> vector<8x512xf32>
    %104 = arith.addf %101, %103 : vector<8x512xf32>
    %105 = vector.broadcast %17 : vector<1x512xf32> to vector<8x512xf32>
    %106 = arith.mulf %104, %105 : vector<8x512xf32>
    %107 = math.tanh %106 : vector<8x512xf32>
    %108 = vector.broadcast %17 : vector<1x512xf32> to vector<8x512xf32>
    %109 = arith.mulf %107, %108 : vector<8x512xf32>
    %110 = vector.broadcast %22 : vector<1x512xf32> to vector<8x512xf32>
    %111 = arith.addf %109, %110 : vector<8x512xf32>
    %112 = vector.extract_strided_slice %111 {offsets = [0, 0], sizes = [8, 128], strides = [1, 1]} : vector<8x512xf32> to vector<8x128xf32>
    %113 = vector.extract_strided_slice %111 {offsets = [0, 128], sizes = [8, 128], strides = [1, 1]} : vector<8x512xf32> to vector<8x128xf32>
    %114 = vector.extract_strided_slice %111 {offsets = [0, 256], sizes = [8, 128], strides = [1, 1]} : vector<8x512xf32> to vector<8x128xf32>
    %115 = vector.extract_strided_slice %111 {offsets = [0, 384], sizes = [8, 128], strides = [1, 1]} : vector<8x512xf32> to vector<8x128xf32>
    %116 = arith.mulf %113, %93 : vector<8x128xf32>
    %117 = arith.mulf %112, %114 : vector<8x128xf32>
    %118 = arith.addf %116, %117 : vector<8x128xf32>
    %119 = math.tanh %118 : vector<8x128xf32>
    %120 = arith.mulf %115, %119 : vector<8x128xf32>
    %121 = arith.truncf %120 : vector<8x128xf32> to vector<8x128xbf16>
    %c3_46 = arith.constant 3 : index
    %c0_47 = arith.constant 0 : index
    %c0_48 = arith.constant 0 : index
    %122 = vector.load %arg7[%c3_46, %c0_47, %c0_48] : memref<8x8x128xbf16, #tpu.memory_space<vmem>>, vector<1x8x128xbf16>
    %123 = vector.shape_cast %122 : vector<1x8x128xbf16> to vector<8x128xbf16>
    %124 = vector.shape_cast %121 : vector<8x128xbf16> to vector<1x8x128xbf16>
    tpu.vector_store %arg7[%c3_46, %c0_47, %c0_48], %124 {strides = array<i32>} : memref<8x8x128xbf16, #tpu.memory_space<vmem>>, vector<1x8x128xbf16>,
    %c4 = arith.constant 4 : index
    %c0_49 = arith.constant 0 : index
    %c0_50 = arith.constant 0 : index
    %125 = vector.load %arg12[%c4, %c0_49, %c0_50] : memref<8x8x512xf32, #tpu.memory_space<vmem>>, vector<1x8x512xf32>
    %126 = vector.shape_cast %125 : vector<1x8x512xf32> to vector<8x512xf32>
    %127 = arith.truncf %120 : vector<8x128xf32> to vector<8x128xbf16>
    %cst_51 = arith.constant dense<0.000000e+00> : vector<8x512xf32>
    %128 = tpu.matmul %127, %12, %cst_51 {dimension_numbers = #tpu.dot_dimension_numbers<[1], [0], [0], [1], [0, 0, 1, 1], [], []>} : vector<8x128xbf16>, vector<128x512xbf16>, vector<8x512xf32> -> vector<8x512xf32>
    %129 = arith.addf %126, %128 : vector<8x512xf32>
    %130 = vector.broadcast %17 : vector<1x512xf32> to vector<8x512xf32>
    %131 = arith.mulf %129, %130 : vector<8x512xf32>
    %132 = math.tanh %131 : vector<8x512xf32>
    %133 = vector.broadcast %17 : vector<1x512xf32> to vector<8x512xf32>
    %134 = arith.mulf %132, %133 : vector<8x512xf32>
    %135 = vector.broadcast %22 : vector<1x512xf32> to vector<8x512xf32>
    %136 = arith.addf %134, %135 : vector<8x512xf32>
    %137 = vector.extract_strided_slice %136 {offsets = [0, 0], sizes = [8, 128], strides = [1, 1]} : vector<8x512xf32> to vector<8x128xf32>
    %138 = vector.extract_strided_slice %136 {offsets = [0, 128], sizes = [8, 128], strides = [1, 1]} : vector<8x512xf32> to vector<8x128xf32>
    %139 = vector.extract_strided_slice %136 {offsets = [0, 256], sizes = [8, 128], strides = [1, 1]} : vector<8x512xf32> to vector<8x128xf32>
    %140 = vector.extract_strided_slice %136 {offsets = [0, 384], sizes = [8, 128], strides = [1, 1]} : vector<8x512xf32> to vector<8x128xf32>
    %141 = arith.mulf %138, %118 : vector<8x128xf32>
    %142 = arith.mulf %137, %139 : vector<8x128xf32>
    %143 = arith.addf %141, %142 : vector<8x128xf32>
    %144 = math.tanh %143 : vector<8x128xf32>
    %145 = arith.mulf %140, %144 : vector<8x128xf32>
    %146 = arith.truncf %145 : vector<8x128xf32> to vector<8x128xbf16>
    %c4_52 = arith.constant 4 : index
    %c0_53 = arith.constant 0 : index
    %c0_54 = arith.constant 0 : index
    %147 = vector.load %arg7[%c4_52, %c0_53, %c0_54] : memref<8x8x128xbf16, #tpu.memory_space<vmem>>, vector<1x8x128xbf16>
    %148 = vector.shape_cast %147 : vector<1x8x128xbf16> to vector<8x128xbf16>
    %149 = vector.shape_cast %146 : vector<8x128xbf16> to vector<1x8x128xbf16>
    tpu.vector_store %arg7[%c4_52, %c0_53, %c0_54], %149 {strides = array<i32>} : memref<8x8x128xbf16, #tpu.memory_space<vmem>>, vector<1x8x128xbf16>,
    %c5 = arith.constant 5 : index
    %c0_55 = arith.constant 0 : index
    %c0_56 = arith.constant 0 : index
    %150 = vector.load %arg12[%c5, %c0_55, %c0_56] : memref<8x8x512xf32, #tpu.memory_space<vmem>>, vector<1x8x512xf32>
    %151 = vector.shape_cast %150 : vector<1x8x512xf32> to vector<8x512xf32>
    %152 = arith.truncf %145 : vector<8x128xf32> to vector<8x128xbf16>
    %cst_57 = arith.constant dense<0.000000e+00> : vector<8x512xf32>
    %153 = tpu.matmul %152, %12, %cst_57 {dimension_numbers = #tpu.dot_dimension_numbers<[1], [0], [0], [1], [0, 0, 1, 1], [], []>} : vector<8x128xbf16>, vector<128x512xbf16>, vector<8x512xf32> -> vector<8x512xf32>
    %154 = arith.addf %151, %153 : vector<8x512xf32>
    %155 = vector.broadcast %17 : vector<1x512xf32> to vector<8x512xf32>
    %156 = arith.mulf %154, %155 : vector<8x512xf32>
    %157 = math.tanh %156 : vector<8x512xf32>
    %158 = vector.broadcast %17 : vector<1x512xf32> to vector<8x512xf32>
    %159 = arith.mulf %157, %158 : vector<8x512xf32>
    %160 = vector.broadcast %22 : vector<1x512xf32> to vector<8x512xf32>
    %161 = arith.addf %159, %160 : vector<8x512xf32>
    %162 = vector.extract_strided_slice %161 {offsets = [0, 0], sizes = [8, 128], strides = [1, 1]} : vector<8x512xf32> to vector<8x128xf32>
    %163 = vector.extract_strided_slice %161 {offsets = [0, 128], sizes = [8, 128], strides = [1, 1]} : vector<8x512xf32> to vector<8x128xf32>
    %164 = vector.extract_strided_slice %161 {offsets = [0, 256], sizes = [8, 128], strides = [1, 1]} : vector<8x512xf32> to vector<8x128xf32>
    %165 = vector.extract_strided_slice %161 {offsets = [0, 384], sizes = [8, 128], strides = [1, 1]} : vector<8x512xf32> to vector<8x128xf32>
    %166 = arith.mulf %163, %143 : vector<8x128xf32>
    %167 = arith.mulf %162, %164 : vector<8x128xf32>
    %168 = arith.addf %166, %167 : vector<8x128xf32>
    %169 = math.tanh %168 : vector<8x128xf32>
    %170 = arith.mulf %165, %169 : vector<8x128xf32>
    %171 = arith.truncf %170 : vector<8x128xf32> to vector<8x128xbf16>
    %c5_58 = arith.constant 5 : index
    %c0_59 = arith.constant 0 : index
    %c0_60 = arith.constant 0 : index
    %172 = vector.load %arg7[%c5_58, %c0_59, %c0_60] : memref<8x8x128xbf16, #tpu.memory_space<vmem>>, vector<1x8x128xbf16>
    %173 = vector.shape_cast %172 : vector<1x8x128xbf16> to vector<8x128xbf16>
    %174 = vector.shape_cast %171 : vector<8x128xbf16> to vector<1x8x128xbf16>
    tpu.vector_store %arg7[%c5_58, %c0_59, %c0_60], %174 {strides = array<i32>} : memref<8x8x128xbf16, #tpu.memory_space<vmem>>, vector<1x8x128xbf16>,
    %c6 = arith.constant 6 : index
    %c0_61 = arith.constant 0 : index
    %c0_62 = arith.constant 0 : index
    %175 = vector.load %arg12[%c6, %c0_61, %c0_62] : memref<8x8x512xf32, #tpu.memory_space<vmem>>, vector<1x8x512xf32>
    %176 = vector.shape_cast %175 : vector<1x8x512xf32> to vector<8x512xf32>
    %177 = arith.truncf %170 : vector<8x128xf32> to vector<8x128xbf16>
    %cst_63 = arith.constant dense<0.000000e+00> : vector<8x512xf32>
    %178 = tpu.matmul %177, %12, %cst_63 {dimension_numbers = #tpu.dot_dimension_numbers<[1], [0], [0], [1], [0, 0, 1, 1], [], []>} : vector<8x128xbf16>, vector<128x512xbf16>, vector<8x512xf32> -> vector<8x512xf32>
    %179 = arith.addf %176, %178 : vector<8x512xf32>
    %180 = vector.broadcast %17 : vector<1x512xf32> to vector<8x512xf32>
    %181 = arith.mulf %179, %180 : vector<8x512xf32>
    %182 = math.tanh %181 : vector<8x512xf32>
    %183 = vector.broadcast %17 : vector<1x512xf32> to vector<8x512xf32>
    %184 = arith.mulf %182, %183 : vector<8x512xf32>
    %185 = vector.broadcast %22 : vector<1x512xf32> to vector<8x512xf32>
    %186 = arith.addf %184, %185 : vector<8x512xf32>
    %187 = vector.extract_strided_slice %186 {offsets = [0, 0], sizes = [8, 128], strides = [1, 1]} : vector<8x512xf32> to vector<8x128xf32>
    %188 = vector.extract_strided_slice %186 {offsets = [0, 128], sizes = [8, 128], strides = [1, 1]} : vector<8x512xf32> to vector<8x128xf32>
    %189 = vector.extract_strided_slice %186 {offsets = [0, 256], sizes = [8, 128], strides = [1, 1]} : vector<8x512xf32> to vector<8x128xf32>
    %190 = vector.extract_strided_slice %186 {offsets = [0, 384], sizes = [8, 128], strides = [1, 1]} : vector<8x512xf32> to vector<8x128xf32>
    %191 = arith.mulf %188, %168 : vector<8x128xf32>
    %192 = arith.mulf %187, %189 : vector<8x128xf32>
    %193 = arith.addf %191, %192 : vector<8x128xf32>
    %194 = math.tanh %193 : vector<8x128xf32>
    %195 = arith.mulf %190, %194 : vector<8x128xf32>
    %196 = arith.truncf %195 : vector<8x128xf32> to vector<8x128xbf16>
    %c6_64 = arith.constant 6 : index
    %c0_65 = arith.constant 0 : index
    %c0_66 = arith.constant 0 : index
    %197 = vector.load %arg7[%c6_64, %c0_65, %c0_66] : memref<8x8x128xbf16, #tpu.memory_space<vmem>>, vector<1x8x128xbf16>
    %198 = vector.shape_cast %197 : vector<1x8x128xbf16> to vector<8x128xbf16>
    %199 = vector.shape_cast %196 : vector<8x128xbf16> to vector<1x8x128xbf16>
    tpu.vector_store %arg7[%c6_64, %c0_65, %c0_66], %199 {strides = array<i32>} : memref<8x8x128xbf16, #tpu.memory_space<vmem>>, vector<1x8x128xbf16>,
    %c7 = arith.constant 7 : index
    %c0_67 = arith.constant 0 : index
    %c0_68 = arith.constant 0 : index
    %200 = vector.load %arg12[%c7, %c0_67, %c0_68] : memref<8x8x512xf32, #tpu.memory_space<vmem>>, vector<1x8x512xf32>
    %201 = vector.shape_cast %200 : vector<1x8x512xf32> to vector<8x512xf32>
    %202 = arith.truncf %195 : vector<8x128xf32> to vector<8x128xbf16>
    %cst_69 = arith.constant dense<0.000000e+00> : vector<8x512xf32>
    %203 = tpu.matmul %202, %12, %cst_69 {dimension_numbers = #tpu.dot_dimension_numbers<[1], [0], [0], [1], [0, 0, 1, 1], [], []>} : vector<8x128xbf16>, vector<128x512xbf16>, vector<8x512xf32> -> vector<8x512xf32>
    %204 = arith.addf %201, %203 : vector<8x512xf32>
    %205 = vector.broadcast %17 : vector<1x512xf32> to vector<8x512xf32>
    %206 = arith.mulf %204, %205 : vector<8x512xf32>
    %207 = math.tanh %206 : vector<8x512xf32>
    %208 = vector.broadcast %17 : vector<1x512xf32> to vector<8x512xf32>
    %209 = arith.mulf %207, %208 : vector<8x512xf32>
    %210 = vector.broadcast %22 : vector<1x512xf32> to vector<8x512xf32>
    %211 = arith.addf %209, %210 : vector<8x512xf32>
    %212 = vector.extract_strided_slice %211 {offsets = [0, 0], sizes = [8, 128], strides = [1, 1]} : vector<8x512xf32> to vector<8x128xf32>
    %213 = vector.extract_strided_slice %211 {offsets = [0, 128], sizes = [8, 128], strides = [1, 1]} : vector<8x512xf32> to vector<8x128xf32>
    %214 = vector.extract_strided_slice %211 {offsets = [0, 256], sizes = [8, 128], strides = [1, 1]} : vector<8x512xf32> to vector<8x128xf32>
    %215 = vector.extract_strided_slice %211 {offsets = [0, 384], sizes = [8, 128], strides = [1, 1]} : vector<8x512xf32> to vector<8x128xf32>
    %216 = arith.mulf %213, %193 : vector<8x128xf32>
    %217 = arith.mulf %212, %214 : vector<8x128xf32>
    %218 = arith.addf %216, %217 : vector<8x128xf32>
    %219 = math.tanh %218 : vector<8x128xf32>
    %220 = arith.mulf %215, %219 : vector<8x128xf32>
    %221 = arith.truncf %220 : vector<8x128xf32> to vector<8x128xbf16>
    %c7_70 = arith.constant 7 : index
    %c0_71 = arith.constant 0 : index
    %c0_72 = arith.constant 0 : index
    %222 = vector.load %arg7[%c7_70, %c0_71, %c0_72] : memref<8x8x128xbf16, #tpu.memory_space<vmem>>, vector<1x8x128xbf16>
    %223 = vector.shape_cast %222 : vector<1x8x128xbf16> to vector<8x128xbf16>
    %224 = vector.shape_cast %221 : vector<8x128xbf16> to vector<1x8x128xbf16>
    tpu.vector_store %arg7[%c7_70, %c0_71, %c0_72], %224 {strides = array<i32>} : memref<8x8x128xbf16, #tpu.memory_space<vmem>>, vector<1x8x128xbf16>,
    %c0_i32_73 = arith.constant 0 : i32
    %225 = arith.cmpi eq, %arg0, %c0_i32_73 : i32
    %226 = arith.extui %225 : i1 to i32
    %c0_i32_74 = arith.constant 0 : i32
    %227 = arith.cmpi ne, %226, %c0_i32_74 : i32
    scf.if %227 {
      %c0_79 = arith.constant 0 : index
      %c0_80 = arith.constant 0 : index
      %230 = vector.load %arg8[%c0_79, %c0_80] : memref<8x128xf32, #tpu.memory_space<vmem>>, vector<8x128xf32>
      tpu.vector_store %arg8[%c0_79, %c0_80], %220 {strides = array<i32>} : memref<8x128xf32, #tpu.memory_space<vmem>>, vector<8x128xf32>,
      %c0_81 = arith.constant 0 : index
      %c0_82 = arith.constant 0 : index
      %231 = vector.load %arg9[%c0_81, %c0_82] : memref<8x128xf32, #tpu.memory_space<vmem>>, vector<8x128xf32>
      tpu.vector_store %arg9[%c0_81, %c0_82], %218 {strides = array<i32>} : memref<8x128xf32, #tpu.memory_space<vmem>>, vector<8x128xf32>,
    } else {
    }
    %c0_75 = arith.constant 0 : index
    %c0_76 = arith.constant 0 : index
    %228 = vector.load %arg10[%c0_75, %c0_76] : memref<8x128xf32, #tpu.memory_space<vmem>>, vector<8x128xf32>
    tpu.vector_store %arg10[%c0_75, %c0_76], %220 {strides = array<i32>} : memref<8x128xf32, #tpu.memory_space<vmem>>, vector<8x128xf32>,
    %c0_77 = arith.constant 0 : index
    %c0_78 = arith.constant 0 : index
    %229 = vector.load %arg11[%c0_77, %c0_78] : memref<8x128xf32, #tpu.memory_space<vmem>>, vector<8x128xf32>
    tpu.vector_store %arg11[%c0_77, %c0_78], %218 {strides = array<i32>} : memref<8x128xf32, #tpu.memory_space<vmem>>, vector<8x128xf32>,
    return
  }
  func.func @transform_0(%arg0: i32) -> (i32, i32, i32) {
    %c0_i32 = arith.constant 0 : i32
    %c0_i32_0 = arith.constant 0 : i32
    %c0_i32_1 = arith.constant 0 : i32
    return %arg0, %c0_i32, %c0_i32_0 : i32, i32, i32
  }
  func.func @transform_1(%arg0: i32) -> (i32, i32) {
    %c0_i32 = arith.constant 0 : i32
    %c0_i32_0 = arith.constant 0 : i32
    %c0_i32_1 = arith.constant 0 : i32
    return %c0_i32, %c0_i32_0 : i32, i32
  }
  func.func @transform_2(%arg0: i32) -> (i32, i32) {
    %c0_i32 = arith.constant 0 : i32
    %c0_i32_0 = arith.constant 0 : i32
    %c0_i32_1 = arith.constant 0 : i32
    return %c0_i32, %c0_i32_0 : i32, i32
  }
  func.func @transform_3(%arg0: i32) -> (i32, i32) {
    %c0_i32 = arith.constant 0 : i32
    %c0_i32_0 = arith.constant 0 : i32
    %c0_i32_1 = arith.constant 0 : i32
    return %c0_i32, %c0_i32_0 : i32, i32
  }
  func.func @transform_4(%arg0: i32) -> (i32, i32) {
    %c0_i32 = arith.constant 0 : i32
    %c0_i32_0 = arith.constant 0 : i32
    %c0_i32_1 = arith.constant 0 : i32
    return %c0_i32, %c0_i32_0 : i32, i32
  }
  func.func @transform_5(%arg0: i32) -> (i32, i32) {
    %c0_i32 = arith.constant 0 : i32
    %c0_i32_0 = arith.constant 0 : i32
    %c0_i32_1 = arith.constant 0 : i32
    return %c0_i32, %c0_i32_0 : i32, i32
  }
  func.func @transform_6(%arg0: i32) -> (i32, i32, i32) {
    %c0_i32 = arith.constant 0 : i32
    %c0_i32_0 = arith.constant 0 : i32
    %c0_i32_1 = arith.constant 0 : i32
    return %arg0, %c0_i32, %c0_i32_0 : i32, i32, i32
  }
  func.func @transform_7(%arg0: i32) -> (i32, i32) {
    %c0_i32 = arith.constant 0 : i32
    %c0_i32_0 = arith.constant 0 : i32
    %c0_i32_1 = arith.constant 0 : i32
    return %c0_i32, %c0_i32_0 : i32, i32
  }
  func.func @transform_8(%arg0: i32) -> (i32, i32) {
    %c0_i32 = arith.constant 0 : i32
    %c0_i32_0 = arith.constant 0 : i32
    %c0_i32_1 = arith.constant 0 : i32
    return %c0_i32, %c0_i32_0 : i32, i32
  }
}

module attributes {stable_mosaic.version = 11 : i64} {
  func.func @_matmul_bias_kernel(%arg0: i32, %arg1: i32, %arg2: memref<64x128xbf16, #tpu.memory_space<vmem>>, %arg3: memref<128x128xbf16, #tpu.memory_space<vmem>>, %arg4: memref<1x128xf32, #tpu.memory_space<vmem>>, %arg5: memref<64x128xf32, #tpu.memory_space<vmem>>) attributes {dimension_semantics = [#tpu.dimension_semantics<parallel>, #tpu.dimension_semantics<parallel>], iteration_bounds = array<i64: 1, 1>, scalar_prefetch = 0 : i64, scratch_operands = 0 : i64, tpu.core_type = #tpu.core_type<tc>, window_params = [{transform_indices = @transform_0, window_bounds = array<i64: 64, 128>}, {transform_indices = @transform_1, window_bounds = array<i64: 128, 128>}, {transform_indices = @transform_2, window_bounds = array<i64: 1, 128>}, {transform_indices = @transform_3, window_bounds = array<i64: 64, 128>}]} {
    %c0 = arith.constant 0 : index
    %c0_0 = arith.constant 0 : index
    %0 = vector.load %arg2[%c0, %c0_0] : memref<64x128xbf16, #tpu.memory_space<vmem>>, vector<64x128xbf16>
    %c0_1 = arith.constant 0 : index
    %c0_2 = arith.constant 0 : index
    %1 = vector.load %arg3[%c0_1, %c0_2] : memref<128x128xbf16, #tpu.memory_space<vmem>>, vector<128x128xbf16>
    %cst = arith.constant dense<0.000000e+00> : vector<64x128xf32>
    %2 = tpu.matmul %0, %1, %cst {dimension_numbers = #tpu.dot_dimension_numbers<[1], [0], [0], [1], [0, 0, 1, 1], [], []>} : vector<64x128xbf16>, vector<128x128xbf16>, vector<64x128xf32> -> vector<64x128xf32>
    %c0_3 = arith.constant 0 : index
    %c0_4 = arith.constant 0 : index
    %3 = vector.load %arg4[%c0_3, %c0_4] : memref<1x128xf32, #tpu.memory_space<vmem>>, vector<1x128xf32>
    %4 = vector.broadcast %3 : vector<1x128xf32> to vector<64x128xf32>
    %5 = arith.addf %2, %4 : vector<64x128xf32>
    %c0_5 = arith.constant 0 : index
    %c0_6 = arith.constant 0 : index
    %6 = vector.load %arg5[%c0_5, %c0_6] : memref<64x128xf32, #tpu.memory_space<vmem>>, vector<64x128xf32>
    tpu.vector_store %arg5[%c0_5, %c0_6], %5 {strides = array<i32>} : memref<64x128xf32, #tpu.memory_space<vmem>>, vector<64x128xf32>,
    return
  }
  func.func @transform_0(%arg0: i32, %arg1: i32) -> (i32, i32) {
    %c0_i32 = arith.constant 0 : i32
    %c0_i32_0 = arith.constant 0 : i32
    return %arg0, %c0_i32 : i32, i32
  }
  func.func @transform_1(%arg0: i32, %arg1: i32) -> (i32, i32) {
    %c0_i32 = arith.constant 0 : i32
    %c0_i32_0 = arith.constant 0 : i32
    return %c0_i32, %arg1 : i32, i32
  }
  func.func @transform_2(%arg0: i32, %arg1: i32) -> (i32, i32) {
    %c0_i32 = arith.constant 0 : i32
    %c0_i32_0 = arith.constant 0 : i32
    return %c0_i32, %arg1 : i32, i32
  }
  func.func @transform_3(%arg0: i32, %arg1: i32) -> (i32, i32) {
    %c0_i32 = arith.constant 0 : i32
    return %arg0, %arg1 : i32, i32
  }
}

</mosaic_0001>

<llo_original>
// kernel: tpu_custom_call.1
$region0: #{tpu_custom_call.1}
  #allocation0 [shape = 'u32[]', space=smem, size = 0x4, offset = 0x4, fixed_abs, tag = 'smem constant byte address 0x4 - core index']
  #allocation1 [shape = 'u32[144,128]{1,0:T(1,128)}', space=vmem, size = 0x12000, scoped, tag = 'internal scratch']
  %s0 = inlined_call_operand.hbm [shape: f32[8,128], index: 0, kind: input, shape index: {}]
  %s1 = inlined_call_operand.hbm [shape: f32[8,128], index: 1, kind: output, shape index: {}]
  %s2 = sld [smem:[#allocation0]]
  $region41: #{tpu_custom_call.1} parent=0
    _
  %s4 = ssub.s32 1, %s2
  %s5 = scalar_select 0, %s4, %s2
  $region1: #{tpu_custom_call.1} parent=0
    #allocation2 [shape = 'u8[4096]{0}', space=vmem, size = 0x1000, scoped, tag = 'input window, operand 0, single buffered']
    #allocation3 [shape = 's32[2]{0}', space=sflag, size = 0x8, scoped, tag = 'scoped memory for tpu_custom_call.1']
    #allocation4 [shape = 's32[2]{0}', space=sflag, size = 0x8, scoped, tag = 'scoped memory for tpu_custom_call.1']
    #allocation5 [shape = 'u8[4096]{0}', space=vmem, size = 0x1000, scoped, tag = 'output window, operand 0, single buffered']
    %6 = vsyncpa [#allocation3], 0
    %7 = vsyncpa [#allocation4], 0
    loop: start=0, step=1, limit=4
    $region2: #{tpu_custom_call.1} parent=1 // loop_pre_header
      _
    $region3: #{tpu_custom_call.1} parent=1 // loop_header
      %s9 = sphi 0, %s13
      %p10 = scmp.ge.s32.totalorder %s9, 4
      %s17 = sphi 0, %s17
      %s19 = sphi 0, %s17
      %s20 = sphi 0, %s19
      %s34 = sphi 0, %s20
      %s38 = sphi 0, %s38
      %s40 = sphi 0, %s38
      %s41 = sphi 0, %s40
      %s55 = sphi 0, %s41
    $region4: #{tpu_custom_call.1} parent=1 // loop_header_branch
      %12 = sbr.rel (%p10) target = $region8
    $region5: #{tpu_custom_call.1} parent=1 // loop_body
      %s14 = ssub.s32 %s9, 1
      %s15 = ssub.s32 %s9, 2
      %s16 = sadd.s32 %s9, 1
      %s18 = sadd.s32 %s17, 1
      %p21 = scmp.eq.s32.totalorder %s9, 1
      %p22 = scmp.ne.s32.totalorder %s17, %s19
      %p23 = scmp.eq.s32.totalorder %s9, 0
      %p24 = por %p22, %p23
      %p25 = scmp.ne.s32.totalorder %s17, %s19
      %p26 = scmp.eq.s32.totalorder %s14, 1
      %p27 = por %p25, %p26
      %p28 = scmp.ne.s32.totalorder %s19, %s20
      %p29 = scmp.eq.s32.totalorder %s14, 0
      %p30 = por %p28, %p29
      %p31 = scmp.ne.s32.totalorder %s19, %s20
      %p32 = scmp.eq.s32.totalorder %s15, 1
      %p33 = por %p31, %p32
      %p35 = scmp.ne.s32.totalorder %s20, %s34
      %p36 = scmp.eq.s32.totalorder %s15, 0
      %p37 = por %p35, %p36
      %s39 = sadd.s32 %s38, 1
      %p42 = scmp.eq.s32.totalorder %s9, 1
      %p43 = scmp.ne.s32.totalorder %s38, %s40
      %p44 = scmp.eq.s32.totalorder %s9, 0
      %p45 = por %p43, %p44
      %p46 = scmp.ne.s32.totalorder %s38, %s40
      %p47 = scmp.eq.s32.totalorder %s14, 1
      %p48 = por %p46, %p47
      %p49 = scmp.ne.s32.totalorder %s40, %s41
      %p50 = scmp.eq.s32.totalorder %s14, 0
      %p51 = por %p49, %p50
      %p52 = scmp.ne.s32.totalorder %s40, %s41
      %p53 = scmp.eq.s32.totalorder %s15, 1
      %p54 = por %p52, %p53
      %p56 = scmp.ne.s32.totalorder %s41, %s55
      %p57 = scmp.eq.s32.totalorder %s15, 0
      %p58 = por %p56, %p57
      %p59 = scmp.le.s32.totalorder 1, %s9
      %p60 = scmp.lt.s32.totalorder %s9, 3
      %p61 = pnand %p59, %p60
      %p62 = pneg %p61
      // Predicated region
      $region9: #{tpu_custom_call.1} parent=5 // pred_check
        _
      $region10: #{tpu_custom_call.1} parent=5 // pred_check_branch
        %64 = sbr.rel (%p61) target = $region12
      $region11: #{tpu_custom_call.1} parent=5 // pred_region
        %s65 = ssub.s32 %s9, 1
        // Predicated region
        $region13: #{tpu_custom_call.1} parent=11 // pred_check
          %p66 = pneg %p30
        $region14: #{tpu_custom_call.1} parent=11 // pred_check_branch
          %68 = sbr.rel (%p66) target = $region16
        $region15: #{tpu_custom_call.1} parent=11 // pred_region
          %s70 = ssub.s32 128, 128
          %71 = vsyncadd [#allocation3], %s70
          %s73 = sshll.u32 [#allocation2], 4
          %s74 = int_to_ptr.vmem [resolvable:$true] %s73
          %76 = dma.hbm_to_vmem [thread:$0]  %s0, 128, %s74, [#allocation3]
        $region16: #{tpu_custom_call.1} parent=11 // pred_fallthru
          _
      $region12: #{tpu_custom_call.1} parent=5 // pred_fallthru
        _
      %p77 = scmp.lt.s32.totalorder %s9, 2
      // Predicated region
      $region17: #{tpu_custom_call.1} parent=5 // pred_check
        %p78 = pneg %p77
      $region18: #{tpu_custom_call.1} parent=5 // pred_check_branch
        %80 = sbr.rel (%p78) target = $region20
      $region19: #{tpu_custom_call.1} parent=5 // pred_region
        _
      $region20: #{tpu_custom_call.1} parent=5 // pred_fallthru
        _
      %p81 = scmp.le.s32.totalorder 1, %s9
      %p82 = scmp.lt.s32.totalorder %s9, 3
      %p83 = pnand %p81, %p82
      %p84 = pneg %p83
      // Predicated region
      $region21: #{tpu_custom_call.1} parent=5 // pred_check
        _
      $region22: #{tpu_custom_call.1} parent=5 // pred_check_branch
        %86 = sbr.rel (%p83) target = $region24
      $region23: #{tpu_custom_call.1} parent=5 // pred_region
        %s87 = ssub.s32 %s9, 1
        // Predicated region
        $region25: #{tpu_custom_call.1} parent=23 // pred_check
          %p88 = pneg %p30
        $region26: #{tpu_custom_call.1} parent=23 // pred_check_branch
          %90 = sbr.rel (%p88) target = $region28
        $region27: #{tpu_custom_call.1} parent=23 // pred_region
          %91 = dma.done [#allocation3], 128
        $region28: #{tpu_custom_call.1} parent=23 // pred_fallthru
          _
        %p92 = pneg %p30
        %p93 = pneg %p27
        %p94 = pneg %p51
        %p95 = pneg %p48
        %v96 = vld [vmem:[#allocation2] sm:$0xff]
        %97 = vst [vmem:[#allocation5] sm:$0xff] %v96
        // Predicated region
        $region29: #{tpu_custom_call.1} parent=23 // pred_check
          %p98 = pneg %p48
        $region30: #{tpu_custom_call.1} parent=23 // pred_check_branch
          %100 = sbr.rel (%p98) target = $region32
        $region31: #{tpu_custom_call.1} parent=23 // pred_region
          %s102 = ssub.s32 128, 128
          %103 = vsyncadd [#allocation4], %s102
          %s105 = sshll.u32 [#allocation5], 4
          %s106 = int_to_ptr.vmem [resolvable:$true] %s105
          %108 = dma.vmem_to_hbm [thread:$0]  %s106, 128, %s1, [#allocation4]
        $region32: #{tpu_custom_call.1} parent=23 // pred_fallthru
          _
        // Predicated region
        $region33: #{tpu_custom_call.1} parent=23 // pred_check
          %p109 = pneg %p48
        $region34: #{tpu_custom_call.1} parent=23 // pred_check_branch
          %111 = sbr.rel (%p109) target = $region36
        $region35: #{tpu_custom_call.1} parent=23 // pred_region
          %112 = dma.done [#allocation4], 128
        $region36: #{tpu_custom_call.1} parent=23 // pred_fallthru
          _
      $region24: #{tpu_custom_call.1} parent=5 // pred_fallthru
        _
      %p113 = scmp.le.s32.totalorder 2, %s9
      // Predicated region
      $region37: #{tpu_custom_call.1} parent=5 // pred_check
        %p114 = pneg %p113
      $region38: #{tpu_custom_call.1} parent=5 // pred_check_branch
        %116 = sbr.rel (%p114) target = $region40
      $region39: #{tpu_custom_call.1} parent=5 // pred_region
        %s117 = ssub.s32 %s9, 2
      $region40: #{tpu_custom_call.1} parent=5 // pred_fallthru
        _
    $region6: #{tpu_custom_call.1} parent=1 // loop_footer
      %s13 = sadd.s32 1, %s9
    $region7: #{tpu_custom_call.1} parent=1 // loop_footer_branch
      %8 = sbr.rel target = $region3
    $region8: #{tpu_custom_call.1} parent=1 // loop_exit
      _
    %118 = vsyncpa [#allocation3], 1
    %s119 = scalar_lea.sflag [#allocation3], 1
    %120 = vsyncpa %s119, 1
    %121 = vsyncpa [#allocation4], 1
    %s122 = scalar_lea.sflag [#allocation4], 1
    %123 = vsyncpa %s122, 1

// kernel: word_lstm_forward.5
$region0: #{word_lstm_forward.5}
  #allocation0 [shape = 'u32[]', space=smem, size = 0x4, offset = 0x4, fixed_abs, tag = 'smem constant byte address 0x4 - core index']
  #allocation1 [shape = 'u32[144,128]{1,0:T(1,128)}', space=vmem, size = 0x12000, scoped, tag = 'internal scratch']
  %s0 = inlined_call_operand.vmem [shape: bf16[64,128], index: 0, kind: input, shape index: {}]
  %s1 = inlined_call_operand.vmem [shape: bf16[128,128], index: 1, kind: input, shape index: {}]
  %s2 = inlined_call_operand.vmem [shape: f32[1,128], index: 2, kind: input, shape index: {}]
  %s3 = inlined_call_operand.vmem [shape: f32[64,128], index: 3, kind: output, shape index: {}]
  %s4 = sld [smem:[#allocation0]]
  $region22: #{word_lstm_forward.5} parent=0
    _
  %s6 = ssub.s32 1, %s4
  %s7 = scalar_select 0, %s6, %s4
  // Predicated region
  $region2: #{word_lstm_forward.5} parent=0 // pred_check
    _
  $region3: #{word_lstm_forward.5} parent=0 // pred_check_branch
    %9 = sbr.rel (0) target = $region5
  $region4: #{word_lstm_forward.5} parent=0 // pred_region
    _
  $region5: #{word_lstm_forward.5} parent=0 // pred_fallthru
    _
  // Predicated region
  $region6: #{word_lstm_forward.5} parent=0 // pred_check
    _
  $region7: #{word_lstm_forward.5} parent=0 // pred_check_branch
    %11 = sbr.rel (0) target = $region9
  $region8: #{word_lstm_forward.5} parent=0 // pred_region
    _
  $region9: #{word_lstm_forward.5} parent=0 // pred_fallthru
    _
  // Predicated region
  $region10: #{word_lstm_forward.5} parent=0 // pred_check
    _
  $region11: #{word_lstm_forward.5} parent=0 // pred_check_branch
    %13 = sbr.rel (0) target = $region13
  $region12: #{word_lstm_forward.5} parent=0 // pred_region
    _
  $region13: #{word_lstm_forward.5} parent=0 // pred_fallthru
    _
  %v15 = vld [vmem:[%s0] sm:$0xf]
  %v16 = vld [vmem:[%s0 + $0x4] sm:$0xf]
  %v17 = vld [vmem:[%s0 + $0x8] sm:$0xf]
  %v18 = vld [vmem:[%s0 + $0xc] sm:$0xf]
  %v19 = vld [vmem:[%s0 + $0x10] sm:$0xf]
  %v20 = vld [vmem:[%s0 + $0x14] sm:$0xf]
  %v21 = vld [vmem:[%s0 + $0x18] sm:$0xf]
  %v22 = vld [vmem:[%s0 + $0x1c] sm:$0xf]
  %v23 = vld [vmem:[%s1] sm:$0xf]
  %v24 = vld [vmem:[%s1 + $0x4] sm:$0xf]
  %v25 = vld [vmem:[%s1 + $0x8] sm:$0xf]
  %v26 = vld [vmem:[%s1 + $0xc] sm:$0xf]
  %v27 = vld [vmem:[%s1 + $0x10] sm:$0xf]
  %v28 = vld [vmem:[%s1 + $0x14] sm:$0xf]
  %v29 = vld [vmem:[%s1 + $0x18] sm:$0xf]
  %v30 = vld [vmem:[%s1 + $0x1c] sm:$0xf]
  %v31 = vld [vmem:[%s1 + $0x20] sm:$0xf]
  %v32 = vld [vmem:[%s1 + $0x24] sm:$0xf]
  %v33 = vld [vmem:[%s1 + $0x28] sm:$0xf]
  %v34 = vld [vmem:[%s1 + $0x2c] sm:$0xf]
  %v35 = vld [vmem:[%s1 + $0x30] sm:$0xf]
  %v36 = vld [vmem:[%s1 + $0x34] sm:$0xf]
  %v37 = vld [vmem:[%s1 + $0x38] sm:$0xf]
  %v38 = vld [vmem:[%s1 + $0x3c] sm:$0xf]
  %v39 = vld [vmem:[%s2] sm:$0x1]
  %v41 = vlaneseq
  %v42 = vshrl.u32 %v41, 7
  %v43 = vsub.s32 0, %v42
  %v44 = vrot.slane %v39, %v43
  %v54 = vunpack.c.l.b16 %v15
  %v55 = vunpack.c.l.b16 %v16
  %v56 = vunpack.c.l.b16 %v17
  %v57 = vunpack.c.l.b16 %v18
  %v58 = vunpack.c.l.b16 %v19
  %v59 = vunpack.c.l.b16 %v20
  %v60 = vunpack.c.l.b16 %v21
  %v61 = vunpack.c.l.b16 %v22
  %v62 = vpack.c.b16 %v55, %v54
  %v63 = vpack.c.b16 %v57, %v56
  %v64 = vpack.c.b16 %v59, %v58
  %v65 = vpack.c.b16 %v61, %v60
  %v86 = vunpack.c.l.b16 %v23
  %v87 = vunpack.c.l.b16 %v24
  %v88 = vunpack.c.l.b16 %v25
  %v89 = vunpack.c.l.b16 %v26
  %v90 = vunpack.c.l.b16 %v27
  %v91 = vunpack.c.l.b16 %v28
  %v92 = vunpack.c.l.b16 %v29
  %v93 = vunpack.c.l.b16 %v30
  %v94 = vunpack.c.l.b16 %v31
  %v95 = vunpack.c.l.b16 %v32
  %v96 = vunpack.c.l.b16 %v33
  %v97 = vunpack.c.l.b16 %v34
  %v98 = vunpack.c.l.b16 %v35
  %v99 = vunpack.c.l.b16 %v36
  %v100 = vunpack.c.l.b16 %v37
  %v101 = vunpack.c.l.b16 %v38
  %v102 = vpack.c.b16 %v87, %v86
  %v103 = vpack.c.b16 %v89, %v88
  %v104 = vpack.c.b16 %v91, %v90
  %v105 = vpack.c.b16 %v93, %v92
  %v106 = vpack.c.b16 %v95, %v94
  %v107 = vpack.c.b16 %v97, %v96
  %v108 = vpack.c.b16 %v99, %v98
  %v109 = vpack.c.b16 %v101, %v100
  %118 = vmatprep.subr.bf16.mxu0 0
  %119 = vmatpush1.bf16.msra.mxu0 %v102
  %120 = vmatprep.subr.bf16.mxu0 0
  %121 = vmatpush1.bf16.msra.mxu0 %v103
  %122 = vmatprep.subr.bf16.mxu0 0
  %123 = vmatpush1.bf16.msra.mxu0 %v104
  %124 = vmatprep.subr.bf16.mxu0 0
  %125 = vmatpush1.bf16.msra.mxu0 %v105
  %126 = vmatprep.subr.bf16.mxu0 0
  %127 = vmatpush1.bf16.msra.mxu0 %v106
  %128 = vmatprep.subr.bf16.mxu0 0
  %129 = vmatpush1.bf16.msra.mxu0 %v107
  %130 = vmatprep.subr.bf16.mxu0 0
  %131 = vmatpush1.bf16.msra.mxu0 %v108
  %132 = vmatprep.subr.bf16.mxu0 0
  %133 = vmatpush1.bf16.msra.mxu0 %v109
  %134 = vmatprep.subr.bf16.mxu0 0
  %135 = vmatpush1.bf16.msra.mxu0 0
  %136 = vmatprep.subr.bf16.mxu0 0
  %137 = vmatpush1.bf16.msra.mxu0 0
  %138 = vmatprep.subr.bf16.mxu0 0
  %139 = vmatpush1.bf16.msra.mxu0 0
  %140 = vmatprep.subr.bf16.mxu0 0
  %141 = vmatpush1.bf16.msra.mxu0 0
  %142 = vmatprep.subr.bf16.mxu0 0
  %143 = vmatpush1.bf16.msra.mxu0 0
  %144 = vmatprep.subr.bf16.mxu0 0
  %145 = vmatpush1.bf16.msra.mxu0 0
  %146 = vmatprep.subr.bf16.mxu0 0
  %147 = vmatpush1.bf16.msra.mxu0 0
  %148 = vmatprep.subr.bf16.mxu0 0
  %149 = vmatpush1.bf16.msra.mxu0 0
  %150 = vmatprep.mubr.bf16.mxu0 0
  %151 = vmatmul.mubr.bf16.gmra.mrb[0].mxu0 %v62
  %v152 = vpop.f32.mrb[0].mxu0
  %v153 = vadd.f32 %v44, %v152
  %v154 = vpop.f32.mrb[0].mxu0
  %v155 = vpop.f32.mrb[0].mxu0
  %v156 = vadd.f32 %v44, %v155
  %v157 = vpop.f32.mrb[0].mxu0
  %158 = vmatprep.mubr.bf16.mxu0 0
  %159 = vmatmul.mubr.bf16.gmra.mrb[0].mxu0 %v63
  %v160 = vpop.f32.mrb[0].mxu0
  %v161 = vadd.f32 %v44, %v160
  %v162 = vpop.f32.mrb[0].mxu0
  %v163 = vpop.f32.mrb[0].mxu0
  %v164 = vadd.f32 %v44, %v163
  %v165 = vpop.f32.mrb[0].mxu0
  %166 = vmatprep.mubr.bf16.mxu0 0
  %167 = vmatmul.mubr.bf16.gmra.mrb[0].mxu0 %v64
  %v168 = vpop.f32.mrb[0].mxu0
  %v169 = vadd.f32 %v44, %v168
  %v170 = vpop.f32.mrb[0].mxu0
  %v171 = vpop.f32.mrb[0].mxu0
  %v172 = vadd.f32 %v44, %v171
  %v173 = vpop.f32.mrb[0].mxu0
  %174 = vmatprep.mubr.bf16.mxu0 0
  %175 = vmatmul.mubr.bf16.gmra.mrb[0].mxu0 %v65
  %v176 = vpop.f32.mrb[0].mxu0
  %v177 = vadd.f32 %v44, %v176
  %v178 = vpop.f32.mrb[0].mxu0
  %v179 = vpop.f32.mrb[0].mxu0
  %v180 = vadd.f32 %v44, %v179
  %v181 = vpop.f32.mrb[0].mxu0
  %182 = vdwg.mxu0
  %183 = vst [vmem:[%s3] sm:$0xff] %v153
  %184 = vst [vmem:[%s3 + $0x8] sm:$0xff] %v156
  %185 = vst [vmem:[%s3 + $0x10] sm:$0xff] %v161
  %186 = vst [vmem:[%s3 + $0x18] sm:$0xff] %v164
  %187 = vst [vmem:[%s3 + $0x20] sm:$0xff] %v169
  %188 = vst [vmem:[%s3 + $0x28] sm:$0xff] %v172
  %189 = vst [vmem:[%s3 + $0x30] sm:$0xff] %v177
  %190 = vst [vmem:[%s3 + $0x38] sm:$0xff] %v180
  // Predicated region
  $region14: #{word_lstm_forward.5} parent=0 // pred_check
    _
  $region15: #{word_lstm_forward.5} parent=0 // pred_check_branch
    %192 = sbr.rel (0) target = $region17
  $region16: #{word_lstm_forward.5} parent=0 // pred_region
    _
  $region17: #{word_lstm_forward.5} parent=0 // pred_fallthru
    _
  // Predicated region
  $region18: #{word_lstm_forward.5} parent=0 // pred_check
    _
  $region19: #{word_lstm_forward.5} parent=0 // pred_check_branch
    %194 = sbr.rel (0) target = $region21
  $region20: #{word_lstm_forward.5} parent=0 // pred_region
    _
  $region21: #{word_lstm_forward.5} parent=0 // pred_fallthru
    _

// kernel: word_lstm_forward.3
$region0: #{word_lstm_forward.3}
  #allocation0 [shape = 'u32[]', space=smem, size = 0x4, offset = 0x4, fixed_abs, tag = 'smem constant byte address 0x4 - core index']
  #allocation1 [shape = 'u32[144,128]{1,0:T(1,128)}', space=vmem, size = 0x12000, scoped, tag = 'internal scratch']
  #allocation2 [shape = 'f32[8,128]{1,0:T(8,128)}', space=vmem, size = 0x1000, scoped, tag = 'scratch operand']
  #allocation3 [shape = 'f32[8,128]{1,0:T(8,128)}', space=vmem, size = 0x1000, scoped, tag = 'scratch operand']
  #allocation4 [shape = 'f32[8,8,512]{2,1,0:T(8,128)}', space=vmem, size = 0x20000, scoped, tag = 'scratch operand']
  %s0 = inlined_call_operand.vmem [shape: bf16[8,8,128], index: 0, kind: input, shape index: {}]
  %s1 = inlined_call_operand.vmem [shape: f32[8,128], index: 1, kind: input, shape index: {}]
  %s2 = inlined_call_operand.vmem [shape: f32[8,128], index: 2, kind: input, shape index: {}]
  %s3 = inlined_call_operand.vmem [shape: bf16[128,512], index: 3, kind: input, shape index: {}]
  %s4 = inlined_call_operand.vmem [shape: bf16[128,512], index: 4, kind: input, shape index: {}]
  %s5 = inlined_call_operand.vmem [shape: f32[1,512], index: 5, kind: input, shape index: {}]
  %s6 = inlined_call_operand.vmem [shape: bf16[8,8,128], index: 6, kind: output, shape index: {0}]
  %s7 = inlined_call_operand.vmem [shape: f32[8,128], index: 7, kind: output, shape index: {1}]
  %s8 = inlined_call_operand.vmem [shape: f32[8,128], index: 8, kind: output, shape index: {2}]
  %9 = xla_tuple %s6, %s7, %s8
  %s10 = sld [smem:[#allocation0]]
  $region58: #{word_lstm_forward.3} parent=0
    _
  %s12 = ssub.s32 1, %s10
  %s13 = scalar_select 0, %s12, %s10
  // Predicated region
  $region2: #{word_lstm_forward.3} parent=0 // pred_check
    _
  $region3: #{word_lstm_forward.3} parent=0 // pred_check_branch
    %15 = sbr.rel (0) target = $region5
  $region4: #{word_lstm_forward.3} parent=0 // pred_region
    _
  $region5: #{word_lstm_forward.3} parent=0 // pred_fallthru
    _
  // Predicated region
  $region6: #{word_lstm_forward.3} parent=0 // pred_check
    _
  $region7: #{word_lstm_forward.3} parent=0 // pred_check_branch
    %17 = sbr.rel (0) target = $region9
  $region8: #{word_lstm_forward.3} parent=0 // pred_region
    _
  $region9: #{word_lstm_forward.3} parent=0 // pred_fallthru
    _
  // Predicated region
  $region10: #{word_lstm_forward.3} parent=0 // pred_check
    _
  $region11: #{word_lstm_forward.3} parent=0 // pred_check_branch
    %19 = sbr.rel (0) target = $region13
  $region12: #{word_lstm_forward.3} parent=0 // pred_region
    _
  $region13: #{word_lstm_forward.3} parent=0 // pred_fallthru
    _
  // Predicated region
  $region14: #{word_lstm_forward.3} parent=0 // pred_check
    _
  $region15: #{word_lstm_forward.3} parent=0 // pred_check_branch
    %21 = sbr.rel (0) target = $region17
  $region16: #{word_lstm_forward.3} parent=0 // pred_region
    _
  $region17: #{word_lstm_forward.3} parent=0 // pred_fallthru
    _
  // Predicated region
  $region18: #{word_lstm_forward.3} parent=0 // pred_check
    _
  $region19: #{word_lstm_forward.3} parent=0 // pred_check_branch
    %23 = sbr.rel (0) target = $region21
  $region20: #{word_lstm_forward.3} parent=0 // pred_region
    _
  $region21: #{word_lstm_forward.3} parent=0 // pred_fallthru
    _
  // Predicated region
  $region22: #{word_lstm_forward.3} parent=0 // pred_check
    _
  $region23: #{word_lstm_forward.3} parent=0 // pred_check_branch
    %25 = sbr.rel (0) target = $region25
  $region24: #{word_lstm_forward.3} parent=0 // pred_region
    _
  $region25: #{word_lstm_forward.3} parent=0 // pred_fallthru
    _
  %p27 = scmp.eq.s32.totalorder 0, 0
  // Predicated region
  $region26: #{word_lstm_forward.3} parent=0 // pred_check
    %p28 = pneg %p27
  $region27: #{word_lstm_forward.3} parent=0 // pred_check_branch
    %30 = sbr.rel (%p28) target = $region29
  $region28: #{word_lstm_forward.3} parent=0 // pred_region
    %v31 = vld [vmem:[%s1] sm:$0xff]
    %32 = vst [vmem:[#allocation2] sm:$0xff] %v31
    %v33 = vld [vmem:[%s2] sm:$0xff]
    %34 = vst [vmem:[#allocation3] sm:$0xff] %v33
  $region29: #{word_lstm_forward.3} parent=0 // pred_fallthru
    _
  %v35 = vld [vmem:[%s0] sm:$0xf]
  %v36 = vld [vmem:[%s0 + $0x4] sm:$0xf]
  %v37 = vld [vmem:[%s0 + $0x8] sm:$0xf]
  %v38 = vld [vmem:[%s0 + $0xc] sm:$0xf]
  %v39 = vld [vmem:[%s0 + $0x10] sm:$0xf]
  %v40 = vld [vmem:[%s0 + $0x14] sm:$0xf]
  %v41 = vld [vmem:[%s0 + $0x18] sm:$0xf]
  %v42 = vld [vmem:[%s0 + $0x1c] sm:$0xf]
  %v43 = vld [vmem:[%s3] sm:$0xff]
  %v44 = vld [vmem:[%s3 + $0x8] sm:$0xff]
  %v45 = vld [vmem:[%s3 + $0x10] sm:$0xff]
  %v46 = vld [vmem:[%s3 + $0x18] sm:$0xff]
  %v47 = vld [vmem:[%s3 + $0x20] sm:$0xff]
  %v48 = vld [vmem:[%s3 + $0x28] sm:$0xff]
  %v49 = vld [vmem:[%s3 + $0x30] sm:$0xff]
  %v50 = vld [vmem:[%s3 + $0x38] sm:$0xff]
  %v51 = vld [vmem:[%s3 + $0x40] sm:$0xff]
  %v52 = vld [vmem:[%s3 + $0x48] sm:$0xff]
  %v53 = vld [vmem:[%s3 + $0x50] sm:$0xff]
  %v54 = vld [vmem:[%s3 + $0x58] sm:$0xff]
  %v55 = vld [vmem:[%s3 + $0x60] sm:$0xff]
  %v56 = vld [vmem:[%s3 + $0x68] sm:$0xff]
  %v57 = vld [vmem:[%s3 + $0x70] sm:$0xff]
  %v58 = vld [vmem:[%s3 + $0x78] sm:$0xff]
  %v59 = vld [vmem:[%s3 + $0x80] sm:$0xff]
  %v60 = vld [vmem:[%s3 + $0x88] sm:$0xff]
  %v61 = vld [vmem:[%s3 + $0x90] sm:$0xff]
  %v62 = vld [vmem:[%s3 + $0x98] sm:$0xff]
  %v63 = vld [vmem:[%s3 + $0xa0] sm:$0xff]
  %v64 = vld [vmem:[%s3 + $0xa8] sm:$0xff]
  %v65 = vld [vmem:[%s3 + $0xb0] sm:$0xff]
  %v66 = vld [vmem:[%s3 + $0xb8] sm:$0xff]
  %v67 = vld [vmem:[%s3 + $0xc0] sm:$0xff]
  %v68 = vld [vmem:[%s3 + $0xc8] sm:$0xff]
  %v69 = vld [vmem:[%s3 + $0xd0] sm:$0xff]
  %v70 = vld [vmem:[%s3 + $0xd8] sm:$0xff]
  %v71 = vld [vmem:[%s3 + $0xe0] sm:$0xff]
  %v72 = vld [vmem:[%s3 + $0xe8] sm:$0xff]
  %v73 = vld [vmem:[%s3 + $0xf0] sm:$0xff]
  %v74 = vld [vmem:[%s3 + $0xf8] sm:$0xff]
  %v75 = vld [vmem:[%s5] sm:$0xf]
  %v77 = vlaneseq
  %v78 = vshrl.u32 %v77, 7
  %v79 = vsub.s32 0, %v78
  %v80 = vrot.slane %v75, %v79
  %v81 = vlaneseq
  %v82 = vshrl.u32 %v81, 7
  %v83 = vsub.s32 1, %v82
  %v84 = vrot.slane %v75, %v83
  %v85 = vlaneseq
  %v86 = vshrl.u32 %v85, 7
  %v87 = vsub.s32 2, %v86
  %v88 = vrot.slane %v75, %v87
  %v89 = vlaneseq
  %v90 = vshrl.u32 %v89, 7
  %v91 = vsub.s32 3, %v90
  %v92 = vrot.slane %v75, %v91
  %v105 = vunpack.c.l.b16 %v35
  %v106 = vunpack.c.l.b16 %v36
  %v107 = vunpack.c.l.b16 %v37
  %v108 = vunpack.c.l.b16 %v38
  %v109 = vunpack.c.l.b16 %v39
  %v110 = vunpack.c.l.b16 %v40
  %v111 = vunpack.c.l.b16 %v41
  %v112 = vunpack.c.l.b16 %v42
  %v113 = vpack.c.b16 %v106, %v105
  %v114 = vpack.c.b16 %v108, %v107
  %v115 = vpack.c.b16 %v110, %v109
  %v116 = vpack.c.b16 %v112, %v111
  %v153 = vunpack.c.l.b16 %v43
  %v154 = vunpack.c.h.b16 %v43
  %v155 = vunpack.c.l.b16 %v44
  %v156 = vunpack.c.h.b16 %v44
  %v157 = vunpack.c.l.b16 %v45
  %v158 = vunpack.c.h.b16 %v45
  %v159 = vunpack.c.l.b16 %v46
  %v160 = vunpack.c.h.b16 %v46
  %v161 = vunpack.c.l.b16 %v47
  %v162 = vunpack.c.h.b16 %v47
  %v163 = vunpack.c.l.b16 %v48
  %v164 = vunpack.c.h.b16 %v48
  %v165 = vunpack.c.l.b16 %v49
  %v166 = vunpack.c.h.b16 %v49
  %v167 = vunpack.c.l.b16 %v50
  %v168 = vunpack.c.h.b16 %v50
  %v169 = vunpack.c.l.b16 %v51
  %v170 = vunpack.c.h.b16 %v51
  %v171 = vunpack.c.l.b16 %v52
  %v172 = vunpack.c.h.b16 %v52
  %v173 = vunpack.c.l.b16 %v53
  %v174 = vunpack.c.h.b16 %v53
  %v175 = vunpack.c.l.b16 %v54
  %v176 = vunpack.c.h.b16 %v54
  %v177 = vunpack.c.l.b16 %v55
  %v178 = vunpack.c.h.b16 %v55
  %v179 = vunpack.c.l.b16 %v56
  %v180 = vunpack.c.h.b16 %v56
  %v181 = vunpack.c.l.b16 %v57
  %v182 = vunpack.c.h.b16 %v57
  %v183 = vunpack.c.l.b16 %v58
  %v184 = vunpack.c.h.b16 %v58
  %v185 = vunpack.c.l.b16 %v59
  %v186 = vunpack.c.h.b16 %v59
  %v187 = vunpack.c.l.b16 %v60
  %v188 = vunpack.c.h.b16 %v60
  %v189 = vunpack.c.l.b16 %v61
  %v190 = vunpack.c.h.b16 %v61
  %v191 = vunpack.c.l.b16 %v62
  %v192 = vunpack.c.h.b16 %v62
  %v193 = vunpack.c.l.b16 %v63
  %v194 = vunpack.c.h.b16 %v63
  %v195 = vunpack.c.l.b16 %v64
  %v196 = vunpack.c.h.b16 %v64
  %v197 = vunpack.c.l.b16 %v65
  %v198 = vunpack.c.h.b16 %v65
  %v199 = vunpack.c.l.b16 %v66
  %v200 = vunpack.c.h.b16 %v66
  %v201 = vunpack.c.l.b16 %v67
  %v202 = vunpack.c.h.b16 %v67
  %v203 = vunpack.c.l.b16 %v68
  %v204 = vunpack.c.h.b16 %v68
  %v205 = vunpack.c.l.b16 %v69
  %v206 = vunpack.c.h.b16 %v69
  %v207 = vunpack.c.l.b16 %v70
  %v208 = vunpack.c.h.b16 %v70
  %v209 = vunpack.c.l.b16 %v71
  %v210 = vunpack.c.h.b16 %v71
  %v211 = vunpack.c.l.b16 %v72
  %v212 = vunpack.c.h.b16 %v72
  %v213 = vunpack.c.l.b16 %v73
  %v214 = vunpack.c.h.b16 %v73
  %v215 = vunpack.c.l.b16 %v74
  %v216 = vunpack.c.h.b16 %v74
  %v217 = vpack.c.b16 %v157, %v153
  %v218 = vpack.c.b16 %v158, %v154
  %v219 = vpack.c.b16 %v159, %v155
  %v220 = vpack.c.b16 %v160, %v156
  %v221 = vpack.c.b16 %v165, %v161
  %v222 = vpack.c.b16 %v166, %v162
  %v223 = vpack.c.b16 %v167, %v163
  %v224 = vpack.c.b16 %v168, %v164
  %v225 = vpack.c.b16 %v173, %v169
  %v226 = vpack.c.b16 %v174, %v170
  %v227 = vpack.c.b16 %v175, %v171
  %v228 = vpack.c.b16 %v176, %v172
  %v229 = vpack.c.b16 %v181, %v177
  %v230 = vpack.c.b16 %v182, %v178
  %v231 = vpack.c.b16 %v183, %v179
  %v232 = vpack.c.b16 %v184, %v180
  %v233 = vpack.c.b16 %v189, %v185
  %v234 = vpack.c.b16 %v190, %v186
  %v235 = vpack.c.b16 %v191, %v187
  %v236 = vpack.c.b16 %v192, %v188
  %v237 = vpack.c.b16 %v197, %v193
  %v238 = vpack.c.b16 %v198, %v194
  %v239 = vpack.c.b16 %v199, %v195
  %v240 = vpack.c.b16 %v200, %v196
  %v241 = vpack.c.b16 %v205, %v201
  %v242 = vpack.c.b16 %v206, %v202
  %v243 = vpack.c.b16 %v207, %v203
  %v244 = vpack.c.b16 %v208, %v204
  %v245 = vpack.c.b16 %v213, %v209
  %v246 = vpack.c.b16 %v214, %v210
  %v247 = vpack.c.b16 %v215, %v211
  %v248 = vpack.c.b16 %v216, %v212
  %281 = vmatprep.subr.bf16.mxu0 %v218
  %282 = vmatpush1.bf16.msra.mxu0 %v217
  %283 = vmatprep.subr.bf16.mxu0 %v222
  %284 = vmatpush1.bf16.msra.mxu0 %v221
  %285 = vmatprep.subr.bf16.mxu0 %v226
  %286 = vmatpush1.bf16.msra.mxu0 %v225
  %287 = vmatprep.subr.bf16.mxu0 %v230
  %288 = vmatpush1.bf16.msra.mxu0 %v229
  %289 = vmatprep.subr.bf16.mxu0 %v234
  %290 = vmatpush1.bf16.msra.mxu0 %v233
  %291 = vmatprep.subr.bf16.mxu0 %v238
  %292 = vmatpush1.bf16.msra.mxu0 %v237
  %293 = vmatprep.subr.bf16.mxu0 %v242
  %294 = vmatpush1.bf16.msra.mxu0 %v241
  %295 = vmatprep.subr.bf16.mxu0 %v246
  %296 = vmatpush1.bf16.msra.mxu0 %v245
  %297 = vmatprep.subr.bf16.mxu0 0
  %298 = vmatpush1.bf16.msra.mxu0 0
  %299 = vmatprep.subr.bf16.mxu0 0
  %300 = vmatpush1.bf16.msra.mxu0 0
  %301 = vmatprep.subr.bf16.mxu0 0
  %302 = vmatpush1.bf16.msra.mxu0 0
  %303 = vmatprep.subr.bf16.mxu0 0
  %304 = vmatpush1.bf16.msra.mxu0 0
  %305 = vmatprep.subr.bf16.mxu0 0
  %306 = vmatpush1.bf16.msra.mxu0 0
  %307 = vmatprep.subr.bf16.mxu0 0
  %308 = vmatpush1.bf16.msra.mxu0 0
  %309 = vmatprep.subr.bf16.mxu0 0
  %310 = vmatpush1.bf16.msra.mxu0 0
  %311 = vmatprep.subr.bf16.mxu0 0
  %312 = vmatpush1.bf16.msra.mxu0 0
  %313 = vmatprep.mubr.bf16.mxu0 0
  %314 = vmatmul.mubr.bf16.gmra.mrb[0].mxu0 %v113
  %v315 = vpop.f32.mrb[0].mxu0
  %v316 = vadd.f32 %v80, %v315
  %v317 = vpop.f32.mrb[0].mxu0
  %v318 = vadd.f32 %v84, %v317
  %v319 = vpop.f32.mrb[0].mxu0
  %v320 = vadd.f32 %v80, %v319
  %v321 = vpop.f32.mrb[0].mxu0
  %v322 = vadd.f32 %v84, %v321
  %323 = vmatprep.mubr.bf16.mxu0 0
  %324 = vmatmul.mubr.bf16.gmra.mrb[0].mxu0 %v114
  %v325 = vpop.f32.mrb[0].mxu0
  %v326 = vadd.f32 %v80, %v325
  %v327 = vpop.f32.mrb[0].mxu0
  %v328 = vadd.f32 %v84, %v327
  %v329 = vpop.f32.mrb[0].mxu0
  %v330 = vadd.f32 %v80, %v329
  %v331 = vpop.f32.mrb[0].mxu0
  %v332 = vadd.f32 %v84, %v331
  %333 = vmatprep.mubr.bf16.mxu0 0
  %334 = vmatmul.mubr.bf16.gmra.mrb[0].mxu0 %v115
  %v335 = vpop.f32.mrb[0].mxu0
  %v336 = vadd.f32 %v80, %v335
  %v337 = vpop.f32.mrb[0].mxu0
  %v338 = vadd.f32 %v84, %v337
  %v339 = vpop.f32.mrb[0].mxu0
  %v340 = vadd.f32 %v80, %v339
  %v341 = vpop.f32.mrb[0].mxu0
  %v342 = vadd.f32 %v84, %v341
  %343 = vmatprep.mubr.bf16.mxu0 0
  %344 = vmatmul.mubr.bf16.gmra.mrb[0].mxu0 %v116
  %v345 = vpop.f32.mrb[0].mxu0
  %v346 = vadd.f32 %v80, %v345
  %v347 = vpop.f32.mrb[0].mxu0
  %v348 = vadd.f32 %v84, %v347
  %v349 = vpop.f32.mrb[0].mxu0
  %v350 = vadd.f32 %v80, %v349
  %v351 = vpop.f32.mrb[0].mxu0
  %v352 = vadd.f32 %v84, %v351
  %353 = vdwg.mxu0
  %354 = vmatprep.subr.bf16.mxu0 %v220
  %355 = vmatpush1.bf16.msra.mxu0 %v219
  %356 = vmatprep.subr.bf16.mxu0 %v224
  %357 = vmatpush1.bf16.msra.mxu0 %v223
  %358 = vmatprep.subr.bf16.mxu0 %v228
  %359 = vmatpush1.bf16.msra.mxu0 %v227
  %360 = vmatprep.subr.bf16.mxu0 %v232
  %361 = vmatpush1.bf16.msra.mxu0 %v231
  %362 = vmatprep.subr.bf16.mxu0 %v236
  %363 = vmatpush1.bf16.msra.mxu0 %v235
  %364 = vmatprep.subr.bf16.mxu0 %v240
  %365 = vmatpush1.bf16.msra.mxu0 %v239
  %366 = vmatprep.subr.bf16.mxu0 %v244
  %367 = vmatpush1.bf16.msra.mxu0 %v243
  %368 = vmatprep.subr.bf16.mxu0 %v248
  %369 = vmatpush1.bf16.msra.mxu0 %v247
  %370 = vmatprep.subr.bf16.mxu0 0
  %371 = vmatpush1.bf16.msra.mxu0 0
  %372 = vmatprep.subr.bf16.mxu0 0
  %373 = vmatpush1.bf16.msra.mxu0 0
  %374 = vmatprep.subr.bf16.mxu0 0
  %375 = vmatpush1.bf16.msra.mxu0 0
  %376 = vmatprep.subr.bf16.mxu0 0
  %377 = vmatpush1.bf16.msra.mxu0 0
  %378 = vmatprep.subr.bf16.mxu0 0
  %379 = vmatpush1.bf16.msra.mxu0 0
  %380 = vmatprep.subr.bf16.mxu0 0
  %381 = vmatpush1.bf16.msra.mxu0 0
  %382 = vmatprep.subr.bf16.mxu0 0
  %383 = vmatpush1.bf16.msra.mxu0 0
  %384 = vmatprep.subr.bf16.mxu0 0
  %385 = vmatpush1.bf16.msra.mxu0 0
  %386 = vmatprep.mubr.bf16.mxu0 0
  %387 = vmatmul.mubr.bf16.gmra.mrb[0].mxu0 %v113
  %v388 = vpop.f32.mrb[0].mxu0
  %v389 = vadd.f32 %v88, %v388
  %v390 = vpop.f32.mrb[0].mxu0
  %v391 = vadd.f32 %v92, %v390
  %v392 = vpop.f32.mrb[0].mxu0
  %v393 = vadd.f32 %v88, %v392
  %v394 = vpop.f32.mrb[0].mxu0
  %v395 = vadd.f32 %v92, %v394
  %396 = vmatprep.mubr.bf16.mxu0 0
  %397 = vmatmul.mubr.bf16.gmra.mrb[0].mxu0 %v114
  %v398 = vpop.f32.mrb[0].mxu0
  %v399 = vadd.f32 %v88, %v398
  %v400 = vpop.f32.mrb[0].mxu0
  %v401 = vadd.f32 %v92, %v400
  %v402 = vpop.f32.mrb[0].mxu0
  %v403 = vadd.f32 %v88, %v402
  %v404 = vpop.f32.mrb[0].mxu0
  %v405 = vadd.f32 %v92, %v404
  %406 = vmatprep.mubr.bf16.mxu0 0
  %407 = vmatmul.mubr.bf16.gmra.mrb[0].mxu0 %v115
  %v408 = vpop.f32.mrb[0].mxu0
  %v409 = vadd.f32 %v88, %v408
  %v410 = vpop.f32.mrb[0].mxu0
  %v411 = vadd.f32 %v92, %v410
  %v412 = vpop.f32.mrb[0].mxu0
  %v413 = vadd.f32 %v88, %v412
  %v414 = vpop.f32.mrb[0].mxu0
  %v415 = vadd.f32 %v92, %v414
  %416 = vmatprep.mubr.bf16.mxu0 0
  %417 = vmatmul.mubr.bf16.gmra.mrb[0].mxu0 %v116
  %v418 = vpop.f32.mrb[0].mxu0
  %v419 = vadd.f32 %v88, %v418
  %v420 = vpop.f32.mrb[0].mxu0
  %v421 = vadd.f32 %v92, %v420
  %v422 = vpop.f32.mrb[0].mxu0
  %v423 = vadd.f32 %v88, %v422
  %v424 = vpop.f32.mrb[0].mxu0
  %v425 = vadd.f32 %v92, %v424
  %426 = vdwg.mxu0
  %427 = vst [vmem:[#allocation4] sm:$0xff] %v316
  %428 = vst [vmem:[#allocation4 + $0x8] sm:$0xff] %v318
  %429 = vst [vmem:[#allocation4 + $0x10] sm:$0xff] %v389
  %430 = vst [vmem:[#allocation4 + $0x18] sm:$0xff] %v391
  %431 = vst [vmem:[#allocation4 + $0x20] sm:$0xff] %v320
  %432 = vst [vmem:[#allocation4 + $0x28] sm:$0xff] %v322
  %433 = vst [vmem:[#allocation4 + $0x30] sm:$0xff] %v393
  %434 = vst [vmem:[#allocation4 + $0x38] sm:$0xff] %v395
  %435 = vst [vmem:[#allocation4 + $0x40] sm:$0xff] %v326
  %436 = vst [vmem:[#allocation4 + $0x48] sm:$0xff] %v328
  %437 = vst [vmem:[#allocation4 + $0x50] sm:$0xff] %v399
  %438 = vst [vmem:[#allocation4 + $0x58] sm:$0xff] %v401
  %439 = vst [vmem:[#allocation4 + $0x60] sm:$0xff] %v330
  %440 = vst [vmem:[#allocation4 + $0x68] sm:$0xff] %v332
  %441 = vst [vmem:[#allocation4 + $0x70] sm:$0xff] %v403
  %442 = vst [vmem:[#allocation4 + $0x78] sm:$0xff] %v405
  %443 = vst [vmem:[#allocation4 + $0x80] sm:$0xff] %v336
  %444 = vst [vmem:[#allocation4 + $0x88] sm:$0xff] %v338
  %445 = vst [vmem:[#allocation4 + $0x90] sm:$0xff] %v409
  %446 = vst [vmem:[#allocation4 + $0x98] sm:$0xff] %v411
  %447 = vst [vmem:[#allocation4 + $0xa0] sm:$0xff] %v340
  %448 = vst [vmem:[#allocation4 + $0xa8] sm:$0xff] %v342
  %449 = vst [vmem:[#allocation4 + $0xb0] sm:$0xff] %v413
  %450 = vst [vmem:[#allocation4 + $0xb8] sm:$0xff] %v415
  %451 = vst [vmem:[#allocation4 + $0xc0] sm:$0xff] %v346
  %452 = vst [vmem:[#allocation4 + $0xc8] sm:$0xff] %v348
  %453 = vst [vmem:[#allocation4 + $0xd0] sm:$0xff] %v419
  %454 = vst [vmem:[#allocation4 + $0xd8] sm:$0xff] %v421
  %455 = vst [vmem:[#allocation4 + $0xe0] sm:$0xff] %v350
  %456 = vst [vmem:[#allocation4 + $0xe8] sm:$0xff] %v352
  %457 = vst [vmem:[#allocation4 + $0xf0] sm:$0xff] %v423
  %458 = vst [vmem:[#allocation4 + $0xf8] sm:$0xff] %v425
  %v459 = vld [vmem:[%s4] sm:$0xff]
  %v460 = vld [vmem:[%s4 + $0x8] sm:$0xff]
  %v461 = vld [vmem:[%s4 + $0x10] sm:$0xff]
  %v462 = vld [vmem:[%s4 + $0x18] sm:$0xff]
  %v463 = vld [vmem:[%s4 + $0x20] sm:$0xff]
  %v464 = vld [vmem:[%s4 + $0x28] sm:$0xff]
  %v465 = vld [vmem:[%s4 + $0x30] sm:$0xff]
  %v466 = vld [vmem:[%s4 + $0x38] sm:$0xff]
  %v467 = vld [vmem:[%s4 + $0x40] sm:$0xff]
  %v468 = vld [vmem:[%s4 + $0x48] sm:$0xff]
  %v469 = vld [vmem:[%s4 + $0x50] sm:$0xff]
  %v470 = vld [vmem:[%s4 + $0x58] sm:$0xff]
  %v471 = vld [vmem:[%s4 + $0x60] sm:$0xff]
  %v472 = vld [vmem:[%s4 + $0x68] sm:$0xff]
  %v473 = vld [vmem:[%s4 + $0x70] sm:$0xff]
  %v474 = vld [vmem:[%s4 + $0x78] sm:$0xff]
  %v475 = vld [vmem:[%s4 + $0x80] sm:$0xff]
  %v476 = vld [vmem:[%s4 + $0x88] sm:$0xff]
  %v477 = vld [vmem:[%s4 + $0x90] sm:$0xff]
  %v478 = vld [vmem:[%s4 + $0x98] sm:$0xff]
  %v479 = vld [vmem:[%s4 + $0xa0] sm:$0xff]
  %v480 = vld [vmem:[%s4 + $0xa8] sm:$0xff]
  %v481 = vld [vmem:[%s4 + $0xb0] sm:$0xff]
  %v482 = vld [vmem:[%s4 + $0xb8] sm:$0xff]
  %v483 = vld [vmem:[%s4 + $0xc0] sm:$0xff]
  %v484 = vld [vmem:[%s4 + $0xc8] sm:$0xff]
  %v485 = vld [vmem:[%s4 + $0xd0] sm:$0xff]
  %v486 = vld [vmem:[%s4 + $0xd8] sm:$0xff]
  %v487 = vld [vmem:[%s4 + $0xe0] sm:$0xff]
  %v488 = vld [vmem:[%s4 + $0xe8] sm:$0xff]
  %v489 = vld [vmem:[%s4 + $0xf0] sm:$0xff]
  %v490 = vld [vmem:[%s4 + $0xf8] sm:$0xff]
  %v491 = vld [vmem:[#allocation2] sm:$0xff]
  %v492 = vld [vmem:[#allocation3] sm:$0xff]
  %v493 = vld [vmem:[#allocation4] sm:$0xff]
  %v494 = vld [vmem:[#allocation4 + $0x8] sm:$0xff]
  %v495 = vld [vmem:[#allocation4 + $0x10] sm:$0xff]
  %v496 = vld [vmem:[#allocation4 + $0x18] sm:$0xff]
  %v497 = vpack.c.bf16 %v491, %v491
  %v530 = vunpack.c.l.b16 %v459
  %v531 = vunpack.c.h.b16 %v459
  %v532 = vunpack.c.l.b16 %v460
  %v533 = vunpack.c.h.b16 %v460
  %v534 = vunpack.c.l.b16 %v461
  %v535 = vunpack.c.h.b16 %v461
  %v536 = vunpack.c.l.b16 %v462
  %v537 = vunpack.c.h.b16 %v462
  %v538 = vunpack.c.l.b16 %v463
  %v539 = vunpack.c.h.b16 %v463
  %v540 = vunpack.c.l.b16 %v464
  %v541 = vunpack.c.h.b16 %v464
  %v542 = vunpack.c.l.b16 %v465
  %v543 = vunpack.c.h.b16 %v465
  %v544 = vunpack.c.l.b16 %v466
  %v545 = vunpack.c.h.b16 %v466
  %v546 = vunpack.c.l.b16 %v467
  %v547 = vunpack.c.h.b16 %v467
  %v548 = vunpack.c.l.b16 %v468
  %v549 = vunpack.c.h.b16 %v468
  %v550 = vunpack.c.l.b16 %v469
  %v551 = vunpack.c.h.b16 %v469
  %v552 = vunpack.c.l.b16 %v470
  %v553 = vunpack.c.h.b16 %v470
  %v554 = vunpack.c.l.b16 %v471
  %v555 = vunpack.c.h.b16 %v471
  %v556 = vunpack.c.l.b16 %v472
  %v557 = vunpack.c.h.b16 %v472
  %v558 = vunpack.c.l.b16 %v473
  %v559 = vunpack.c.h.b16 %v473
  %v560 = vunpack.c.l.b16 %v474
  %v561 = vunpack.c.h.b16 %v474
  %v562 = vunpack.c.l.b16 %v475
  %v563 = vunpack.c.h.b16 %v475
  %v564 = vunpack.c.l.b16 %v476
  %v565 = vunpack.c.h.b16 %v476
  %v566 = vunpack.c.l.b16 %v477
  %v567 = vunpack.c.h.b16 %v477
  %v568 = vunpack.c.l.b16 %v478
  %v569 = vunpack.c.h.b16 %v478
  %v570 = vunpack.c.l.b16 %v479
  %v571 = vunpack.c.h.b16 %v479
  %v572 = vunpack.c.l.b16 %v480
  %v573 = vunpack.c.h.b16 %v480
  %v574 = vunpack.c.l.b16 %v481
  %v575 = vunpack.c.h.b16 %v481
  %v576 = vunpack.c.l.b16 %v482
  %v577 = vunpack.c.h.b16 %v482
  %v578 = vunpack.c.l.b16 %v483
  %v579 = vunpack.c.h.b16 %v483
  %v580 = vunpack.c.l.b16 %v484
  %v581 = vunpack.c.h.b16 %v484
  %v582 = vunpack.c.l.b16 %v485
  %v583 = vunpack.c.h.b16 %v485
  %v584 = vunpack.c.l.b16 %v486
  %v585 = vunpack.c.h.b16 %v486
  %v586 = vunpack.c.l.b16 %v487
  %v587 = vunpack.c.h.b16 %v487
  %v588 = vunpack.c.l.b16 %v488
  %v589 = vunpack.c.h.b16 %v488
  %v590 = vunpack.c.l.b16 %v489
  %v591 = vunpack.c.h.b16 %v489
  %v592 = vunpack.c.l.b16 %v490
  %v593 = vunpack.c.h.b16 %v490
  %v594 = vpack.c.b16 %v534, %v530
  %v595 = vpack.c.b16 %v535, %v531
  %v596 = vpack.c.b16 %v536, %v532
  %v597 = vpack.c.b16 %v537, %v533
  %v598 = vpack.c.b16 %v542, %v538
  %v599 = vpack.c.b16 %v543, %v539
  %v600 = vpack.c.b16 %v544, %v540
  %v601 = vpack.c.b16 %v545, %v541
  %v602 = vpack.c.b16 %v550, %v546
  %v603 = vpack.c.b16 %v551, %v547
  %v604 = vpack.c.b16 %v552, %v548
  %v605 = vpack.c.b16 %v553, %v549
  %v606 = vpack.c.b16 %v558, %v554
  %v607 = vpack.c.b16 %v559, %v555
  %v608 = vpack.c.b16 %v560, %v556
  %v609 = vpack.c.b16 %v561, %v557
  %v610 = vpack.c.b16 %v566, %v562
  %v611 = vpack.c.b16 %v567, %v563
  %v612 = vpack.c.b16 %v568, %v564
  %v613 = vpack.c.b16 %v569, %v565
  %v614 = vpack.c.b16 %v574, %v570
  %v615 = vpack.c.b16 %v575, %v571
  %v616 = vpack.c.b16 %v576, %v572
  %v617 = vpack.c.b16 %v577, %v573
  %v618 = vpack.c.b16 %v582, %v578
  %v619 = vpack.c.b16 %v583, %v579
  %v620 = vpack.c.b16 %v584, %v580
  %v621 = vpack.c.b16 %v585, %v581
  %v622 = vpack.c.b16 %v590, %v586
  %v623 = vpack.c.b16 %v591, %v587
  %v624 = vpack.c.b16 %v592, %v588
  %v625 = vpack.c.b16 %v593, %v589
  %658 = vmatprep.subr.bf16.mxu0 %v595
  %659 = vmatpush1.bf16.msra.mxu0 %v594
  %660 = vmatprep.subr.bf16.mxu0 %v599
  %661 = vmatpush1.bf16.msra.mxu0 %v598
  %662 = vmatprep.subr.bf16.mxu0 %v603
  %663 = vmatpush1.bf16.msra.mxu0 %v602
  %664 = vmatprep.subr.bf16.mxu0 %v607
  %665 = vmatpush1.bf16.msra.mxu0 %v606
  %666 = vmatprep.subr.bf16.mxu0 %v611
  %667 = vmatpush1.bf16.msra.mxu0 %v610
  %668 = vmatprep.subr.bf16.mxu0 %v615
  %669 = vmatpush1.bf16.msra.mxu0 %v614
  %670 = vmatprep.subr.bf16.mxu0 %v619
  %671 = vmatpush1.bf16.msra.mxu0 %v618
  %672 = vmatprep.subr.bf16.mxu0 %v623
  %673 = vmatpush1.bf16.msra.mxu0 %v622
  %674 = vmatprep.subr.bf16.mxu0 0
  %675 = vmatpush1.bf16.msra.mxu0 0
  %676 = vmatprep.subr.bf16.mxu0 0
  %677 = vmatpush1.bf16.msra.mxu0 0
  %678 = vmatprep.subr.bf16.mxu0 0
  %679 = vmatpush1.bf16.msra.mxu0 0
  %680 = vmatprep.subr.bf16.mxu0 0
  %681 = vmatpush1.bf16.msra.mxu0 0
  %682 = vmatprep.subr.bf16.mxu0 0
  %683 = vmatpush1.bf16.msra.mxu0 0
  %684 = vmatprep.subr.bf16.mxu0 0
  %685 = vmatpush1.bf16.msra.mxu0 0
  %686 = vmatprep.subr.bf16.mxu0 0
  %687 = vmatpush1.bf16.msra.mxu0 0
  %688 = vmatprep.subr.bf16.mxu0 0
  %689 = vmatpush1.bf16.msra.mxu0 0
  %690 = vmatprep.mubr.bf16.mxu0 0
  %691 = vmatmul.mubr.bf16.gmra.mrb[0].mxu0 %v497
  %v692 = vpop.f32.mrb[0].mxu0
  %v693 = vadd.f32 0.0, %v692
  %v694 = vpop.f32.mrb[0].mxu0
  %v695 = vadd.f32 0.0, %v694
  %v696 = vpop.f32.mrb[0].mxu0
  %v697 = vpop.f32.mrb[0].mxu0
  %698 = vdwg.mxu0
  %699 = vmatprep.subr.bf16.mxu0 %v597
  %700 = vmatpush1.bf16.msra.mxu0 %v596
  %701 = vmatprep.subr.bf16.mxu0 %v601
  %702 = vmatpush1.bf16.msra.mxu0 %v600
  %703 = vmatprep.subr.bf16.mxu0 %v605
  %704 = vmatpush1.bf16.msra.mxu0 %v604
  %705 = vmatprep.subr.bf16.mxu0 %v609
  %706 = vmatpush1.bf16.msra.mxu0 %v608
  %707 = vmatprep.subr.bf16.mxu0 %v613
  %708 = vmatpush1.bf16.msra.mxu0 %v612
  %709 = vmatprep.subr.bf16.mxu0 %v617
  %710 = vmatpush1.bf16.msra.mxu0 %v616
  %711 = vmatprep.subr.bf16.mxu0 %v621
  %712 = vmatpush1.bf16.msra.mxu0 %v620
  %713 = vmatprep.subr.bf16.mxu0 %v625
  %714 = vmatpush1.bf16.msra.mxu0 %v624
  %715 = vmatprep.subr.bf16.mxu0 0
  %716 = vmatpush1.bf16.msra.mxu0 0
  %717 = vmatprep.subr.bf16.mxu0 0
  %718 = vmatpush1.bf16.msra.mxu0 0
  %719 = vmatprep.subr.bf16.mxu0 0
  %720 = vmatpush1.bf16.msra.mxu0 0
  %721 = vmatprep.subr.bf16.mxu0 0
  %722 = vmatpush1.bf16.msra.mxu0 0
  %723 = vmatprep.subr.bf16.mxu0 0
  %724 = vmatpush1.bf16.msra.mxu0 0
  %725 = vmatprep.subr.bf16.mxu0 0
  %726 = vmatpush1.bf16.msra.mxu0 0
  %727 = vmatprep.subr.bf16.mxu0 0
  %728 = vmatpush1.bf16.msra.mxu0 0
  %729 = vmatprep.subr.bf16.mxu0 0
  %730 = vmatpush1.bf16.msra.mxu0 0
  %731 = vmatprep.mubr.bf16.mxu0 0
  %732 = vmatmul.mubr.bf16.gmra.mrb[0].mxu0 %v497
  %v733 = vpop.f32.mrb[0].mxu0
  %v734 = vadd.f32 0.0, %v733
  %v735 = vpop.f32.mrb[0].mxu0
  %v736 = vadd.f32 0.0, %v735
  %v737 = vpop.f32.mrb[0].mxu0
  %v738 = vpop.f32.mrb[0].mxu0
  %739 = vdwg.mxu0
  %v740 = vadd.f32 %v493, %v693
  %v741 = vadd.f32 %v494, %v695
  %v742 = vadd.f32 %v495, %v734
  %v743 = vadd.f32 %v496, %v736
  %v744 = vlaneseq
  %v745 = vshrl.u32 %v744, 7
  %v746 = vsub.s32 0, %v745
  %v747 = vlaneseq
  %v748 = vshrl.u32 %v747, 7
  %v749 = vsub.s32 0, %v748
  %v750 = vmul.f32 %v740, 0.5
  %v751 = vmul.f32 %v741, 0.5
  %v752 = vmul.f32 %v742, 1.0
  %v753 = vmul.f32 %v743, 0.5
  %v754 = vtanh.pop %v750
  %v755 = vtanh.pop %v751
  %v756 = vtanh.pop %v752
  %v757 = vtanh.pop %v753
  %v758 = vmul.f32 %v754, 0.5
  %v759 = vmul.f32 %v755, 0.5
  %v760 = vmul.f32 %v756, 1.0
  %v761 = vmul.f32 %v757, 0.5
  %v762 = vlaneseq
  %v763 = vshrl.u32 %v762, 7
  %v764 = vsub.s32 0, %v763
  %v765 = vadd.f32 %v758, 0.5
  %v766 = vadd.f32 %v759, 0.5
  %v767 = vadd.f32 %v760, 0.0
  %v768 = vadd.f32 %v761, 0.5
  %v769 = vmul.f32 %v766, %v492
  %v770 = vmul.f32 %v765, %v767
  %v771 = vadd.f32 %v769, %v770
  %v772 = vtanh.pop %v771
  %v773 = vmul.f32 %v768, %v772
  %v774 = vpack.c.bf16 %v773, %v773
  %775 = vst [vmem:[%s6] sm:$0xf] %v774
  %s776 = scalar_lea.vmem [#allocation4], 32
  %v777 = vld [vmem:[%s776] sm:$0xff]
  %v778 = vld [vmem:[%s776 + $0x8] sm:$0xff]
  %v779 = vld [vmem:[%s776 + $0x10] sm:$0xff]
  %v780 = vld [vmem:[%s776 + $0x18] sm:$0xff]
  %781 = vmatprep.subr.bf16.mxu0 %v595
  %782 = vmatpush1.bf16.msra.mxu0 %v594
  %783 = vmatprep.subr.bf16.mxu0 %v599
  %784 = vmatpush1.bf16.msra.mxu0 %v598
  %785 = vmatprep.subr.bf16.mxu0 %v603
  %786 = vmatpush1.bf16.msra.mxu0 %v602
  %787 = vmatprep.subr.bf16.mxu0 %v607
  %788 = vmatpush1.bf16.msra.mxu0 %v606
  %789 = vmatprep.subr.bf16.mxu0 %v611
  %790 = vmatpush1.bf16.msra.mxu0 %v610
  %791 = vmatprep.subr.bf16.mxu0 %v615
  %792 = vmatpush1.bf16.msra.mxu0 %v614
  %793 = vmatprep.subr.bf16.mxu0 %v619
  %794 = vmatpush1.bf16.msra.mxu0 %v618
  %795 = vmatprep.subr.bf16.mxu0 %v623
  %796 = vmatpush1.bf16.msra.mxu0 %v622
  %797 = vmatprep.subr.bf16.mxu0 0
  %798 = vmatpush1.bf16.msra.mxu0 0
  %799 = vmatprep.subr.bf16.mxu0 0
  %800 = vmatpush1.bf16.msra.mxu0 0
  %801 = vmatprep.subr.bf16.mxu0 0
  %802 = vmatpush1.bf16.msra.mxu0 0
  %803 = vmatprep.subr.bf16.mxu0 0
  %804 = vmatpush1.bf16.msra.mxu0 0
  %805 = vmatprep.subr.bf16.mxu0 0
  %806 = vmatpush1.bf16.msra.mxu0 0
  %807 = vmatprep.subr.bf16.mxu0 0
  %808 = vmatpush1.bf16.msra.mxu0 0
  %809 = vmatprep.subr.bf16.mxu0 0
  %810 = vmatpush1.bf16.msra.mxu0 0
  %811 = vmatprep.subr.bf16.mxu0 0
  %812 = vmatpush1.bf16.msra.mxu0 0
  %813 = vmatprep.mubr.bf16.mxu0 0
  %814 = vmatmul.mubr.bf16.gmra.mrb[0].mxu0 %v774
  %v815 = vpop.f32.mrb[0].mxu0
  %v816 = vadd.f32 0.0, %v815
  %v817 = vpop.f32.mrb[0].mxu0
  %v818 = vadd.f32 0.0, %v817
  %v819 = vpop.f32.mrb[0].mxu0
  %v820 = vpop.f32.mrb[0].mxu0
  %821 = vdwg.mxu0
  %822 = vmatprep.subr.bf16.mxu0 %v597
  %823 = vmatpush1.bf16.msra.mxu0 %v596
  %824 = vmatprep.subr.bf16.mxu0 %v601
  %825 = vmatpush1.bf16.msra.mxu0 %v600
  %826 = vmatprep.subr.bf16.mxu0 %v605
  %827 = vmatpush1.bf16.msra.mxu0 %v604
  %828 = vmatprep.subr.bf16.mxu0 %v609
  %829 = vmatpush1.bf16.msra.mxu0 %v608
  %830 = vmatprep.subr.bf16.mxu0 %v613
  %831 = vmatpush1.bf16.msra.mxu0 %v612
  %832 = vmatprep.subr.bf16.mxu0 %v617
  %833 = vmatpush1.bf16.msra.mxu0 %v616
  %834 = vmatprep.subr.bf16.mxu0 %v621
  %835 = vmatpush1.bf16.msra.mxu0 %v620
  %836 = vmatprep.subr.bf16.mxu0 %v625
  %837 = vmatpush1.bf16.msra.mxu0 %v624
  %838 = vmatprep.subr.bf16.mxu0 0
  %839 = vmatpush1.bf16.msra.mxu0 0
  %840 = vmatprep.subr.bf16.mxu0 0
  %841 = vmatpush1.bf16.msra.mxu0 0
  %842 = vmatprep.subr.bf16.mxu0 0
  %843 = vmatpush1.bf16.msra.mxu0 0
  %844 = vmatprep.subr.bf16.mxu0 0
  %845 = vmatpush1.bf16.msra.mxu0 0
  %846 = vmatprep.subr.bf16.mxu0 0
  %847 = vmatpush1.bf16.msra.mxu0 0
  %848 = vmatprep.subr.bf16.mxu0 0
  %849 = vmatpush1.bf16.msra.mxu0 0
  %850 = vmatprep.subr.bf16.mxu0 0
  %851 = vmatpush1.bf16.msra.mxu0 0
  %852 = vmatprep.subr.bf16.mxu0 0
  %853 = vmatpush1.bf16.msra.mxu0 0
  %854 = vmatprep.mubr.bf16.mxu0 0
  %855 = vmatmul.mubr.bf16.gmra.mrb[0].mxu0 %v774
  %v856 = vpop.f32.mrb[0].mxu0
  %v857 = vadd.f32 0.0, %v856
  %v858 = vpop.f32.mrb[0].mxu0
  %v859 = vadd.f32 0.0, %v858
  %v860 = vpop.f32.mrb[0].mxu0
  %v861 = vpop.f32.mrb[0].mxu0
  %862 = vdwg.mxu0
  %v863 = vadd.f32 %v777, %v816
  %v864 = vadd.f32 %v778, %v818
  %v865 = vadd.f32 %v779, %v857
  %v866 = vadd.f32 %v780, %v859
  %v867 = vmul.f32 %v863, 0.5
  %v868 = vmul.f32 %v864, 0.5
  %v869 = vmul.f32 %v865, 1.0
  %v870 = vmul.f32 %v866, 0.5
  %v871 = vtanh.pop %v867
  %v872 = vtanh.pop %v868
  %v873 = vtanh.pop %v869
  %v874 = vtanh.pop %v870
  %v875 = vmul.f32 %v871, 0.5
  %v876 = vmul.f32 %v872, 0.5
  %v877 = vmul.f32 %v873, 1.0
  %v878 = vmul.f32 %v874, 0.5
  %v879 = vadd.f32 %v875, 0.5
  %v880 = vadd.f32 %v876, 0.5
  %v881 = vadd.f32 %v877, 0.0
  %v882 = vadd.f32 %v878, 0.5
  %v883 = vmul.f32 %v880, %v771
  %v884 = vmul.f32 %v879, %v881
  %v885 = vadd.f32 %v883, %v884
  %v886 = vtanh.pop %v885
  %v887 = vmul.f32 %v882, %v886
  %v888 = vpack.c.bf16 %v887, %v887
  %s889 = scalar_lea.vmem %s6, 4
  %890 = vst [vmem:[%s889] sm:$0xf] %v888
  %s891 = scalar_lea.vmem [#allocation4], 64
  %v892 = vld [vmem:[%s891] sm:$0xff]
  %v893 = vld [vmem:[%s891 + $0x8] sm:$0xff]
  %v894 = vld [vmem:[%s891 + $0x10] sm:$0xff]
  %v895 = vld [vmem:[%s891 + $0x18] sm:$0xff]
  %896 = vmatprep.subr.bf16.mxu0 %v595
  %897 = vmatpush1.bf16.msra.mxu0 %v594
  %898 = vmatprep.subr.bf16.mxu0 %v599
  %899 = vmatpush1.bf16.msra.mxu0 %v598
  %900 = vmatprep.subr.bf16.mxu0 %v603
  %901 = vmatpush1.bf16.msra.mxu0 %v602
  %902 = vmatprep.subr.bf16.mxu0 %v607
  %903 = vmatpush1.bf16.msra.mxu0 %v606
  %904 = vmatprep.subr.bf16.mxu0 %v611
  %905 = vmatpush1.bf16.msra.mxu0 %v610
  %906 = vmatprep.subr.bf16.mxu0 %v615
  %907 = vmatpush1.bf16.msra.mxu0 %v614
  %908 = vmatprep.subr.bf16.mxu0 %v619
  %909 = vmatpush1.bf16.msra.mxu0 %v618
  %910 = vmatprep.subr.bf16.mxu0 %v623
  %911 = vmatpush1.bf16.msra.mxu0 %v622
  %912 = vmatprep.subr.bf16.mxu0 0
  %913 = vmatpush1.bf16.msra.mxu0 0
  %914 = vmatprep.subr.bf16.mxu0 0
  %915 = vmatpush1.bf16.msra.mxu0 0
  %916 = vmatprep.subr.bf16.mxu0 0
  %917 = vmatpush1.bf16.msra.mxu0 0
  %918 = vmatprep.subr.bf16.mxu0 0
  %919 = vmatpush1.bf16.msra.mxu0 0
  %920 = vmatprep.subr.bf16.mxu0 0
  %921 = vmatpush1.bf16.msra.mxu0 0
  %922 = vmatprep.subr.bf16.mxu0 0
  %923 = vmatpush1.bf16.msra.mxu0 0
  %924 = vmatprep.subr.bf16.mxu0 0
  %925 = vmatpush1.bf16.msra.mxu0 0
  %926 = vmatprep.subr.bf16.mxu0 0
  %927 = vmatpush1.bf16.msra.mxu0 0
  %928 = vmatprep.mubr.bf16.mxu0 0
  %929 = vmatmul.mubr.bf16.gmra.mrb[0].mxu0 %v888
  %v930 = vpop.f32.mrb[0].mxu0
  %v931 = vadd.f32 0.0, %v930
  %v932 = vpop.f32.mrb[0].mxu0
  %v933 = vadd.f32 0.0, %v932
  %v934 = vpop.f32.mrb[0].mxu0
  %v935 = vpop.f32.mrb[0].mxu0
  %936 = vdwg.mxu0
  %937 = vmatprep.subr.bf16.mxu0 %v597
  %938 = vmatpush1.bf16.msra.mxu0 %v596
  %939 = vmatprep.subr.bf16.mxu0 %v601
  %940 = vmatpush1.bf16.msra.mxu0 %v600
  %941 = vmatprep.subr.bf16.mxu0 %v605
  %942 = vmatpush1.bf16.msra.mxu0 %v604
  %943 = vmatprep.subr.bf16.mxu0 %v609
  %944 = vmatpush1.bf16.msra.mxu0 %v608
  %945 = vmatprep.subr.bf16.mxu0 %v613
  %946 = vmatpush1.bf16.msra.mxu0 %v612
  %947 = vmatprep.subr.bf16.mxu0 %v617
  %948 = vmatpush1.bf16.msra.mxu0 %v616
  %949 = vmatprep.subr.bf16.mxu0 %v621
  %950 = vmatpush1.bf16.msra.mxu0 %v620
  %951 = vmatprep.subr.bf16.mxu0 %v625
  %952 = vmatpush1.bf16.msra.mxu0 %v624
  %953 = vmatprep.subr.bf16.mxu0 0
  %954 = vmatpush1.bf16.msra.mxu0 0
  %955 = vmatprep.subr.bf16.mxu0 0
  %956 = vmatpush1.bf16.msra.mxu0 0
  %957 = vmatprep.subr.bf16.mxu0 0
  %958 = vmatpush1.bf16.msra.mxu0 0
  %959 = vmatprep.subr.bf16.mxu0 0
  %960 = vmatpush1.bf16.msra.mxu0 0
  %961 = vmatprep.subr.bf16.mxu0 0
  %962 = vmatpush1.bf16.msra.mxu0 0
  %963 = vmatprep.subr.bf16.mxu0 0
  %964 = vmatpush1.bf16.msra.mxu0 0
  %965 = vmatprep.subr.bf16.mxu0 0
  %966 = vmatpush1.bf16.msra.mxu0 0
  %967 = vmatprep.subr.bf16.mxu0 0
  %968 = vmatpush1.bf16.msra.mxu0 0
  %969 = vmatprep.mubr.bf16.mxu0 0
  %970 = vmatmul.mubr.bf16.gmra.mrb[0].mxu0 %v888
  %v971 = vpop.f32.mrb[0].mxu0
  %v972 = vadd.f32 0.0, %v971
  %v973 = vpop.f32.mrb[0].mxu0
  %v974 = vadd.f32 0.0, %v973
  %v975 = vpop.f32.mrb[0].mxu0
  %v976 = vpop.f32.mrb[0].mxu0
  %977 = vdwg.mxu0
  %v978 = vadd.f32 %v892, %v931
  %v979 = vadd.f32 %v893, %v933
  %v980 = vadd.f32 %v894, %v972
  %v981 = vadd.f32 %v895, %v974
  %v982 = vmul.f32 %v978, 0.5
  %v983 = vmul.f32 %v979, 0.5
  %v984 = vmul.f32 %v980, 1.0
  %v985 = vmul.f32 %v981, 0.5
  %v986 = vtanh.pop %v982
  %v987 = vtanh.pop %v983
  %v988 = vtanh.pop %v984
  %v989 = vtanh.pop %v985
  %v990 = vmul.f32 %v986, 0.5
  %v991 = vmul.f32 %v987, 0.5
  %v992 = vmul.f32 %v988, 1.0
  %v993 = vmul.f32 %v989, 0.5
  %v994 = vadd.f32 %v990, 0.5
  %v995 = vadd.f32 %v991, 0.5
  %v996 = vadd.f32 %v992, 0.0
  %v997 = vadd.f32 %v993, 0.5
  %v998 = vmul.f32 %v995, %v885
  %v999 = vmul.f32 %v994, %v996
  %v1000 = vadd.f32 %v998, %v999
  %v1001 = vtanh.pop %v1000
  %v1002 = vmul.f32 %v997, %v1001
  %v1003 = vpack.c.bf16 %v1002, %v1002
  %s1004 = scalar_lea.vmem %s6, 8
  %1005 = vst [vmem:[%s1004] sm:$0xf] %v1003
  %s1006 = scalar_lea.vmem [#allocation4], 96
  %v1007 = vld [vmem:[%s1006] sm:$0xff]
  %v1008 = vld [vmem:[%s1006 + $0x8] sm:$0xff]
  %v1009 = vld [vmem:[%s1006 + $0x10] sm:$0xff]
  %v1010 = vld [vmem:[%s1006 + $0x18] sm:$0xff]
  %1011 = vmatprep.subr.bf16.mxu0 %v595
  %1012 = vmatpush1.bf16.msra.mxu0 %v594
  %1013 = vmatprep.subr.bf16.mxu0 %v599
  %1014 = vmatpush1.bf16.msra.mxu0 %v598
  %1015 = vmatprep.subr.bf16.mxu0 %v603
  %1016 = vmatpush1.bf16.msra.mxu0 %v602
  %1017 = vmatprep.subr.bf16.mxu0 %v607
  %1018 = vmatpush1.bf16.msra.mxu0 %v606
  %1019 = vmatprep.subr.bf16.mxu0 %v611
  %1020 = vmatpush1.bf16.msra.mxu0 %v610
  %1021 = vmatprep.subr.bf16.mxu0 %v615
  %1022 = vmatpush1.bf16.msra.mxu0 %v614
  %1023 = vmatprep.subr.bf16.mxu0 %v619
  %1024 = vmatpush1.bf16.msra.mxu0 %v618
  %1025 = vmatprep.subr.bf16.mxu0 %v623
  %1026 = vmatpush1.bf16.msra.mxu0 %v622
  %1027 = vmatprep.subr.bf16.mxu0 0
  %1028 = vmatpush1.bf16.msra.mxu0 0
  %1029 = vmatprep.subr.bf16.mxu0 0
  %1030 = vmatpush1.bf16.msra.mxu0 0
  %1031 = vmatprep.subr.bf16.mxu0 0
  %1032 = vmatpush1.bf16.msra.mxu0 0
  %1033 = vmatprep.subr.bf16.mxu0 0
  %1034 = vmatpush1.bf16.msra.mxu0 0
  %1035 = vmatprep.subr.bf16.mxu0 0
  %1036 = vmatpush1.bf16.msra.mxu0 0
  %1037 = vmatprep.subr.bf16.mxu0 0
  %1038 = vmatpush1.bf16.msra.mxu0 0
  %1039 = vmatprep.subr.bf16.mxu0 0
  %1040 = vmatpush1.bf16.msra.mxu0 0
  %1041 = vmatprep.subr.bf16.mxu0 0
  %1042 = vmatpush1.bf16.msra.mxu0 0
  %1043 = vmatprep.mubr.bf16.mxu0 0
  %1044 = vmatmul.mubr.bf16.gmra.mrb[0].mxu0 %v1003
  %v1045 = vpop.f32.mrb[0].mxu0
  %v1046 = vadd.f32 0.0, %v1045
  %v1047 = vpop.f32.mrb[0].mxu0
  %v1048 = vadd.f32 0.0, %v1047
  %v1049 = vpop.f32.mrb[0].mxu0
  %v1050 = vpop.f32.mrb[0].mxu0
  %1051 = vdwg.mxu0
  %1052 = vmatprep.subr.bf16.mxu0 %v597
  %1053 = vmatpush1.bf16.msra.mxu0 %v596
  %1054 = vmatprep.subr.bf16.mxu0 %v601
  %1055 = vmatpush1.bf16.msra.mxu0 %v600
  %1056 = vmatprep.subr.bf16.mxu0 %v605
  %1057 = vmatpush1.bf16.msra.mxu0 %v604
  %1058 = vmatprep.subr.bf16.mxu0 %v609
  %1059 = vmatpush1.bf16.msra.mxu0 %v608
  %1060 = vmatprep.subr.bf16.mxu0 %v613
  %1061 = vmatpush1.bf16.msra.mxu0 %v612
  %1062 = vmatprep.subr.bf16.mxu0 %v617
  %1063 = vmatpush1.bf16.msra.mxu0 %v616
  %1064 = vmatprep.subr.bf16.mxu0 %v621
  %1065 = vmatpush1.bf16.msra.mxu0 %v620
  %1066 = vmatprep.subr.bf16.mxu0 %v625
  %1067 = vmatpush1.bf16.msra.mxu0 %v624
  %1068 = vmatprep.subr.bf16.mxu0 0
  %1069 = vmatpush1.bf16.msra.mxu0 0
  %1070 = vmatprep.subr.bf16.mxu0 0
  %1071 = vmatpush1.bf16.msra.mxu0 0
  %1072 = vmatprep.subr.bf16.mxu0 0
  %1073 = vmatpush1.bf16.msra.mxu0 0
  %1074 = vmatprep.subr.bf16.mxu0 0
  %1075 = vmatpush1.bf16.msra.mxu0 0
  %1076 = vmatprep.subr.bf16.mxu0 0
  %1077 = vmatpush1.bf16.msra.mxu0 0
  %1078 = vmatprep.subr.bf16.mxu0 0
  %1079 = vmatpush1.bf16.msra.mxu0 0
  %1080 = vmatprep.subr.bf16.mxu0 0
  %1081 = vmatpush1.bf16.msra.mxu0 0
  %1082 = vmatprep.subr.bf16.mxu0 0
  %1083 = vmatpush1.bf16.msra.mxu0 0
  %1084 = vmatprep.mubr.bf16.mxu0 0
  %1085 = vmatmul.mubr.bf16.gmra.mrb[0].mxu0 %v1003
  %v1086 = vpop.f32.mrb[0].mxu0
  %v1087 = vadd.f32 0.0, %v1086
  %v1088 = vpop.f32.mrb[0].mxu0
  %v1089 = vadd.f32 0.0, %v1088
  %v1090 = vpop.f32.mrb[0].mxu0
  %v1091 = vpop.f32.mrb[0].mxu0
  %1092 = vdwg.mxu0
  %v1093 = vadd.f32 %v1007, %v1046
  %v1094 = vadd.f32 %v1008, %v1048
  %v1095 = vadd.f32 %v1009, %v1087
  %v1096 = vadd.f32 %v1010, %v1089
  %v1097 = vmul.f32 %v1093, 0.5
  %v1098 = vmul.f32 %v1094, 0.5
  %v1099 = vmul.f32 %v1095, 1.0
  %v1100 = vmul.f32 %v1096, 0.5
  %v1101 = vtanh.pop %v1097
  %v1102 = vtanh.pop %v1098
  %v1103 = vtanh.pop %v1099
  %v1104 = vtanh.pop %v1100
  %v1105 = vmul.f32 %v1101, 0.5
  %v1106 = vmul.f32 %v1102, 0.5
  %v1107 = vmul.f32 %v1103, 1.0
  %v1108 = vmul.f32 %v1104, 0.5
  %v1109 = vadd.f32 %v1105, 0.5
  %v1110 = vadd.f32 %v1106, 0.5
  %v1111 = vadd.f32 %v1107, 0.0
  %v1112 = vadd.f32 %v1108, 0.5
  %v1113 = vmul.f32 %v1110, %v1000
  %v1114 = vmul.f32 %v1109, %v1111
  %v1115 = vadd.f32 %v1113, %v1114
  %v1116 = vtanh.pop %v1115
  %v1117 = vmul.f32 %v1112, %v1116
  %v1118 = vpack.c.bf16 %v1117, %v1117
  %s1119 = scalar_lea.vmem %s6, 12
  %1120 = vst [vmem:[%s1119] sm:$0xf] %v1118
  %s1121 = scalar_lea.vmem [#allocation4], 128
  %v1122 = vld [vmem:[%s1121] sm:$0xff]
  %v1123 = vld [vmem:[%s1121 + $0x8] sm:$0xff]
  %v1124 = vld [vmem:[%s1121 + $0x10] sm:$0xff]
  %v1125 = vld [vmem:[%s1121 + $0x18] sm:$0xff]
  %1126 = vmatprep.subr.bf16.mxu0 %v595
  %1127 = vmatpush1.bf16.msra.mxu0 %v594
  %1128 = vmatprep.subr.bf16.mxu0 %v599
  %1129 = vmatpush1.bf16.msra.mxu0 %v598
  %1130 = vmatprep.subr.bf16.mxu0 %v603
  %1131 = vmatpush1.bf16.msra.mxu0 %v602
  %1132 = vmatprep.subr.bf16.mxu0 %v607
  %1133 = vmatpush1.bf16.msra.mxu0 %v606
  %1134 = vmatprep.subr.bf16.mxu0 %v611
  %1135 = vmatpush1.bf16.msra.mxu0 %v610
  %1136 = vmatprep.subr.bf16.mxu0 %v615
  %1137 = vmatpush1.bf16.msra.mxu0 %v614
  %1138 = vmatprep.subr.bf16.mxu0 %v619
  %1139 = vmatpush1.bf16.msra.mxu0 %v618
  %1140 = vmatprep.subr.bf16.mxu0 %v623
  %1141 = vmatpush1.bf16.msra.mxu0 %v622
  %1142 = vmatprep.subr.bf16.mxu0 0
  %1143 = vmatpush1.bf16.msra.mxu0 0
  %1144 = vmatprep.subr.bf16.mxu0 0
  %1145 = vmatpush1.bf16.msra.mxu0 0
  %1146 = vmatprep.subr.bf16.mxu0 0
  %1147 = vmatpush1.bf16.msra.mxu0 0
  %1148 = vmatprep.subr.bf16.mxu0 0
  %1149 = vmatpush1.bf16.msra.mxu0 0
  %1150 = vmatprep.subr.bf16.mxu0 0
  %1151 = vmatpush1.bf16.msra.mxu0 0
  %1152 = vmatprep.subr.bf16.mxu0 0
  %1153 = vmatpush1.bf16.msra.mxu0 0
  %1154 = vmatprep.subr.bf16.mxu0 0
  %1155 = vmatpush1.bf16.msra.mxu0 0
  %1156 = vmatprep.subr.bf16.mxu0 0
  %1157 = vmatpush1.bf16.msra.mxu0 0
  %1158 = vmatprep.mubr.bf16.mxu0 0
  %1159 = vmatmul.mubr.bf16.gmra.mrb[0].mxu0 %v1118
  %v1160 = vpop.f32.mrb[0].mxu0
  %v1161 = vadd.f32 0.0, %v1160
  %v1162 = vpop.f32.mrb[0].mxu0
  %v1163 = vadd.f32 0.0, %v1162
  %v1164 = vpop.f32.mrb[0].mxu0
  %v1165 = vpop.f32.mrb[0].mxu0
  %1166 = vdwg.mxu0
  %1167 = vmatprep.subr.bf16.mxu0 %v597
  %1168 = vmatpush1.bf16.msra.mxu0 %v596
  %1169 = vmatprep.subr.bf16.mxu0 %v601
  %1170 = vmatpush1.bf16.msra.mxu0 %v600
  %1171 = vmatprep.subr.bf16.mxu0 %v605
  %1172 = vmatpush1.bf16.msra.mxu0 %v604
  %1173 = vmatprep.subr.bf16.mxu0 %v609
  %1174 = vmatpush1.bf16.msra.mxu0 %v608
  %1175 = vmatprep.subr.bf16.mxu0 %v613
  %1176 = vmatpush1.bf16.msra.mxu0 %v612
  %1177 = vmatprep.subr.bf16.mxu0 %v617
  %1178 = vmatpush1.bf16.msra.mxu0 %v616
  %1179 = vmatprep.subr.bf16.mxu0 %v621
  %1180 = vmatpush1.bf16.msra.mxu0 %v620
  %1181 = vmatprep.subr.bf16.mxu0 %v625
  %1182 = vmatpush1.bf16.msra.mxu0 %v624
  %1183 = vmatprep.subr.bf16.mxu0 0
  %1184 = vmatpush1.bf16.msra.mxu0 0
  %1185 = vmatprep.subr.bf16.mxu0 0
  %1186 = vmatpush1.bf16.msra.mxu0 0
  %1187 = vmatprep.subr.bf16.mxu0 0
  %1188 = vmatpush1.bf16.msra.mxu0 0
  %1189 = vmatprep.subr.bf16.mxu0 0
  %1190 = vmatpush1.bf16.msra.mxu0 0
  %1191 = vmatprep.subr.bf16.mxu0 0
  %1192 = vmatpush1.bf16.msra.mxu0 0
  %1193 = vmatprep.subr.bf16.mxu0 0
  %1194 = vmatpush1.bf16.msra.mxu0 0
  %1195 = vmatprep.subr.bf16.mxu0 0
  %1196 = vmatpush1.bf16.msra.mxu0 0
  %1197 = vmatprep.subr.bf16.mxu0 0
  %1198 = vmatpush1.bf16.msra.mxu0 0
  %1199 = vmatprep.mubr.bf16.mxu0 0
  %1200 = vmatmul.mubr.bf16.gmra.mrb[0].mxu0 %v1118
  %v1201 = vpop.f32.mrb[0].mxu0
  %v1202 = vadd.f32 0.0, %v1201
  %v1203 = vpop.f32.mrb[0].mxu0
  %v1204 = vadd.f32 0.0, %v1203
  %v1205 = vpop.f32.mrb[0].mxu0
  %v1206 = vpop.f32.mrb[0].mxu0
  %1207 = vdwg.mxu0
  %v1208 = vadd.f32 %v1122, %v1161
  %v1209 = vadd.f32 %v1123, %v1163
  %v1210 = vadd.f32 %v1124, %v1202
  %v1211 = vadd.f32 %v1125, %v1204
  %v1212 = vmul.f32 %v1208, 0.5
  %v1213 = vmul.f32 %v1209, 0.5
  %v1214 = vmul.f32 %v1210, 1.0
  %v1215 = vmul.f32 %v1211, 0.5
  %v1216 = vtanh.pop %v1212
  %v1217 = vtanh.pop %v1213
  %v1218 = vtanh.pop %v1214
  %v1219 = vtanh.pop %v1215
  %v1220 = vmul.f32 %v1216, 0.5
  %v1221 = vmul.f32 %v1217, 0.5
  %v1222 = vmul.f32 %v1218, 1.0
  %v1223 = vmul.f32 %v1219, 0.5
  %v1224 = vadd.f32 %v1220, 0.5
  %v1225 = vadd.f32 %v1221, 0.5
  %v1226 = vadd.f32 %v1222, 0.0
  %v1227 = vadd.f32 %v1223, 0.5
  %v1228 = vmul.f32 %v1225, %v1115
  %v1229 = vmul.f32 %v1224, %v1226
  %v1230 = vadd.f32 %v1228, %v1229
  %v1231 = vtanh.pop %v1230
  %v1232 = vmul.f32 %v1227, %v1231
  %v1233 = vpack.c.bf16 %v1232, %v1232
  %s1234 = scalar_lea.vmem %s6, 16
  %1235 = vst [vmem:[%s1234] sm:$0xf] %v1233
  %s1236 = scalar_lea.vmem [#allocation4], 160
  %v1237 = vld [vmem:[%s1236] sm:$0xff]
  %v1238 = vld [vmem:[%s1236 + $0x8] sm:$0xff]
  %v1239 = vld [vmem:[%s1236 + $0x10] sm:$0xff]
  %v1240 = vld [vmem:[%s1236 + $0x18] sm:$0xff]
  %1241 = vmatprep.subr.bf16.mxu0 %v595
  %1242 = vmatpush1.bf16.msra.mxu0 %v594
  %1243 = vmatprep.subr.bf16.mxu0 %v599
  %1244 = vmatpush1.bf16.msra.mxu0 %v598
  %1245 = vmatprep.subr.bf16.mxu0 %v603
  %1246 = vmatpush1.bf16.msra.mxu0 %v602
  %1247 = vmatprep.subr.bf16.mxu0 %v607
  %1248 = vmatpush1.bf16.msra.mxu0 %v606
  %1249 = vmatprep.subr.bf16.mxu0 %v611
  %1250 = vmatpush1.bf16.msra.mxu0 %v610
  %1251 = vmatprep.subr.bf16.mxu0 %v615
  %1252 = vmatpush1.bf16.msra.mxu0 %v614
  %1253 = vmatprep.subr.bf16.mxu0 %v619
  %1254 = vmatpush1.bf16.msra.mxu0 %v618
  %1255 = vmatprep.subr.bf16.mxu0 %v623
  %1256 = vmatpush1.bf16.msra.mxu0 %v622
  %1257 = vmatprep.subr.bf16.mxu0 0
  %1258 = vmatpush1.bf16.msra.mxu0 0
  %1259 = vmatprep.subr.bf16.mxu0 0
  %1260 = vmatpush1.bf16.msra.mxu0 0
  %1261 = vmatprep.subr.bf16.mxu0 0
  %1262 = vmatpush1.bf16.msra.mxu0 0
  %1263 = vmatprep.subr.bf16.mxu0 0
  %1264 = vmatpush1.bf16.msra.mxu0 0
  %1265 = vmatprep.subr.bf16.mxu0 0
  %1266 = vmatpush1.bf16.msra.mxu0 0
  %1267 = vmatprep.subr.bf16.mxu0 0
  %1268 = vmatpush1.bf16.msra.mxu0 0
  %1269 = vmatprep.subr.bf16.mxu0 0
  %1270 = vmatpush1.bf16.msra.mxu0 0
  %1271 = vmatprep.subr.bf16.mxu0 0
  %1272 = vmatpush1.bf16.msra.mxu0 0
  %1273 = vmatprep.mubr.bf16.mxu0 0
  %1274 = vmatmul.mubr.bf16.gmra.mrb[0].mxu0 %v1233
  %v1275 = vpop.f32.mrb[0].mxu0
  %v1276 = vadd.f32 0.0, %v1275
  %v1277 = vpop.f32.mrb[0].mxu0
  %v1278 = vadd.f32 0.0, %v1277
  %v1279 = vpop.f32.mrb[0].mxu0
  %v1280 = vpop.f32.mrb[0].mxu0
  %1281 = vdwg.mxu0
  %1282 = vmatprep.subr.bf16.mxu0 %v597
  %1283 = vmatpush1.bf16.msra.mxu0 %v596
  %1284 = vmatprep.subr.bf16.mxu0 %v601
  %1285 = vmatpush1.bf16.msra.mxu0 %v600
  %1286 = vmatprep.subr.bf16.mxu0 %v605
  %1287 = vmatpush1.bf16.msra.mxu0 %v604
  %1288 = vmatprep.subr.bf16.mxu0 %v609
  %1289 = vmatpush1.bf16.msra.mxu0 %v608
  %1290 = vmatprep.subr.bf16.mxu0 %v613
  %1291 = vmatpush1.bf16.msra.mxu0 %v612
  %1292 = vmatprep.subr.bf16.mxu0 %v617
  %1293 = vmatpush1.bf16.msra.mxu0 %v616
  %1294 = vmatprep.subr.bf16.mxu0 %v621
  %1295 = vmatpush1.bf16.msra.mxu0 %v620
  %1296 = vmatprep.subr.bf16.mxu0 %v625
  %1297 = vmatpush1.bf16.msra.mxu0 %v624
  %1298 = vmatprep.subr.bf16.mxu0 0
  %1299 = vmatpush1.bf16.msra.mxu0 0
  %1300 = vmatprep.subr.bf16.mxu0 0
  %1301 = vmatpush1.bf16.msra.mxu0 0
  %1302 = vmatprep.subr.bf16.mxu0 0
  %1303 = vmatpush1.bf16.msra.mxu0 0
  %1304 = vmatprep.subr.bf16.mxu0 0
  %1305 = vmatpush1.bf16.msra.mxu0 0
  %1306 = vmatprep.subr.bf16.mxu0 0
  %1307 = vmatpush1.bf16.msra.mxu0 0
  %1308 = vmatprep.subr.bf16.mxu0 0
  %1309 = vmatpush1.bf16.msra.mxu0 0
  %1310 = vmatprep.subr.bf16.mxu0 0
  %1311 = vmatpush1.bf16.msra.mxu0 0
  %1312 = vmatprep.subr.bf16.mxu0 0
  %1313 = vmatpush1.bf16.msra.mxu0 0
  %1314 = vmatprep.mubr.bf16.mxu0 0
  %1315 = vmatmul.mubr.bf16.gmra.mrb[0].mxu0 %v1233
  %v1316 = vpop.f32.mrb[0].mxu0
  %v1317 = vadd.f32 0.0, %v1316
  %v1318 = vpop.f32.mrb[0].mxu0
  %v1319 = vadd.f32 0.0, %v1318
  %v1320 = vpop.f32.mrb[0].mxu0
  %v1321 = vpop.f32.mrb[0].mxu0
  %1322 = vdwg.mxu0
  %v1323 = vadd.f32 %v1237, %v1276
  %v1324 = vadd.f32 %v1238, %v1278
  %v1325 = vadd.f32 %v1239, %v1317
  %v1326 = vadd.f32 %v1240, %v1319
  %v1327 = vmul.f32 %v1323, 0.5
  %v1328 = vmul.f32 %v1324, 0.5
  %v1329 = vmul.f32 %v1325, 1.0
  %v1330 = vmul.f32 %v1326, 0.5
  %v1331 = vtanh.pop %v1327
  %v1332 = vtanh.pop %v1328
  %v1333 = vtanh.pop %v1329
  %v1334 = vtanh.pop %v1330
  %v1335 = vmul.f32 %v1331, 0.5
  %v1336 = vmul.f32 %v1332, 0.5
  %v1337 = vmul.f32 %v1333, 1.0
  %v1338 = vmul.f32 %v1334, 0.5
  %v1339 = vadd.f32 %v1335, 0.5
  %v1340 = vadd.f32 %v1336, 0.5
  %v1341 = vadd.f32 %v1337, 0.0
  %v1342 = vadd.f32 %v1338, 0.5
  %v1343 = vmul.f32 %v1340, %v1230
  %v1344 = vmul.f32 %v1339, %v1341
  %v1345 = vadd.f32 %v1343, %v1344
  %v1346 = vtanh.pop %v1345
  %v1347 = vmul.f32 %v1342, %v1346
  %v1348 = vpack.c.bf16 %v1347, %v1347
  %s1349 = scalar_lea.vmem %s6, 20
  %1350 = vst [vmem:[%s1349] sm:$0xf] %v1348
  %s1351 = scalar_lea.vmem [#allocation4], 192
  %v1352 = vld [vmem:[%s1351] sm:$0xff]
  %v1353 = vld [vmem:[%s1351 + $0x8] sm:$0xff]
  %v1354 = vld [vmem:[%s1351 + $0x10] sm:$0xff]
  %v1355 = vld [vmem:[%s1351 + $0x18] sm:$0xff]
  %1356 = vmatprep.subr.bf16.mxu0 %v595
  %1357 = vmatpush1.bf16.msra.mxu0 %v594
  %1358 = vmatprep.subr.bf16.mxu0 %v599
  %1359 = vmatpush1.bf16.msra.mxu0 %v598
  %1360 = vmatprep.subr.bf16.mxu0 %v603
  %1361 = vmatpush1.bf16.msra.mxu0 %v602
  %1362 = vmatprep.subr.bf16.mxu0 %v607
  %1363 = vmatpush1.bf16.msra.mxu0 %v606
  %1364 = vmatprep.subr.bf16.mxu0 %v611
  %1365 = vmatpush1.bf16.msra.mxu0 %v610
  %1366 = vmatprep.subr.bf16.mxu0 %v615
  %1367 = vmatpush1.bf16.msra.mxu0 %v614
  %1368 = vmatprep.subr.bf16.mxu0 %v619
  %1369 = vmatpush1.bf16.msra.mxu0 %v618
  %1370 = vmatprep.subr.bf16.mxu0 %v623
  %1371 = vmatpush1.bf16.msra.mxu0 %v622
  %1372 = vmatprep.subr.bf16.mxu0 0
  %1373 = vmatpush1.bf16.msra.mxu0 0
  %1374 = vmatprep.subr.bf16.mxu0 0
  %1375 = vmatpush1.bf16.msra.mxu0 0
  %1376 = vmatprep.subr.bf16.mxu0 0
  %1377 = vmatpush1.bf16.msra.mxu0 0
  %1378 = vmatprep.subr.bf16.mxu0 0
  %1379 = vmatpush1.bf16.msra.mxu0 0
  %1380 = vmatprep.subr.bf16.mxu0 0
  %1381 = vmatpush1.bf16.msra.mxu0 0
  %1382 = vmatprep.subr.bf16.mxu0 0
  %1383 = vmatpush1.bf16.msra.mxu0 0
  %1384 = vmatprep.subr.bf16.mxu0 0
  %1385 = vmatpush1.bf16.msra.mxu0 0
  %1386 = vmatprep.subr.bf16.mxu0 0
  %1387 = vmatpush1.bf16.msra.mxu0 0
  %1388 = vmatprep.mubr.bf16.mxu0 0
  %1389 = vmatmul.mubr.bf16.gmra.mrb[0].mxu0 %v1348
  %v1390 = vpop.f32.mrb[0].mxu0
  %v1391 = vadd.f32 0.0, %v1390
  %v1392 = vpop.f32.mrb[0].mxu0
  %v1393 = vadd.f32 0.0, %v1392
  %v1394 = vpop.f32.mrb[0].mxu0
  %v1395 = vpop.f32.mrb[0].mxu0
  %1396 = vdwg.mxu0
  %1397 = vmatprep.subr.bf16.mxu0 %v597
  %1398 = vmatpush1.bf16.msra.mxu0 %v596
  %1399 = vmatprep.subr.bf16.mxu0 %v601
  %1400 = vmatpush1.bf16.msra.mxu0 %v600
  %1401 = vmatprep.subr.bf16.mxu0 %v605
  %1402 = vmatpush1.bf16.msra.mxu0 %v604
  %1403 = vmatprep.subr.bf16.mxu0 %v609
  %1404 = vmatpush1.bf16.msra.mxu0 %v608
  %1405 = vmatprep.subr.bf16.mxu0 %v613
  %1406 = vmatpush1.bf16.msra.mxu0 %v612
  %1407 = vmatprep.subr.bf16.mxu0 %v617
  %1408 = vmatpush1.bf16.msra.mxu0 %v616
  %1409 = vmatprep.subr.bf16.mxu0 %v621
  %1410 = vmatpush1.bf16.msra.mxu0 %v620
  %1411 = vmatprep.subr.bf16.mxu0 %v625
  %1412 = vmatpush1.bf16.msra.mxu0 %v624
  %1413 = vmatprep.subr.bf16.mxu0 0
  %1414 = vmatpush1.bf16.msra.mxu0 0
  %1415 = vmatprep.subr.bf16.mxu0 0
  %1416 = vmatpush1.bf16.msra.mxu0 0
  %1417 = vmatprep.subr.bf16.mxu0 0
  %1418 = vmatpush1.bf16.msra.mxu0 0
  %1419 = vmatprep.subr.bf16.mxu0 0
  %1420 = vmatpush1.bf16.msra.mxu0 0
  %1421 = vmatprep.subr.bf16.mxu0 0
  %1422 = vmatpush1.bf16.msra.mxu0 0
  %1423 = vmatprep.subr.bf16.mxu0 0
  %1424 = vmatpush1.bf16.msra.mxu0 0
  %1425 = vmatprep.subr.bf16.mxu0 0
  %1426 = vmatpush1.bf16.msra.mxu0 0
  %1427 = vmatprep.subr.bf16.mxu0 0
  %1428 = vmatpush1.bf16.msra.mxu0 0
  %1429 = vmatprep.mubr.bf16.mxu0 0
  %1430 = vmatmul.mubr.bf16.gmra.mrb[0].mxu0 %v1348
  %v1431 = vpop.f32.mrb[0].mxu0
  %v1432 = vadd.f32 0.0, %v1431
  %v1433 = vpop.f32.mrb[0].mxu0
  %v1434 = vadd.f32 0.0, %v1433
  %v1435 = vpop.f32.mrb[0].mxu0
  %v1436 = vpop.f32.mrb[0].mxu0
  %1437 = vdwg.mxu0
  %v1438 = vadd.f32 %v1352, %v1391
  %v1439 = vadd.f32 %v1353, %v1393
  %v1440 = vadd.f32 %v1354, %v1432
  %v1441 = vadd.f32 %v1355, %v1434
  %v1442 = vmul.f32 %v1438, 0.5
  %v1443 = vmul.f32 %v1439, 0.5
  %v1444 = vmul.f32 %v1440, 1.0
  %v1445 = vmul.f32 %v1441, 0.5
  %v1446 = vtanh.pop %v1442
  %v1447 = vtanh.pop %v1443
  %v1448 = vtanh.pop %v1444
  %v1449 = vtanh.pop %v1445
  %v1450 = vmul.f32 %v1446, 0.5
  %v1451 = vmul.f32 %v1447, 0.5
  %v1452 = vmul.f32 %v1448, 1.0
  %v1453 = vmul.f32 %v1449, 0.5
  %v1454 = vadd.f32 %v1450, 0.5
  %v1455 = vadd.f32 %v1451, 0.5
  %v1456 = vadd.f32 %v1452, 0.0
  %v1457 = vadd.f32 %v1453, 0.5
  %v1458 = vmul.f32 %v1455, %v1345
  %v1459 = vmul.f32 %v1454, %v1456
  %v1460 = vadd.f32 %v1458, %v1459
  %v1461 = vtanh.pop %v1460
  %v1462 = vmul.f32 %v1457, %v1461
  %v1463 = vpack.c.bf16 %v1462, %v1462
  %s1464 = scalar_lea.vmem %s6, 24
  %1465 = vst [vmem:[%s1464] sm:$0xf] %v1463
  %s1466 = scalar_lea.vmem [#allocation4], 224
  %v1467 = vld [vmem:[%s1466] sm:$0xff]
  %v1468 = vld [vmem:[%s1466 + $0x8] sm:$0xff]
  %v1469 = vld [vmem:[%s1466 + $0x10] sm:$0xff]
  %v1470 = vld [vmem:[%s1466 + $0x18] sm:$0xff]
  %1471 = vmatprep.subr.bf16.mxu0 %v595
  %1472 = vmatpush1.bf16.msra.mxu0 %v594
  %1473 = vmatprep.subr.bf16.mxu0 %v599
  %1474 = vmatpush1.bf16.msra.mxu0 %v598
  %1475 = vmatprep.subr.bf16.mxu0 %v603
  %1476 = vmatpush1.bf16.msra.mxu0 %v602
  %1477 = vmatprep.subr.bf16.mxu0 %v607
  %1478 = vmatpush1.bf16.msra.mxu0 %v606
  %1479 = vmatprep.subr.bf16.mxu0 %v611
  %1480 = vmatpush1.bf16.msra.mxu0 %v610
  %1481 = vmatprep.subr.bf16.mxu0 %v615
  %1482 = vmatpush1.bf16.msra.mxu0 %v614
  %1483 = vmatprep.subr.bf16.mxu0 %v619
  %1484 = vmatpush1.bf16.msra.mxu0 %v618
  %1485 = vmatprep.subr.bf16.mxu0 %v623
  %1486 = vmatpush1.bf16.msra.mxu0 %v622
  %1487 = vmatprep.subr.bf16.mxu0 0
  %1488 = vmatpush1.bf16.msra.mxu0 0
  %1489 = vmatprep.subr.bf16.mxu0 0
  %1490 = vmatpush1.bf16.msra.mxu0 0
  %1491 = vmatprep.subr.bf16.mxu0 0
  %1492 = vmatpush1.bf16.msra.mxu0 0
  %1493 = vmatprep.subr.bf16.mxu0 0
  %1494 = vmatpush1.bf16.msra.mxu0 0
  %1495 = vmatprep.subr.bf16.mxu0 0
  %1496 = vmatpush1.bf16.msra.mxu0 0
  %1497 = vmatprep.subr.bf16.mxu0 0
  %1498 = vmatpush1.bf16.msra.mxu0 0
  %1499 = vmatprep.subr.bf16.mxu0 0
  %1500 = vmatpush1.bf16.msra.mxu0 0
  %1501 = vmatprep.subr.bf16.mxu0 0
  %1502 = vmatpush1.bf16.msra.mxu0 0
  %1503 = vmatprep.mubr.bf16.mxu0 0
  %1504 = vmatmul.mubr.bf16.gmra.mrb[0].mxu0 %v1463
  %v1505 = vpop.f32.mrb[0].mxu0
  %v1506 = vadd.f32 0.0, %v1505
  %v1507 = vpop.f32.mrb[0].mxu0
  %v1508 = vadd.f32 0.0, %v1507
  %v1509 = vpop.f32.mrb[0].mxu0
  %v1510 = vpop.f32.mrb[0].mxu0
  %1511 = vdwg.mxu0
  %1512 = vmatprep.subr.bf16.mxu0 %v597
  %1513 = vmatpush1.bf16.msra.mxu0 %v596
  %1514 = vmatprep.subr.bf16.mxu0 %v601
  %1515 = vmatpush1.bf16.msra.mxu0 %v600
  %1516 = vmatprep.subr.bf16.mxu0 %v605
  %1517 = vmatpush1.bf16.msra.mxu0 %v604
  %1518 = vmatprep.subr.bf16.mxu0 %v609
  %1519 = vmatpush1.bf16.msra.mxu0 %v608
  %1520 = vmatprep.subr.bf16.mxu0 %v613
  %1521 = vmatpush1.bf16.msra.mxu0 %v612
  %1522 = vmatprep.subr.bf16.mxu0 %v617
  %1523 = vmatpush1.bf16.msra.mxu0 %v616
  %1524 = vmatprep.subr.bf16.mxu0 %v621
  %1525 = vmatpush1.bf16.msra.mxu0 %v620
  %1526 = vmatprep.subr.bf16.mxu0 %v625
  %1527 = vmatpush1.bf16.msra.mxu0 %v624
  %1528 = vmatprep.subr.bf16.mxu0 0
  %1529 = vmatpush1.bf16.msra.mxu0 0
  %1530 = vmatprep.subr.bf16.mxu0 0
  %1531 = vmatpush1.bf16.msra.mxu0 0
  %1532 = vmatprep.subr.bf16.mxu0 0
  %1533 = vmatpush1.bf16.msra.mxu0 0
  %1534 = vmatprep.subr.bf16.mxu0 0
  %1535 = vmatpush1.bf16.msra.mxu0 0
  %1536 = vmatprep.subr.bf16.mxu0 0
  %1537 = vmatpush1.bf16.msra.mxu0 0
  %1538 = vmatprep.subr.bf16.mxu0 0
  %1539 = vmatpush1.bf16.msra.mxu0 0
  %1540 = vmatprep.subr.bf16.mxu0 0
  %1541 = vmatpush1.bf16.msra.mxu0 0
  %1542 = vmatprep.subr.bf16.mxu0 0
  %1543 = vmatpush1.bf16.msra.mxu0 0
  %1544 = vmatprep.mubr.bf16.mxu0 0
  %1545 = vmatmul.mubr.bf16.gmra.mrb[0].mxu0 %v1463
  %v1546 = vpop.f32.mrb[0].mxu0
  %v1547 = vadd.f32 0.0, %v1546
  %v1548 = vpop.f32.mrb[0].mxu0
  %v1549 = vadd.f32 0.0, %v1548
  %v1550 = vpop.f32.mrb[0].mxu0
  %v1551 = vpop.f32.mrb[0].mxu0
  %1552 = vdwg.mxu0
  %v1553 = vadd.f32 %v1467, %v1506
  %v1554 = vadd.f32 %v1468, %v1508
  %v1555 = vadd.f32 %v1469, %v1547
  %v1556 = vadd.f32 %v1470, %v1549
  %v1557 = vmul.f32 %v1553, 0.5
  %v1558 = vmul.f32 %v1554, 0.5
  %v1559 = vmul.f32 %v1555, 1.0
  %v1560 = vmul.f32 %v1556, 0.5
  %v1561 = vtanh.pop %v1557
  %v1562 = vtanh.pop %v1558
  %v1563 = vtanh.pop %v1559
  %v1564 = vtanh.pop %v1560
  %v1565 = vmul.f32 %v1561, 0.5
  %v1566 = vmul.f32 %v1562, 0.5
  %v1567 = vmul.f32 %v1563, 1.0
  %v1568 = vmul.f32 %v1564, 0.5
  %v1569 = vadd.f32 %v1565, 0.5
  %v1570 = vadd.f32 %v1566, 0.5
  %v1571 = vadd.f32 %v1567, 0.0
  %v1572 = vadd.f32 %v1568, 0.5
  %v1573 = vmul.f32 %v1570, %v1460
  %v1574 = vmul.f32 %v1569, %v1571
  %v1575 = vadd.f32 %v1573, %v1574
  %v1576 = vtanh.pop %v1575
  %v1577 = vmul.f32 %v1572, %v1576
  %v1578 = vpack.c.bf16 %v1577, %v1577
  %s1579 = scalar_lea.vmem %s6, 28
  %1580 = vst [vmem:[%s1579] sm:$0xf] %v1578
  // Predicated region
  $region30: #{word_lstm_forward.3} parent=0 // pred_check
    %p1581 = pneg %p27
  $region31: #{word_lstm_forward.3} parent=0 // pred_check_branch
    %1583 = sbr.rel (%p1581) target = $region33
  $region32: #{word_lstm_forward.3} parent=0 // pred_region
    %1584 = vst [vmem:[%s7] sm:$0xff] %v1577
    %1585 = vst [vmem:[%s8] sm:$0xff] %v1575
  $region33: #{word_lstm_forward.3} parent=0 // pred_fallthru
    _
  %1586 = vst [vmem:[#allocation2] sm:$0xff] %v1577
  %1587 = vst [vmem:[#allocation3] sm:$0xff] %v1575
  // Predicated region
  $region34: #{word_lstm_forward.3} parent=0 // pred_check
    _
  $region35: #{word_lstm_forward.3} parent=0 // pred_check_branch
    %1589 = sbr.rel (0) target = $region37
  $region36: #{word_lstm_forward.3} parent=0 // pred_region
    _
  $region37: #{word_lstm_forward.3} parent=0 // pred_fallthru
    _
  // Predicated region
  $region38: #{word_lstm_forward.3} parent=0 // pred_check
    _
  $region39: #{word_lstm_forward.3} parent=0 // pred_check_branch
    %1591 = sbr.rel (0) target = $region41
  $region40: #{word_lstm_forward.3} parent=0 // pred_region
    _
  $region41: #{word_lstm_forward.3} parent=0 // pred_fallthru
    _
  // Predicated region
  $region42: #{word_lstm_forward.3} parent=0 // pred_check
    _
  $region43: #{word_lstm_forward.3} parent=0 // pred_check_branch
    %1593 = sbr.rel (0) target = $region45
  $region44: #{word_lstm_forward.3} parent=0 // pred_region
    _
  $region45: #{word_lstm_forward.3} parent=0 // pred_fallthru
    _
  // Predicated region
  $region46: #{word_lstm_forward.3} parent=0 // pred_check
    _
  $region47: #{word_lstm_forward.3} parent=0 // pred_check_branch
    %1595 = sbr.rel (0) target = $region49
  $region48: #{word_lstm_forward.3} parent=0 // pred_region
    _
  $region49: #{word_lstm_forward.3} parent=0 // pred_fallthru
    _
  // Predicated region
  $region50: #{word_lstm_forward.3} parent=0 // pred_check
    _
  $region51: #{word_lstm_forward.3} parent=0 // pred_check_branch
    %1597 = sbr.rel (0) target = $region53
  $region52: #{word_lstm_forward.3} parent=0 // pred_region
    _
  $region53: #{word_lstm_forward.3} parent=0 // pred_fallthru
    _
  // Predicated region
  $region54: #{word_lstm_forward.3} parent=0 // pred_check
    _
  $region55: #{word_lstm_forward.3} parent=0 // pred_check_branch
    %1599 = sbr.rel (0) target = $region57
  $region56: #{word_lstm_forward.3} parent=0 // pred_region
    _
  $region57: #{word_lstm_forward.3} parent=0 // pred_fallthru
    _

// kernel: word_lstm_forward.4
$region0: #{word_lstm_forward.4}
  #allocation0 [shape = 'u32[]', space=smem, size = 0x4, offset = 0x4, fixed_abs, tag = 'smem constant byte address 0x4 - core index']
  #allocation1 [shape = 'u32[144,128]{1,0:T(1,128)}', space=vmem, size = 0x12000, scoped, tag = 'internal scratch']
  #allocation2 [shape = 'f32[8,128]{1,0:T(8,128)}', space=vmem, size = 0x1000, scoped, tag = 'scratch operand']
  #allocation3 [shape = 'f32[8,128]{1,0:T(8,128)}', space=vmem, size = 0x1000, scoped, tag = 'scratch operand']
  #allocation4 [shape = 'f32[8,8,512]{2,1,0:T(8,128)}', space=vmem, size = 0x20000, scoped, tag = 'scratch operand']
  %s0 = inlined_call_operand.vmem [shape: bf16[8,8,128], index: 0, kind: input, shape index: {}]
  %s1 = inlined_call_operand.vmem [shape: f32[8,128], index: 1, kind: input, shape index: {}]
  %s2 = inlined_call_operand.vmem [shape: f32[8,128], index: 2, kind: input, shape index: {}]
  %s3 = inlined_call_operand.vmem [shape: bf16[128,512], index: 3, kind: input, shape index: {}]
  %s4 = inlined_call_operand.vmem [shape: bf16[128,512], index: 4, kind: input, shape index: {}]
  %s5 = inlined_call_operand.vmem [shape: f32[1,512], index: 5, kind: input, shape index: {}]
  %s6 = inlined_call_operand.vmem [shape: bf16[8,8,128], index: 6, kind: output, shape index: {0}]
  %s7 = inlined_call_operand.vmem [shape: f32[8,128], index: 7, kind: output, shape index: {1}]
  %s8 = inlined_call_operand.vmem [shape: f32[8,128], index: 8, kind: output, shape index: {2}]
  %9 = xla_tuple %s6, %s7, %s8
  %s10 = sld [smem:[#allocation0]]
  $region58: #{word_lstm_forward.4} parent=0
    _
  %s12 = ssub.s32 1, %s10
  %s13 = scalar_select 0, %s12, %s10
  // Predicated region
  $region2: #{word_lstm_forward.4} parent=0 // pred_check
    _
  $region3: #{word_lstm_forward.4} parent=0 // pred_check_branch
    %15 = sbr.rel (0) target = $region5
  $region4: #{word_lstm_forward.4} parent=0 // pred_region
    _
  $region5: #{word_lstm_forward.4} parent=0 // pred_fallthru
    _
  // Predicated region
  $region6: #{word_lstm_forward.4} parent=0 // pred_check
    _
  $region7: #{word_lstm_forward.4} parent=0 // pred_check_branch
    %17 = sbr.rel (0) target = $region9
  $region8: #{word_lstm_forward.4} parent=0 // pred_region
    _
  $region9: #{word_lstm_forward.4} parent=0 // pred_fallthru
    _
  // Predicated region
  $region10: #{word_lstm_forward.4} parent=0 // pred_check
    _
  $region11: #{word_lstm_forward.4} parent=0 // pred_check_branch
    %19 = sbr.rel (0) target = $region13
  $region12: #{word_lstm_forward.4} parent=0 // pred_region
    _
  $region13: #{word_lstm_forward.4} parent=0 // pred_fallthru
    _
  // Predicated region
  $region14: #{word_lstm_forward.4} parent=0 // pred_check
    _
  $region15: #{word_lstm_forward.4} parent=0 // pred_check_branch
    %21 = sbr.rel (0) target = $region17
  $region16: #{word_lstm_forward.4} parent=0 // pred_region
    _
  $region17: #{word_lstm_forward.4} parent=0 // pred_fallthru
    _
  // Predicated region
  $region18: #{word_lstm_forward.4} parent=0 // pred_check
    _
  $region19: #{word_lstm_forward.4} parent=0 // pred_check_branch
    %23 = sbr.rel (0) target = $region21
  $region20: #{word_lstm_forward.4} parent=0 // pred_region
    _
  $region21: #{word_lstm_forward.4} parent=0 // pred_fallthru
    _
  // Predicated region
  $region22: #{word_lstm_forward.4} parent=0 // pred_check
    _
  $region23: #{word_lstm_forward.4} parent=0 // pred_check_branch
    %25 = sbr.rel (0) target = $region25
  $region24: #{word_lstm_forward.4} parent=0 // pred_region
    _
  $region25: #{word_lstm_forward.4} parent=0 // pred_fallthru
    _
  %p27 = scmp.eq.s32.totalorder 0, 0
  // Predicated region
  $region26: #{word_lstm_forward.4} parent=0 // pred_check
    %p28 = pneg %p27
  $region27: #{word_lstm_forward.4} parent=0 // pred_check_branch
    %30 = sbr.rel (%p28) target = $region29
  $region28: #{word_lstm_forward.4} parent=0 // pred_region
    %v31 = vld [vmem:[%s1] sm:$0xff]
    %32 = vst [vmem:[#allocation2] sm:$0xff] %v31
    %v33 = vld [vmem:[%s2] sm:$0xff]
    %34 = vst [vmem:[#allocation3] sm:$0xff] %v33
  $region29: #{word_lstm_forward.4} parent=0 // pred_fallthru
    _
  %v35 = vld [vmem:[%s0] sm:$0xf]
  %v36 = vld [vmem:[%s0 + $0x4] sm:$0xf]
  %v37 = vld [vmem:[%s0 + $0x8] sm:$0xf]
  %v38 = vld [vmem:[%s0 + $0xc] sm:$0xf]
  %v39 = vld [vmem:[%s0 + $0x10] sm:$0xf]
  %v40 = vld [vmem:[%s0 + $0x14] sm:$0xf]
  %v41 = vld [vmem:[%s0 + $0x18] sm:$0xf]
  %v42 = vld [vmem:[%s0 + $0x1c] sm:$0xf]
  %v43 = vld [vmem:[%s3] sm:$0xff]
  %v44 = vld [vmem:[%s3 + $0x8] sm:$0xff]
  %v45 = vld [vmem:[%s3 + $0x10] sm:$0xff]
  %v46 = vld [vmem:[%s3 + $0x18] sm:$0xff]
  %v47 = vld [vmem:[%s3 + $0x20] sm:$0xff]
  %v48 = vld [vmem:[%s3 + $0x28] sm:$0xff]
  %v49 = vld [vmem:[%s3 + $0x30] sm:$0xff]
  %v50 = vld [vmem:[%s3 + $0x38] sm:$0xff]
  %v51 = vld [vmem:[%s3 + $0x40] sm:$0xff]
  %v52 = vld [vmem:[%s3 + $0x48] sm:$0xff]
  %v53 = vld [vmem:[%s3 + $0x50] sm:$0xff]
  %v54 = vld [vmem:[%s3 + $0x58] sm:$0xff]
  %v55 = vld [vmem:[%s3 + $0x60] sm:$0xff]
  %v56 = vld [vmem:[%s3 + $0x68] sm:$0xff]
  %v57 = vld [vmem:[%s3 + $0x70] sm:$0xff]
  %v58 = vld [vmem:[%s3 + $0x78] sm:$0xff]
  %v59 = vld [vmem:[%s3 + $0x80] sm:$0xff]
  %v60 = vld [vmem:[%s3 + $0x88] sm:$0xff]
  %v61 = vld [vmem:[%s3 + $0x90] sm:$0xff]
  %v62 = vld [vmem:[%s3 + $0x98] sm:$0xff]
  %v63 = vld [vmem:[%s3 + $0xa0] sm:$0xff]
  %v64 = vld [vmem:[%s3 + $0xa8] sm:$0xff]
  %v65 = vld [vmem:[%s3 + $0xb0] sm:$0xff]
  %v66 = vld [vmem:[%s3 + $0xb8] sm:$0xff]
  %v67 = vld [vmem:[%s3 + $0xc0] sm:$0xff]
  %v68 = vld [vmem:[%s3 + $0xc8] sm:$0xff]
  %v69 = vld [vmem:[%s3 + $0xd0] sm:$0xff]
  %v70 = vld [vmem:[%s3 + $0xd8] sm:$0xff]
  %v71 = vld [vmem:[%s3 + $0xe0] sm:$0xff]
  %v72 = vld [vmem:[%s3 + $0xe8] sm:$0xff]
  %v73 = vld [vmem:[%s3 + $0xf0] sm:$0xff]
  %v74 = vld [vmem:[%s3 + $0xf8] sm:$0xff]
  %v75 = vld [vmem:[%s5] sm:$0xf]
  %v77 = vlaneseq
  %v78 = vshrl.u32 %v77, 7
  %v79 = vsub.s32 0, %v78
  %v80 = vrot.slane %v75, %v79
  %v81 = vlaneseq
  %v82 = vshrl.u32 %v81, 7
  %v83 = vsub.s32 1, %v82
  %v84 = vrot.slane %v75, %v83
  %v85 = vlaneseq
  %v86 = vshrl.u32 %v85, 7
  %v87 = vsub.s32 2, %v86
  %v88 = vrot.slane %v75, %v87
  %v89 = vlaneseq
  %v90 = vshrl.u32 %v89, 7
  %v91 = vsub.s32 3, %v90
  %v92 = vrot.slane %v75, %v91
  %v105 = vunpack.c.l.b16 %v35
  %v106 = vunpack.c.l.b16 %v36
  %v107 = vunpack.c.l.b16 %v37
  %v108 = vunpack.c.l.b16 %v38
  %v109 = vunpack.c.l.b16 %v39
  %v110 = vunpack.c.l.b16 %v40
  %v111 = vunpack.c.l.b16 %v41
  %v112 = vunpack.c.l.b16 %v42
  %v113 = vpack.c.b16 %v106, %v105
  %v114 = vpack.c.b16 %v108, %v107
  %v115 = vpack.c.b16 %v110, %v109
  %v116 = vpack.c.b16 %v112, %v111
  %v153 = vunpack.c.l.b16 %v43
  %v154 = vunpack.c.h.b16 %v43
  %v155 = vunpack.c.l.b16 %v44
  %v156 = vunpack.c.h.b16 %v44
  %v157 = vunpack.c.l.b16 %v45
  %v158 = vunpack.c.h.b16 %v45
  %v159 = vunpack.c.l.b16 %v46
  %v160 = vunpack.c.h.b16 %v46
  %v161 = vunpack.c.l.b16 %v47
  %v162 = vunpack.c.h.b16 %v47
  %v163 = vunpack.c.l.b16 %v48
  %v164 = vunpack.c.h.b16 %v48
  %v165 = vunpack.c.l.b16 %v49
  %v166 = vunpack.c.h.b16 %v49
  %v167 = vunpack.c.l.b16 %v50
  %v168 = vunpack.c.h.b16 %v50
  %v169 = vunpack.c.l.b16 %v51
  %v170 = vunpack.c.h.b16 %v51
  %v171 = vunpack.c.l.b16 %v52
  %v172 = vunpack.c.h.b16 %v52
  %v173 = vunpack.c.l.b16 %v53
  %v174 = vunpack.c.h.b16 %v53
  %v175 = vunpack.c.l.b16 %v54
  %v176 = vunpack.c.h.b16 %v54
  %v177 = vunpack.c.l.b16 %v55
  %v178 = vunpack.c.h.b16 %v55
  %v179 = vunpack.c.l.b16 %v56
  %v180 = vunpack.c.h.b16 %v56
  %v181 = vunpack.c.l.b16 %v57
  %v182 = vunpack.c.h.b16 %v57
  %v183 = vunpack.c.l.b16 %v58
  %v184 = vunpack.c.h.b16 %v58
  %v185 = vunpack.c.l.b16 %v59
  %v186 = vunpack.c.h.b16 %v59
  %v187 = vunpack.c.l.b16 %v60
  %v188 = vunpack.c.h.b16 %v60
  %v189 = vunpack.c.l.b16 %v61
  %v190 = vunpack.c.h.b16 %v61
  %v191 = vunpack.c.l.b16 %v62
  %v192 = vunpack.c.h.b16 %v62
  %v193 = vunpack.c.l.b16 %v63
  %v194 = vunpack.c.h.b16 %v63
  %v195 = vunpack.c.l.b16 %v64
  %v196 = vunpack.c.h.b16 %v64
  %v197 = vunpack.c.l.b16 %v65
  %v198 = vunpack.c.h.b16 %v65
  %v199 = vunpack.c.l.b16 %v66
  %v200 = vunpack.c.h.b16 %v66
  %v201 = vunpack.c.l.b16 %v67
  %v202 = vunpack.c.h.b16 %v67
  %v203 = vunpack.c.l.b16 %v68
  %v204 = vunpack.c.h.b16 %v68
  %v205 = vunpack.c.l.b16 %v69
  %v206 = vunpack.c.h.b16 %v69
  %v207 = vunpack.c.l.b16 %v70
  %v208 = vunpack.c.h.b16 %v70
  %v209 = vunpack.c.l.b16 %v71
  %v210 = vunpack.c.h.b16 %v71
  %v211 = vunpack.c.l.b16 %v72
  %v212 = vunpack.c.h.b16 %v72
  %v213 = vunpack.c.l.b16 %v73
  %v214 = vunpack.c.h.b16 %v73
  %v215 = vunpack.c.l.b16 %v74
  %v216 = vunpack.c.h.b16 %v74
  %v217 = vpack.c.b16 %v157, %v153
  %v218 = vpack.c.b16 %v158, %v154
  %v219 = vpack.c.b16 %v159, %v155
  %v220 = vpack.c.b16 %v160, %v156
  %v221 = vpack.c.b16 %v165, %v161
  %v222 = vpack.c.b16 %v166, %v162
  %v223 = vpack.c.b16 %v167, %v163
  %v224 = vpack.c.b16 %v168, %v164
  %v225 = vpack.c.b16 %v173, %v169
  %v226 = vpack.c.b16 %v174, %v170
  %v227 = vpack.c.b16 %v175, %v171
  %v228 = vpack.c.b16 %v176, %v172
  %v229 = vpack.c.b16 %v181, %v177
  %v230 = vpack.c.b16 %v182, %v178
  %v231 = vpack.c.b16 %v183, %v179
  %v232 = vpack.c.b16 %v184, %v180
  %v233 = vpack.c.b16 %v189, %v185
  %v234 = vpack.c.b16 %v190, %v186
  %v235 = vpack.c.b16 %v191, %v187
  %v236 = vpack.c.b16 %v192, %v188
  %v237 = vpack.c.b16 %v197, %v193
  %v238 = vpack.c.b16 %v198, %v194
  %v239 = vpack.c.b16 %v199, %v195
  %v240 = vpack.c.b16 %v200, %v196
  %v241 = vpack.c.b16 %v205, %v201
  %v242 = vpack.c.b16 %v206, %v202
  %v243 = vpack.c.b16 %v207, %v203
  %v244 = vpack.c.b16 %v208, %v204
  %v245 = vpack.c.b16 %v213, %v209
  %v246 = vpack.c.b16 %v214, %v210
  %v247 = vpack.c.b16 %v215, %v211
  %v248 = vpack.c.b16 %v216, %v212
  %281 = vmatprep.subr.bf16.mxu0 %v218
  %282 = vmatpush1.bf16.msra.mxu0 %v217
  %283 = vmatprep.subr.bf16.mxu0 %v222
  %284 = vmatpush1.bf16.msra.mxu0 %v221
  %285 = vmatprep.subr.bf16.mxu0 %v226
  %286 = vmatpush1.bf16.msra.mxu0 %v225
  %287 = vmatprep.subr.bf16.mxu0 %v230
  %288 = vmatpush1.bf16.msra.mxu0 %v229
  %289 = vmatprep.subr.bf16.mxu0 %v234
  %290 = vmatpush1.bf16.msra.mxu0 %v233
  %291 = vmatprep.subr.bf16.mxu0 %v238
  %292 = vmatpush1.bf16.msra.mxu0 %v237
  %293 = vmatprep.subr.bf16.mxu0 %v242
  %294 = vmatpush1.bf16.msra.mxu0 %v241
  %295 = vmatprep.subr.bf16.mxu0 %v246
  %296 = vmatpush1.bf16.msra.mxu0 %v245
  %297 = vmatprep.subr.bf16.mxu0 0
  %298 = vmatpush1.bf16.msra.mxu0 0
  %299 = vmatprep.subr.bf16.mxu0 0
  %300 = vmatpush1.bf16.msra.mxu0 0
  %301 = vmatprep.subr.bf16.mxu0 0
  %302 = vmatpush1.bf16.msra.mxu0 0
  %303 = vmatprep.subr.bf16.mxu0 0
  %304 = vmatpush1.bf16.msra.mxu0 0
  %305 = vmatprep.subr.bf16.mxu0 0
  %306 = vmatpush1.bf16.msra.mxu0 0
  %307 = vmatprep.subr.bf16.mxu0 0
  %308 = vmatpush1.bf16.msra.mxu0 0
  %309 = vmatprep.subr.bf16.mxu0 0
  %310 = vmatpush1.bf16.msra.mxu0 0
  %311 = vmatprep.subr.bf16.mxu0 0
  %312 = vmatpush1.bf16.msra.mxu0 0
  %313 = vmatprep.mubr.bf16.mxu0 0
  %314 = vmatmul.mubr.bf16.gmra.mrb[0].mxu0 %v113
  %v315 = vpop.f32.mrb[0].mxu0
  %v316 = vadd.f32 %v80, %v315
  %v317 = vpop.f32.mrb[0].mxu0
  %v318 = vadd.f32 %v84, %v317
  %v319 = vpop.f32.mrb[0].mxu0
  %v320 = vadd.f32 %v80, %v319
  %v321 = vpop.f32.mrb[0].mxu0
  %v322 = vadd.f32 %v84, %v321
  %323 = vmatprep.mubr.bf16.mxu0 0
  %324 = vmatmul.mubr.bf16.gmra.mrb[0].mxu0 %v114
  %v325 = vpop.f32.mrb[0].mxu0
  %v326 = vadd.f32 %v80, %v325
  %v327 = vpop.f32.mrb[0].mxu0
  %v328 = vadd.f32 %v84, %v327
  %v329 = vpop.f32.mrb[0].mxu0
  %v330 = vadd.f32 %v80, %v329
  %v331 = vpop.f32.mrb[0].mxu0
  %v332 = vadd.f32 %v84, %v331
  %333 = vmatprep.mubr.bf16.mxu0 0
  %334 = vmatmul.mubr.bf16.gmra.mrb[0].mxu0 %v115
  %v335 = vpop.f32.mrb[0].mxu0
  %v336 = vadd.f32 %v80, %v335
  %v337 = vpop.f32.mrb[0].mxu0
  %v338 = vadd.f32 %v84, %v337
  %v339 = vpop.f32.mrb[0].mxu0
  %v340 = vadd.f32 %v80, %v339
  %v341 = vpop.f32.mrb[0].mxu0
  %v342 = vadd.f32 %v84, %v341
  %343 = vmatprep.mubr.bf16.mxu0 0
  %344 = vmatmul.mubr.bf16.gmra.mrb[0].mxu0 %v116
  %v345 = vpop.f32.mrb[0].mxu0
  %v346 = vadd.f32 %v80, %v345
  %v347 = vpop.f32.mrb[0].mxu0
  %v348 = vadd.f32 %v84, %v347
  %v349 = vpop.f32.mrb[0].mxu0
  %v350 = vadd.f32 %v80, %v349
  %v351 = vpop.f32.mrb[0].mxu0
  %v352 = vadd.f32 %v84, %v351
  %353 = vdwg.mxu0
  %354 = vmatprep.subr.bf16.mxu0 %v220
  %355 = vmatpush1.bf16.msra.mxu0 %v219
  %356 = vmatprep.subr.bf16.mxu0 %v224
  %357 = vmatpush1.bf16.msra.mxu0 %v223
  %358 = vmatprep.subr.bf16.mxu0 %v228
  %359 = vmatpush1.bf16.msra.mxu0 %v227
  %360 = vmatprep.subr.bf16.mxu0 %v232
  %361 = vmatpush1.bf16.msra.mxu0 %v231
  %362 = vmatprep.subr.bf16.mxu0 %v236
  %363 = vmatpush1.bf16.msra.mxu0 %v235
  %364 = vmatprep.subr.bf16.mxu0 %v240
  %365 = vmatpush1.bf16.msra.mxu0 %v239
  %366 = vmatprep.subr.bf16.mxu0 %v244
  %367 = vmatpush1.bf16.msra.mxu0 %v243
  %368 = vmatprep.subr.bf16.mxu0 %v248
  %369 = vmatpush1.bf16.msra.mxu0 %v247
  %370 = vmatprep.subr.bf16.mxu0 0
  %371 = vmatpush1.bf16.msra.mxu0 0
  %372 = vmatprep.subr.bf16.mxu0 0
  %373 = vmatpush1.bf16.msra.mxu0 0
  %374 = vmatprep.subr.bf16.mxu0 0
  %375 = vmatpush1.bf16.msra.mxu0 0
  %376 = vmatprep.subr.bf16.mxu0 0
  %377 = vmatpush1.bf16.msra.mxu0 0
  %378 = vmatprep.subr.bf16.mxu0 0
  %379 = vmatpush1.bf16.msra.mxu0 0
  %380 = vmatprep.subr.bf16.mxu0 0
  %381 = vmatpush1.bf16.msra.mxu0 0
  %382 = vmatprep.subr.bf16.mxu0 0
  %383 = vmatpush1.bf16.msra.mxu0 0
  %384 = vmatprep.subr.bf16.mxu0 0
  %385 = vmatpush1.bf16.msra.mxu0 0
  %386 = vmatprep.mubr.bf16.mxu0 0
  %387 = vmatmul.mubr.bf16.gmra.mrb[0].mxu0 %v113
  %v388 = vpop.f32.mrb[0].mxu0
  %v389 = vadd.f32 %v88, %v388
  %v390 = vpop.f32.mrb[0].mxu0
  %v391 = vadd.f32 %v92, %v390
  %v392 = vpop.f32.mrb[0].mxu0
  %v393 = vadd.f32 %v88, %v392
  %v394 = vpop.f32.mrb[0].mxu0
  %v395 = vadd.f32 %v92, %v394
  %396 = vmatprep.mubr.bf16.mxu0 0
  %397 = vmatmul.mubr.bf16.gmra.mrb[0].mxu0 %v114
  %v398 = vpop.f32.mrb[0].mxu0
  %v399 = vadd.f32 %v88, %v398
  %v400 = vpop.f32.mrb[0].mxu0
  %v401 = vadd.f32 %v92, %v400
  %v402 = vpop.f32.mrb[0].mxu0
  %v403 = vadd.f32 %v88, %v402
  %v404 = vpop.f32.mrb[0].mxu0
  %v405 = vadd.f32 %v92, %v404
  %406 = vmatprep.mubr.bf16.mxu0 0
  %407 = vmatmul.mubr.bf16.gmra.mrb[0].mxu0 %v115
  %v408 = vpop.f32.mrb[0].mxu0
  %v409 = vadd.f32 %v88, %v408
  %v410 = vpop.f32.mrb[0].mxu0
  %v411 = vadd.f32 %v92, %v410
  %v412 = vpop.f32.mrb[0].mxu0
  %v413 = vadd.f32 %v88, %v412
  %v414 = vpop.f32.mrb[0].mxu0
  %v415 = vadd.f32 %v92, %v414
  %416 = vmatprep.mubr.bf16.mxu0 0
  %417 = vmatmul.mubr.bf16.gmra.mrb[0].mxu0 %v116
  %v418 = vpop.f32.mrb[0].mxu0
  %v419 = vadd.f32 %v88, %v418
  %v420 = vpop.f32.mrb[0].mxu0
  %v421 = vadd.f32 %v92, %v420
  %v422 = vpop.f32.mrb[0].mxu0
  %v423 = vadd.f32 %v88, %v422
  %v424 = vpop.f32.mrb[0].mxu0
  %v425 = vadd.f32 %v92, %v424
  %426 = vdwg.mxu0
  %427 = vst [vmem:[#allocation4] sm:$0xff] %v316
  %428 = vst [vmem:[#allocation4 + $0x8] sm:$0xff] %v318
  %429 = vst [vmem:[#allocation4 + $0x10] sm:$0xff] %v389
  %430 = vst [vmem:[#allocation4 + $0x18] sm:$0xff] %v391
  %431 = vst [vmem:[#allocation4 + $0x20] sm:$0xff] %v320
  %432 = vst [vmem:[#allocation4 + $0x28] sm:$0xff] %v322
  %433 = vst [vmem:[#allocation4 + $0x30] sm:$0xff] %v393
  %434 = vst [vmem:[#allocation4 + $0x38] sm:$0xff] %v395
  %435 = vst [vmem:[#allocation4 + $0x40] sm:$0xff] %v326
  %436 = vst [vmem:[#allocation4 + $0x48] sm:$0xff] %v328
  %437 = vst [vmem:[#allocation4 + $0x50] sm:$0xff] %v399
  %438 = vst [vmem:[#allocation4 + $0x58] sm:$0xff] %v401
  %439 = vst [vmem:[#allocation4 + $0x60] sm:$0xff] %v330
  %440 = vst [vmem:[#allocation4 + $0x68] sm:$0xff] %v332
  %441 = vst [vmem:[#allocation4 + $0x70] sm:$0xff] %v403
  %442 = vst [vmem:[#allocation4 + $0x78] sm:$0xff] %v405
  %443 = vst [vmem:[#allocation4 + $0x80] sm:$0xff] %v336
  %444 = vst [vmem:[#allocation4 + $0x88] sm:$0xff] %v338
  %445 = vst [vmem:[#allocation4 + $0x90] sm:$0xff] %v409
  %446 = vst [vmem:[#allocation4 + $0x98] sm:$0xff] %v411
  %447 = vst [vmem:[#allocation4 + $0xa0] sm:$0xff] %v340
  %448 = vst [vmem:[#allocation4 + $0xa8] sm:$0xff] %v342
  %449 = vst [vmem:[#allocation4 + $0xb0] sm:$0xff] %v413
  %450 = vst [vmem:[#allocation4 + $0xb8] sm:$0xff] %v415
  %451 = vst [vmem:[#allocation4 + $0xc0] sm:$0xff] %v346
  %452 = vst [vmem:[#allocation4 + $0xc8] sm:$0xff] %v348
  %453 = vst [vmem:[#allocation4 + $0xd0] sm:$0xff] %v419
  %454 = vst [vmem:[#allocation4 + $0xd8] sm:$0xff] %v421
  %455 = vst [vmem:[#allocation4 + $0xe0] sm:$0xff] %v350
  %456 = vst [vmem:[#allocation4 + $0xe8] sm:$0xff] %v352
  %457 = vst [vmem:[#allocation4 + $0xf0] sm:$0xff] %v423
  %458 = vst [vmem:[#allocation4 + $0xf8] sm:$0xff] %v425
  %v459 = vld [vmem:[%s4] sm:$0xff]
  %v460 = vld [vmem:[%s4 + $0x8] sm:$0xff]
  %v461 = vld [vmem:[%s4 + $0x10] sm:$0xff]
  %v462 = vld [vmem:[%s4 + $0x18] sm:$0xff]
  %v463 = vld [vmem:[%s4 + $0x20] sm:$0xff]
  %v464 = vld [vmem:[%s4 + $0x28] sm:$0xff]
  %v465 = vld [vmem:[%s4 + $0x30] sm:$0xff]
  %v466 = vld [vmem:[%s4 + $0x38] sm:$0xff]
  %v467 = vld [vmem:[%s4 + $0x40] sm:$0xff]
  %v468 = vld [vmem:[%s4 + $0x48] sm:$0xff]
  %v469 = vld [vmem:[%s4 + $0x50] sm:$0xff]
  %v470 = vld [vmem:[%s4 + $0x58] sm:$0xff]
  %v471 = vld [vmem:[%s4 + $0x60] sm:$0xff]
  %v472 = vld [vmem:[%s4 + $0x68] sm:$0xff]
  %v473 = vld [vmem:[%s4 + $0x70] sm:$0xff]
  %v474 = vld [vmem:[%s4 + $0x78] sm:$0xff]
  %v475 = vld [vmem:[%s4 + $0x80] sm:$0xff]
  %v476 = vld [vmem:[%s4 + $0x88] sm:$0xff]
  %v477 = vld [vmem:[%s4 + $0x90] sm:$0xff]
  %v478 = vld [vmem:[%s4 + $0x98] sm:$0xff]
  %v479 = vld [vmem:[%s4 + $0xa0] sm:$0xff]
  %v480 = vld [vmem:[%s4 + $0xa8] sm:$0xff]
  %v481 = vld [vmem:[%s4 + $0xb0] sm:$0xff]
  %v482 = vld [vmem:[%s4 + $0xb8] sm:$0xff]
  %v483 = vld [vmem:[%s4 + $0xc0] sm:$0xff]
  %v484 = vld [vmem:[%s4 + $0xc8] sm:$0xff]
  %v485 = vld [vmem:[%s4 + $0xd0] sm:$0xff]
  %v486 = vld [vmem:[%s4 + $0xd8] sm:$0xff]
  %v487 = vld [vmem:[%s4 + $0xe0] sm:$0xff]
  %v488 = vld [vmem:[%s4 + $0xe8] sm:$0xff]
  %v489 = vld [vmem:[%s4 + $0xf0] sm:$0xff]
  %v490 = vld [vmem:[%s4 + $0xf8] sm:$0xff]
  %v491 = vld [vmem:[#allocation2] sm:$0xff]
  %v492 = vld [vmem:[#allocation3] sm:$0xff]
  %v493 = vld [vmem:[#allocation4] sm:$0xff]
  %v494 = vld [vmem:[#allocation4 + $0x8] sm:$0xff]
  %v495 = vld [vmem:[#allocation4 + $0x10] sm:$0xff]
  %v496 = vld [vmem:[#allocation4 + $0x18] sm:$0xff]
  %v497 = vpack.c.bf16 %v491, %v491
  %v530 = vunpack.c.l.b16 %v459
  %v531 = vunpack.c.h.b16 %v459
  %v532 = vunpack.c.l.b16 %v460
  %v533 = vunpack.c.h.b16 %v460
  %v534 = vunpack.c.l.b16 %v461
  %v535 = vunpack.c.h.b16 %v461
  %v536 = vunpack.c.l.b16 %v462
  %v537 = vunpack.c.h.b16 %v462
  %v538 = vunpack.c.l.b16 %v463
  %v539 = vunpack.c.h.b16 %v463
  %v540 = vunpack.c.l.b16 %v464
  %v541 = vunpack.c.h.b16 %v464
  %v542 = vunpack.c.l.b16 %v465
  %v543 = vunpack.c.h.b16 %v465
  %v544 = vunpack.c.l.b16 %v466
  %v545 = vunpack.c.h.b16 %v466
  %v546 = vunpack.c.l.b16 %v467
  %v547 = vunpack.c.h.b16 %v467
  %v548 = vunpack.c.l.b16 %v468
  %v549 = vunpack.c.h.b16 %v468
  %v550 = vunpack.c.l.b16 %v469
  %v551 = vunpack.c.h.b16 %v469
  %v552 = vunpack.c.l.b16 %v470
  %v553 = vunpack.c.h.b16 %v470
  %v554 = vunpack.c.l.b16 %v471
  %v555 = vunpack.c.h.b16 %v471
  %v556 = vunpack.c.l.b16 %v472
  %v557 = vunpack.c.h.b16 %v472
  %v558 = vunpack.c.l.b16 %v473
  %v559 = vunpack.c.h.b16 %v473
  %v560 = vunpack.c.l.b16 %v474
  %v561 = vunpack.c.h.b16 %v474
  %v562 = vunpack.c.l.b16 %v475
  %v563 = vunpack.c.h.b16 %v475
  %v564 = vunpack.c.l.b16 %v476
  %v565 = vunpack.c.h.b16 %v476
  %v566 = vunpack.c.l.b16 %v477
  %v567 = vunpack.c.h.b16 %v477
  %v568 = vunpack.c.l.b16 %v478
  %v569 = vunpack.c.h.b16 %v478
  %v570 = vunpack.c.l.b16 %v479
  %v571 = vunpack.c.h.b16 %v479
  %v572 = vunpack.c.l.b16 %v480
  %v573 = vunpack.c.h.b16 %v480
  %v574 = vunpack.c.l.b16 %v481
  %v575 = vunpack.c.h.b16 %v481
  %v576 = vunpack.c.l.b16 %v482
  %v577 = vunpack.c.h.b16 %v482
  %v578 = vunpack.c.l.b16 %v483
  %v579 = vunpack.c.h.b16 %v483
  %v580 = vunpack.c.l.b16 %v484
  %v581 = vunpack.c.h.b16 %v484
  %v582 = vunpack.c.l.b16 %v485
  %v583 = vunpack.c.h.b16 %v485
  %v584 = vunpack.c.l.b16 %v486
  %v585 = vunpack.c.h.b16 %v486
  %v586 = vunpack.c.l.b16 %v487
  %v587 = vunpack.c.h.b16 %v487
  %v588 = vunpack.c.l.b16 %v488
  %v589 = vunpack.c.h.b16 %v488
  %v590 = vunpack.c.l.b16 %v489
  %v591 = vunpack.c.h.b16 %v489
  %v592 = vunpack.c.l.b16 %v490
  %v593 = vunpack.c.h.b16 %v490
  %v594 = vpack.c.b16 %v534, %v530
  %v595 = vpack.c.b16 %v535, %v531
  %v596 = vpack.c.b16 %v536, %v532
  %v597 = vpack.c.b16 %v537, %v533
  %v598 = vpack.c.b16 %v542, %v538
  %v599 = vpack.c.b16 %v543, %v539
  %v600 = vpack.c.b16 %v544, %v540
  %v601 = vpack.c.b16 %v545, %v541
  %v602 = vpack.c.b16 %v550, %v546
  %v603 = vpack.c.b16 %v551, %v547
  %v604 = vpack.c.b16 %v552, %v548
  %v605 = vpack.c.b16 %v553, %v549
  %v606 = vpack.c.b16 %v558, %v554
  %v607 = vpack.c.b16 %v559, %v555
  %v608 = vpack.c.b16 %v560, %v556
  %v609 = vpack.c.b16 %v561, %v557
  %v610 = vpack.c.b16 %v566, %v562
  %v611 = vpack.c.b16 %v567, %v563
  %v612 = vpack.c.b16 %v568, %v564
  %v613 = vpack.c.b16 %v569, %v565
  %v614 = vpack.c.b16 %v574, %v570
  %v615 = vpack.c.b16 %v575, %v571
  %v616 = vpack.c.b16 %v576, %v572
  %v617 = vpack.c.b16 %v577, %v573
  %v618 = vpack.c.b16 %v582, %v578
  %v619 = vpack.c.b16 %v583, %v579
  %v620 = vpack.c.b16 %v584, %v580
  %v621 = vpack.c.b16 %v585, %v581
  %v622 = vpack.c.b16 %v590, %v586
  %v623 = vpack.c.b16 %v591, %v587
  %v624 = vpack.c.b16 %v592, %v588
  %v625 = vpack.c.b16 %v593, %v589
  %658 = vmatprep.subr.bf16.mxu0 %v595
  %659 = vmatpush1.bf16.msra.mxu0 %v594
  %660 = vmatprep.subr.bf16.mxu0 %v599
  %661 = vmatpush1.bf16.msra.mxu0 %v598
  %662 = vmatprep.subr.bf16.mxu0 %v603
  %663 = vmatpush1.bf16.msra.mxu0 %v602
  %664 = vmatprep.subr.bf16.mxu0 %v607
  %665 = vmatpush1.bf16.msra.mxu0 %v606
  %666 = vmatprep.subr.bf16.mxu0 %v611
  %667 = vmatpush1.bf16.msra.mxu0 %v610
  %668 = vmatprep.subr.bf16.mxu0 %v615
  %669 = vmatpush1.bf16.msra.mxu0 %v614
  %670 = vmatprep.subr.bf16.mxu0 %v619
  %671 = vmatpush1.bf16.msra.mxu0 %v618
  %672 = vmatprep.subr.bf16.mxu0 %v623
  %673 = vmatpush1.bf16.msra.mxu0 %v622
  %674 = vmatprep.subr.bf16.mxu0 0
  %675 = vmatpush1.bf16.msra.mxu0 0
  %676 = vmatprep.subr.bf16.mxu0 0
  %677 = vmatpush1.bf16.msra.mxu0 0
  %678 = vmatprep.subr.bf16.mxu0 0
  %679 = vmatpush1.bf16.msra.mxu0 0
  %680 = vmatprep.subr.bf16.mxu0 0
  %681 = vmatpush1.bf16.msra.mxu0 0
  %682 = vmatprep.subr.bf16.mxu0 0
  %683 = vmatpush1.bf16.msra.mxu0 0
  %684 = vmatprep.subr.bf16.mxu0 0
  %685 = vmatpush1.bf16.msra.mxu0 0
  %686 = vmatprep.subr.bf16.mxu0 0
  %687 = vmatpush1.bf16.msra.mxu0 0
  %688 = vmatprep.subr.bf16.mxu0 0
  %689 = vmatpush1.bf16.msra.mxu0 0
  %690 = vmatprep.mubr.bf16.mxu0 0
  %691 = vmatmul.mubr.bf16.gmra.mrb[0].mxu0 %v497
  %v692 = vpop.f32.mrb[0].mxu0
  %v693 = vadd.f32 0.0, %v692
  %v694 = vpop.f32.mrb[0].mxu0
  %v695 = vadd.f32 0.0, %v694
  %v696 = vpop.f32.mrb[0].mxu0
  %v697 = vpop.f32.mrb[0].mxu0
  %698 = vdwg.mxu0
  %699 = vmatprep.subr.bf16.mxu0 %v597
  %700 = vmatpush1.bf16.msra.mxu0 %v596
  %701 = vmatprep.subr.bf16.mxu0 %v601
  %702 = vmatpush1.bf16.msra.mxu0 %v600
  %703 = vmatprep.subr.bf16.mxu0 %v605
  %704 = vmatpush1.bf16.msra.mxu0 %v604
  %705 = vmatprep.subr.bf16.mxu0 %v609
  %706 = vmatpush1.bf16.msra.mxu0 %v608
  %707 = vmatprep.subr.bf16.mxu0 %v613
  %708 = vmatpush1.bf16.msra.mxu0 %v612
  %709 = vmatprep.subr.bf16.mxu0 %v617
  %710 = vmatpush1.bf16.msra.mxu0 %v616
  %711 = vmatprep.subr.bf16.mxu0 %v621
  %712 = vmatpush1.bf16.msra.mxu0 %v620
  %713 = vmatprep.subr.bf16.mxu0 %v625
  %714 = vmatpush1.bf16.msra.mxu0 %v624
  %715 = vmatprep.subr.bf16.mxu0 0
  %716 = vmatpush1.bf16.msra.mxu0 0
  %717 = vmatprep.subr.bf16.mxu0 0
  %718 = vmatpush1.bf16.msra.mxu0 0
  %719 = vmatprep.subr.bf16.mxu0 0
  %720 = vmatpush1.bf16.msra.mxu0 0
  %721 = vmatprep.subr.bf16.mxu0 0
  %722 = vmatpush1.bf16.msra.mxu0 0
  %723 = vmatprep.subr.bf16.mxu0 0
  %724 = vmatpush1.bf16.msra.mxu0 0
  %725 = vmatprep.subr.bf16.mxu0 0
  %726 = vmatpush1.bf16.msra.mxu0 0
  %727 = vmatprep.subr.bf16.mxu0 0
  %728 = vmatpush1.bf16.msra.mxu0 0
  %729 = vmatprep.subr.bf16.mxu0 0
  %730 = vmatpush1.bf16.msra.mxu0 0
  %731 = vmatprep.mubr.bf16.mxu0 0
  %732 = vmatmul.mubr.bf16.gmra.mrb[0].mxu0 %v497
  %v733 = vpop.f32.mrb[0].mxu0
  %v734 = vadd.f32 0.0, %v733
  %v735 = vpop.f32.mrb[0].mxu0
  %v736 = vadd.f32 0.0, %v735
  %v737 = vpop.f32.mrb[0].mxu0
  %v738 = vpop.f32.mrb[0].mxu0
  %739 = vdwg.mxu0
  %v740 = vadd.f32 %v493, %v693
  %v741 = vadd.f32 %v494, %v695
  %v742 = vadd.f32 %v495, %v734
  %v743 = vadd.f32 %v496, %v736
  %v744 = vlaneseq
  %v745 = vshrl.u32 %v744, 7
  %v746 = vsub.s32 0, %v745
  %v747 = vlaneseq
  %v748 = vshrl.u32 %v747, 7
  %v749 = vsub.s32 0, %v748
  %v750 = vmul.f32 %v740, 0.5
  %v751 = vmul.f32 %v741, 0.5
  %v752 = vmul.f32 %v742, 1.0
  %v753 = vmul.f32 %v743, 0.5
  %v754 = vtanh.pop %v750
  %v755 = vtanh.pop %v751
  %v756 = vtanh.pop %v752
  %v757 = vtanh.pop %v753
  %v758 = vmul.f32 %v754, 0.5
  %v759 = vmul.f32 %v755, 0.5
  %v760 = vmul.f32 %v756, 1.0
  %v761 = vmul.f32 %v757, 0.5
  %v762 = vlaneseq
  %v763 = vshrl.u32 %v762, 7
  %v764 = vsub.s32 0, %v763
  %v765 = vadd.f32 %v758, 0.5
  %v766 = vadd.f32 %v759, 0.5
  %v767 = vadd.f32 %v760, 0.0
  %v768 = vadd.f32 %v761, 0.5
  %v769 = vmul.f32 %v766, %v492
  %v770 = vmul.f32 %v765, %v767
  %v771 = vadd.f32 %v769, %v770
  %v772 = vtanh.pop %v771
  %v773 = vmul.f32 %v768, %v772
  %v774 = vpack.c.bf16 %v773, %v773
  %v777 = vunpack.c.l.s4 1966171168
  %v778 = vunpack.c.0.s8 %v777
  %v779 = vlaneseq
  %v780 = vshrl.u32 %v779, 7
  %v781 = vsub.s32 %v778, %v780
  %v782 = vrot.slane %v774, %v781
  %v783 = vcombine.high %v782, %v782
  %v785 = vunpack.c.l.s4 1966171168
  %v786 = vunpack.c.0.s8 %v785
  %v787 = vlaneseq
  %v788 = vshrl.u32 %v787, 7
  %v789 = vsub.s32 %v786, %v788
  %v790 = vrot.slane %v782, %v789
  %v792 = vunpack.c.l.s4 1966171168
  %v793 = vunpack.c.0.s8 %v792
  %v794 = vlaneseq
  %v795 = vshrl.u32 %v794, 7
  %v796 = vsub.s32 %v793, %v795
  %v797 = vrot.slane %v783, %v796
  %v798 = vcombine.high %v790, %v790
  %v799 = vcombine.high %v797, %v797
  %v800 = vunpack.i.l.s16 %v790
  %v801 = vunpack.i.h.s16 %v790
  %v802 = vunpack.i.l.s16 %v797
  %v803 = vunpack.i.h.s16 %v797
  %v804 = vunpack.i.l.s16 %v798
  %v805 = vunpack.i.h.s16 %v798
  %v806 = vunpack.i.l.s16 %v799
  %v807 = vunpack.i.h.s16 %v799
  %v808 = vpack.i.b16 %v800, %v800
  %v809 = vpack.i.b16 %v801, %v801
  %v810 = vpack.i.b16 %v802, %v802
  %v811 = vpack.i.b16 %v803, %v803
  %v812 = vpack.i.b16 %v804, %v804
  %v813 = vpack.i.b16 %v805, %v805
  %v814 = vpack.i.b16 %v806, %v806
  %v815 = vpack.i.b16 %v807, %v807
  %v817 = vunpack.c.l.s4 286326784
  %v818 = vunpack.c.0.s8 %v817
  %v819 = vlaneseq
  %v820 = vshrl.u32 %v819, 7
  %v821 = vsub.s32 %v818, %v820
  %v822 = vrot.slane %v808, %v821
  %v824 = vunpack.c.l.s4 286326784
  %v825 = vunpack.c.0.s8 %v824
  %v826 = vlaneseq
  %v827 = vshrl.u32 %v826, 7
  %v828 = vsub.s32 %v825, %v827
  %v829 = vrot.slane %v809, %v828
  %v831 = vunpack.c.l.s4 286326784
  %v832 = vunpack.c.0.s8 %v831
  %v833 = vlaneseq
  %v834 = vshrl.u32 %v833, 7
  %v835 = vsub.s32 %v832, %v834
  %v836 = vrot.slane %v810, %v835
  %v838 = vunpack.c.l.s4 286326784
  %v839 = vunpack.c.0.s8 %v838
  %v840 = vlaneseq
  %v841 = vshrl.u32 %v840, 7
  %v842 = vsub.s32 %v839, %v841
  %v843 = vrot.slane %v811, %v842
  %v845 = vunpack.c.l.s4 286326784
  %v846 = vunpack.c.0.s8 %v845
  %v847 = vlaneseq
  %v848 = vshrl.u32 %v847, 7
  %v849 = vsub.s32 %v846, %v848
  %v850 = vrot.slane %v812, %v849
  %v852 = vunpack.c.l.s4 286326784
  %v853 = vunpack.c.0.s8 %v852
  %v854 = vlaneseq
  %v855 = vshrl.u32 %v854, 7
  %v856 = vsub.s32 %v853, %v855
  %v857 = vrot.slane %v813, %v856
  %v859 = vunpack.c.l.s4 286326784
  %v860 = vunpack.c.0.s8 %v859
  %v861 = vlaneseq
  %v862 = vshrl.u32 %v861, 7
  %v863 = vsub.s32 %v860, %v862
  %v864 = vrot.slane %v814, %v863
  %v866 = vunpack.c.l.s4 286326784
  %v867 = vunpack.c.0.s8 %v866
  %v868 = vlaneseq
  %v869 = vshrl.u32 %v868, 7
  %v870 = vsub.s32 %v867, %v869
  %v871 = vrot.slane %v815, %v870
  %vm880 = vcmask 1040384
  %vm881 = vsmask.f32 256
  %vm882 = vmand %vm880, %vm881
  %v883 = vld [vmem:[%s6] sm:$0x1]
  %v884 = vsel %vm882, %v822, %v883
  %885 = vst [vmem:[%s6] sm:$0x1] %v884
  %v886 = vld [vmem:[%s6 + $0x4] sm:$0x1]
  %v887 = vsel %vm882, %v829, %v886
  %888 = vst [vmem:[%s6 + $0x4] sm:$0x1] %v887
  %v889 = vld [vmem:[%s6 + $0x8] sm:$0x1]
  %v890 = vsel %vm882, %v836, %v889
  %891 = vst [vmem:[%s6 + $0x8] sm:$0x1] %v890
  %v892 = vld [vmem:[%s6 + $0xc] sm:$0x1]
  %v893 = vsel %vm882, %v843, %v892
  %894 = vst [vmem:[%s6 + $0xc] sm:$0x1] %v893
  %v895 = vld [vmem:[%s6 + $0x10] sm:$0x1]
  %v896 = vsel %vm882, %v850, %v895
  %897 = vst [vmem:[%s6 + $0x10] sm:$0x1] %v896
  %v898 = vld [vmem:[%s6 + $0x14] sm:$0x1]
  %v899 = vsel %vm882, %v857, %v898
  %900 = vst [vmem:[%s6 + $0x14] sm:$0x1] %v899
  %v901 = vld [vmem:[%s6 + $0x18] sm:$0x1]
  %v902 = vsel %vm882, %v864, %v901
  %903 = vst [vmem:[%s6 + $0x18] sm:$0x1] %v902
  %v904 = vld [vmem:[%s6 + $0x1c] sm:$0x1]
  %v905 = vsel %vm882, %v871, %v904
  %906 = vst [vmem:[%s6 + $0x1c] sm:$0x1] %v905
  %s907 = scalar_lea.vmem [#allocation4], 32
  %v908 = vld [vmem:[%s907] sm:$0xff]
  %v909 = vld [vmem:[%s907 + $0x8] sm:$0xff]
  %v910 = vld [vmem:[%s907 + $0x10] sm:$0xff]
  %v911 = vld [vmem:[%s907 + $0x18] sm:$0xff]
  %912 = vmatprep.subr.bf16.mxu0 %v595
  %913 = vmatpush1.bf16.msra.mxu0 %v594
  %914 = vmatprep.subr.bf16.mxu0 %v599
  %915 = vmatpush1.bf16.msra.mxu0 %v598
  %916 = vmatprep.subr.bf16.mxu0 %v603
  %917 = vmatpush1.bf16.msra.mxu0 %v602
  %918 = vmatprep.subr.bf16.mxu0 %v607
  %919 = vmatpush1.bf16.msra.mxu0 %v606
  %920 = vmatprep.subr.bf16.mxu0 %v611
  %921 = vmatpush1.bf16.msra.mxu0 %v610
  %922 = vmatprep.subr.bf16.mxu0 %v615
  %923 = vmatpush1.bf16.msra.mxu0 %v614
  %924 = vmatprep.subr.bf16.mxu0 %v619
  %925 = vmatpush1.bf16.msra.mxu0 %v618
  %926 = vmatprep.subr.bf16.mxu0 %v623
  %927 = vmatpush1.bf16.msra.mxu0 %v622
  %928 = vmatprep.subr.bf16.mxu0 0
  %929 = vmatpush1.bf16.msra.mxu0 0
  %930 = vmatprep.subr.bf16.mxu0 0
  %931 = vmatpush1.bf16.msra.mxu0 0
  %932 = vmatprep.subr.bf16.mxu0 0
  %933 = vmatpush1.bf16.msra.mxu0 0
  %934 = vmatprep.subr.bf16.mxu0 0
  %935 = vmatpush1.bf16.msra.mxu0 0
  %936 = vmatprep.subr.bf16.mxu0 0
  %937 = vmatpush1.bf16.msra.mxu0 0
  %938 = vmatprep.subr.bf16.mxu0 0
  %939 = vmatpush1.bf16.msra.mxu0 0
  %940 = vmatprep.subr.bf16.mxu0 0
  %941 = vmatpush1.bf16.msra.mxu0 0
  %942 = vmatprep.subr.bf16.mxu0 0
  %943 = vmatpush1.bf16.msra.mxu0 0
  %944 = vmatprep.mubr.bf16.mxu0 0
  %945 = vmatmul.mubr.bf16.gmra.mrb[0].mxu0 %v774
  %v946 = vpop.f32.mrb[0].mxu0
  %v947 = vadd.f32 0.0, %v946
  %v948 = vpop.f32.mrb[0].mxu0
  %v949 = vadd.f32 0.0, %v948
  %v950 = vpop.f32.mrb[0].mxu0
  %v951 = vpop.f32.mrb[0].mxu0
  %952 = vdwg.mxu0
  %953 = vmatprep.subr.bf16.mxu0 %v597
  %954 = vmatpush1.bf16.msra.mxu0 %v596
  %955 = vmatprep.subr.bf16.mxu0 %v601
  %956 = vmatpush1.bf16.msra.mxu0 %v600
  %957 = vmatprep.subr.bf16.mxu0 %v605
  %958 = vmatpush1.bf16.msra.mxu0 %v604
  %959 = vmatprep.subr.bf16.mxu0 %v609
  %960 = vmatpush1.bf16.msra.mxu0 %v608
  %961 = vmatprep.subr.bf16.mxu0 %v613
  %962 = vmatpush1.bf16.msra.mxu0 %v612
  %963 = vmatprep.subr.bf16.mxu0 %v617
  %964 = vmatpush1.bf16.msra.mxu0 %v616
  %965 = vmatprep.subr.bf16.mxu0 %v621
  %966 = vmatpush1.bf16.msra.mxu0 %v620
  %967 = vmatprep.subr.bf16.mxu0 %v625
  %968 = vmatpush1.bf16.msra.mxu0 %v624
  %969 = vmatprep.subr.bf16.mxu0 0
  %970 = vmatpush1.bf16.msra.mxu0 0
  %971 = vmatprep.subr.bf16.mxu0 0
  %972 = vmatpush1.bf16.msra.mxu0 0
  %973 = vmatprep.subr.bf16.mxu0 0
  %974 = vmatpush1.bf16.msra.mxu0 0
  %975 = vmatprep.subr.bf16.mxu0 0
  %976 = vmatpush1.bf16.msra.mxu0 0
  %977 = vmatprep.subr.bf16.mxu0 0
  %978 = vmatpush1.bf16.msra.mxu0 0
  %979 = vmatprep.subr.bf16.mxu0 0
  %980 = vmatpush1.bf16.msra.mxu0 0
  %981 = vmatprep.subr.bf16.mxu0 0
  %982 = vmatpush1.bf16.msra.mxu0 0
  %983 = vmatprep.subr.bf16.mxu0 0
  %984 = vmatpush1.bf16.msra.mxu0 0
  %985 = vmatprep.mubr.bf16.mxu0 0
  %986 = vmatmul.mubr.bf16.gmra.mrb[0].mxu0 %v774
  %v987 = vpop.f32.mrb[0].mxu0
  %v988 = vadd.f32 0.0, %v987
  %v989 = vpop.f32.mrb[0].mxu0
  %v990 = vadd.f32 0.0, %v989
  %v991 = vpop.f32.mrb[0].mxu0
  %v992 = vpop.f32.mrb[0].mxu0
  %993 = vdwg.mxu0
  %v994 = vadd.f32 %v908, %v947
  %v995 = vadd.f32 %v909, %v949
  %v996 = vadd.f32 %v910, %v988
  %v997 = vadd.f32 %v911, %v990
  %v998 = vmul.f32 %v994, 0.5
  %v999 = vmul.f32 %v995, 0.5
  %v1000 = vmul.f32 %v996, 1.0
  %v1001 = vmul.f32 %v997, 0.5
  %v1002 = vtanh.pop %v998
  %v1003 = vtanh.pop %v999
  %v1004 = vtanh.pop %v1000
  %v1005 = vtanh.pop %v1001
  %v1006 = vmul.f32 %v1002, 0.5
  %v1007 = vmul.f32 %v1003, 0.5
  %v1008 = vmul.f32 %v1004, 1.0
  %v1009 = vmul.f32 %v1005, 0.5
  %v1010 = vadd.f32 %v1006, 0.5
  %v1011 = vadd.f32 %v1007, 0.5
  %v1012 = vadd.f32 %v1008, 0.0
  %v1013 = vadd.f32 %v1009, 0.5
  %v1014 = vmul.f32 %v1011, %v771
  %v1015 = vmul.f32 %v1010, %v1012
  %v1016 = vadd.f32 %v1014, %v1015
  %v1017 = vtanh.pop %v1016
  %v1018 = vmul.f32 %v1013, %v1017
  %v1019 = vpack.c.bf16 %v1018, %v1018
  %v1022 = vunpack.c.l.s4 1966171168
  %v1023 = vunpack.c.0.s8 %v1022
  %v1024 = vlaneseq
  %v1025 = vshrl.u32 %v1024, 7
  %v1026 = vsub.s32 %v1023, %v1025
  %v1027 = vrot.slane %v1019, %v1026
  %v1028 = vcombine.high %v1027, %v1027
  %v1030 = vunpack.c.l.s4 1966171168
  %v1031 = vunpack.c.0.s8 %v1030
  %v1032 = vlaneseq
  %v1033 = vshrl.u32 %v1032, 7
  %v1034 = vsub.s32 %v1031, %v1033
  %v1035 = vrot.slane %v1027, %v1034
  %v1037 = vunpack.c.l.s4 1966171168
  %v1038 = vunpack.c.0.s8 %v1037
  %v1039 = vlaneseq
  %v1040 = vshrl.u32 %v1039, 7
  %v1041 = vsub.s32 %v1038, %v1040
  %v1042 = vrot.slane %v1028, %v1041
  %v1043 = vcombine.high %v1035, %v1035
  %v1044 = vcombine.high %v1042, %v1042
  %v1045 = vunpack.i.l.s16 %v1035
  %v1046 = vunpack.i.h.s16 %v1035
  %v1047 = vunpack.i.l.s16 %v1042
  %v1048 = vunpack.i.h.s16 %v1042
  %v1049 = vunpack.i.l.s16 %v1043
  %v1050 = vunpack.i.h.s16 %v1043
  %v1051 = vunpack.i.l.s16 %v1044
  %v1052 = vunpack.i.h.s16 %v1044
  %v1053 = vpack.i.b16 %v1045, %v1045
  %v1054 = vpack.i.b16 %v1046, %v1046
  %v1055 = vpack.i.b16 %v1047, %v1047
  %v1056 = vpack.i.b16 %v1048, %v1048
  %v1057 = vpack.i.b16 %v1049, %v1049
  %v1058 = vpack.i.b16 %v1050, %v1050
  %v1059 = vpack.i.b16 %v1051, %v1051
  %v1060 = vpack.i.b16 %v1052, %v1052
  %v1062 = vunpack.c.l.s4 286326784
  %v1063 = vunpack.c.0.s8 %v1062
  %v1064 = vlaneseq
  %v1065 = vshrl.u32 %v1064, 7
  %v1066 = vsub.s32 %v1063, %v1065
  %v1067 = vrot.slane %v1053, %v1066
  %v1069 = vunpack.c.l.s4 286326784
  %v1070 = vunpack.c.0.s8 %v1069
  %v1071 = vlaneseq
  %v1072 = vshrl.u32 %v1071, 7
  %v1073 = vsub.s32 %v1070, %v1072
  %v1074 = vrot.slane %v1054, %v1073
  %v1076 = vunpack.c.l.s4 286326784
  %v1077 = vunpack.c.0.s8 %v1076
  %v1078 = vlaneseq
  %v1079 = vshrl.u32 %v1078, 7
  %v1080 = vsub.s32 %v1077, %v1079
  %v1081 = vrot.slane %v1055, %v1080
  %v1083 = vunpack.c.l.s4 286326784
  %v1084 = vunpack.c.0.s8 %v1083
  %v1085 = vlaneseq
  %v1086 = vshrl.u32 %v1085, 7
  %v1087 = vsub.s32 %v1084, %v1086
  %v1088 = vrot.slane %v1056, %v1087
  %v1090 = vunpack.c.l.s4 286326784
  %v1091 = vunpack.c.0.s8 %v1090
  %v1092 = vlaneseq
  %v1093 = vshrl.u32 %v1092, 7
  %v1094 = vsub.s32 %v1091, %v1093
  %v1095 = vrot.slane %v1057, %v1094
  %v1097 = vunpack.c.l.s4 286326784
  %v1098 = vunpack.c.0.s8 %v1097
  %v1099 = vlaneseq
  %v1100 = vshrl.u32 %v1099, 7
  %v1101 = vsub.s32 %v1098, %v1100
  %v1102 = vrot.slane %v1058, %v1101
  %v1104 = vunpack.c.l.s4 286326784
  %v1105 = vunpack.c.0.s8 %v1104
  %v1106 = vlaneseq
  %v1107 = vshrl.u32 %v1106, 7
  %v1108 = vsub.s32 %v1105, %v1107
  %v1109 = vrot.slane %v1059, %v1108
  %v1111 = vunpack.c.l.s4 286326784
  %v1112 = vunpack.c.0.s8 %v1111
  %v1113 = vlaneseq
  %v1114 = vshrl.u32 %v1113, 7
  %v1115 = vsub.s32 %v1112, %v1114
  %v1116 = vrot.slane %v1060, %v1115
  %vm1125 = vsmask.f32 7938
  %vm1126 = vmand %vm880, %vm1125
  %v1127 = vld [vmem:[%s6] sm:$0x1]
  %v1128 = vsel %vm1126, %v1067, %v1127
  %1129 = vst [vmem:[%s6] sm:$0x1] %v1128
  %v1130 = vld [vmem:[%s6 + $0x4] sm:$0x1]
  %v1131 = vsel %vm1126, %v1074, %v1130
  %1132 = vst [vmem:[%s6 + $0x4] sm:$0x1] %v1131
  %v1133 = vld [vmem:[%s6 + $0x8] sm:$0x1]
  %v1134 = vsel %vm1126, %v1081, %v1133
  %1135 = vst [vmem:[%s6 + $0x8] sm:$0x1] %v1134
  %v1136 = vld [vmem:[%s6 + $0xc] sm:$0x1]
  %v1137 = vsel %vm1126, %v1088, %v1136
  %1138 = vst [vmem:[%s6 + $0xc] sm:$0x1] %v1137
  %v1139 = vld [vmem:[%s6 + $0x10] sm:$0x1]
  %v1140 = vsel %vm1126, %v1095, %v1139
  %1141 = vst [vmem:[%s6 + $0x10] sm:$0x1] %v1140
  %v1142 = vld [vmem:[%s6 + $0x14] sm:$0x1]
  %v1143 = vsel %vm1126, %v1102, %v1142
  %1144 = vst [vmem:[%s6 + $0x14] sm:$0x1] %v1143
  %v1145 = vld [vmem:[%s6 + $0x18] sm:$0x1]
  %v1146 = vsel %vm1126, %v1109, %v1145
  %1147 = vst [vmem:[%s6 + $0x18] sm:$0x1] %v1146
  %v1148 = vld [vmem:[%s6 + $0x1c] sm:$0x1]
  %v1149 = vsel %vm1126, %v1116, %v1148
  %1150 = vst [vmem:[%s6 + $0x1c] sm:$0x1] %v1149
  %s1151 = scalar_lea.vmem [#allocation4], 64
  %v1152 = vld [vmem:[%s1151] sm:$0xff]
  %v1153 = vld [vmem:[%s1151 + $0x8] sm:$0xff]
  %v1154 = vld [vmem:[%s1151 + $0x10] sm:$0xff]
  %v1155 = vld [vmem:[%s1151 + $0x18] sm:$0xff]
  %1156 = vmatprep.subr.bf16.mxu0 %v595
  %1157 = vmatpush1.bf16.msra.mxu0 %v594
  %1158 = vmatprep.subr.bf16.mxu0 %v599
  %1159 = vmatpush1.bf16.msra.mxu0 %v598
  %1160 = vmatprep.subr.bf16.mxu0 %v603
  %1161 = vmatpush1.bf16.msra.mxu0 %v602
  %1162 = vmatprep.subr.bf16.mxu0 %v607
  %1163 = vmatpush1.bf16.msra.mxu0 %v606
  %1164 = vmatprep.subr.bf16.mxu0 %v611
  %1165 = vmatpush1.bf16.msra.mxu0 %v610
  %1166 = vmatprep.subr.bf16.mxu0 %v615
  %1167 = vmatpush1.bf16.msra.mxu0 %v614
  %1168 = vmatprep.subr.bf16.mxu0 %v619
  %1169 = vmatpush1.bf16.msra.mxu0 %v618
  %1170 = vmatprep.subr.bf16.mxu0 %v623
  %1171 = vmatpush1.bf16.msra.mxu0 %v622
  %1172 = vmatprep.subr.bf16.mxu0 0
  %1173 = vmatpush1.bf16.msra.mxu0 0
  %1174 = vmatprep.subr.bf16.mxu0 0
  %1175 = vmatpush1.bf16.msra.mxu0 0
  %1176 = vmatprep.subr.bf16.mxu0 0
  %1177 = vmatpush1.bf16.msra.mxu0 0
  %1178 = vmatprep.subr.bf16.mxu0 0
  %1179 = vmatpush1.bf16.msra.mxu0 0
  %1180 = vmatprep.subr.bf16.mxu0 0
  %1181 = vmatpush1.bf16.msra.mxu0 0
  %1182 = vmatprep.subr.bf16.mxu0 0
  %1183 = vmatpush1.bf16.msra.mxu0 0
  %1184 = vmatprep.subr.bf16.mxu0 0
  %1185 = vmatpush1.bf16.msra.mxu0 0
  %1186 = vmatprep.subr.bf16.mxu0 0
  %1187 = vmatpush1.bf16.msra.mxu0 0
  %1188 = vmatprep.mubr.bf16.mxu0 0
  %1189 = vmatmul.mubr.bf16.gmra.mrb[0].mxu0 %v1019
  %v1190 = vpop.f32.mrb[0].mxu0
  %v1191 = vadd.f32 0.0, %v1190
  %v1192 = vpop.f32.mrb[0].mxu0
  %v1193 = vadd.f32 0.0, %v1192
  %v1194 = vpop.f32.mrb[0].mxu0
  %v1195 = vpop.f32.mrb[0].mxu0
  %1196 = vdwg.mxu0
  %1197 = vmatprep.subr.bf16.mxu0 %v597
  %1198 = vmatpush1.bf16.msra.mxu0 %v596
  %1199 = vmatprep.subr.bf16.mxu0 %v601
  %1200 = vmatpush1.bf16.msra.mxu0 %v600
  %1201 = vmatprep.subr.bf16.mxu0 %v605
  %1202 = vmatpush1.bf16.msra.mxu0 %v604
  %1203 = vmatprep.subr.bf16.mxu0 %v609
  %1204 = vmatpush1.bf16.msra.mxu0 %v608
  %1205 = vmatprep.subr.bf16.mxu0 %v613
  %1206 = vmatpush1.bf16.msra.mxu0 %v612
  %1207 = vmatprep.subr.bf16.mxu0 %v617
  %1208 = vmatpush1.bf16.msra.mxu0 %v616
  %1209 = vmatprep.subr.bf16.mxu0 %v621
  %1210 = vmatpush1.bf16.msra.mxu0 %v620
  %1211 = vmatprep.subr.bf16.mxu0 %v625
  %1212 = vmatpush1.bf16.msra.mxu0 %v624
  %1213 = vmatprep.subr.bf16.mxu0 0
  %1214 = vmatpush1.bf16.msra.mxu0 0
  %1215 = vmatprep.subr.bf16.mxu0 0
  %1216 = vmatpush1.bf16.msra.mxu0 0
  %1217 = vmatprep.subr.bf16.mxu0 0
  %1218 = vmatpush1.bf16.msra.mxu0 0
  %1219 = vmatprep.subr.bf16.mxu0 0
  %1220 = vmatpush1.bf16.msra.mxu0 0
  %1221 = vmatprep.subr.bf16.mxu0 0
  %1222 = vmatpush1.bf16.msra.mxu0 0
  %1223 = vmatprep.subr.bf16.mxu0 0
  %1224 = vmatpush1.bf16.msra.mxu0 0
  %1225 = vmatprep.subr.bf16.mxu0 0
  %1226 = vmatpush1.bf16.msra.mxu0 0
  %1227 = vmatprep.subr.bf16.mxu0 0
  %1228 = vmatpush1.bf16.msra.mxu0 0
  %1229 = vmatprep.mubr.bf16.mxu0 0
  %1230 = vmatmul.mubr.bf16.gmra.mrb[0].mxu0 %v1019
  %v1231 = vpop.f32.mrb[0].mxu0
  %v1232 = vadd.f32 0.0, %v1231
  %v1233 = vpop.f32.mrb[0].mxu0
  %v1234 = vadd.f32 0.0, %v1233
  %v1235 = vpop.f32.mrb[0].mxu0
  %v1236 = vpop.f32.mrb[0].mxu0
  %1237 = vdwg.mxu0
  %v1238 = vadd.f32 %v1152, %v1191
  %v1239 = vadd.f32 %v1153, %v1193
  %v1240 = vadd.f32 %v1154, %v1232
  %v1241 = vadd.f32 %v1155, %v1234
  %v1242 = vmul.f32 %v1238, 0.5
  %v1243 = vmul.f32 %v1239, 0.5
  %v1244 = vmul.f32 %v1240, 1.0
  %v1245 = vmul.f32 %v1241, 0.5
  %v1246 = vtanh.pop %v1242
  %v1247 = vtanh.pop %v1243
  %v1248 = vtanh.pop %v1244
  %v1249 = vtanh.pop %v1245
  %v1250 = vmul.f32 %v1246, 0.5
  %v1251 = vmul.f32 %v1247, 0.5
  %v1252 = vmul.f32 %v1248, 1.0
  %v1253 = vmul.f32 %v1249, 0.5
  %v1254 = vadd.f32 %v1250, 0.5
  %v1255 = vadd.f32 %v1251, 0.5
  %v1256 = vadd.f32 %v1252, 0.0
  %v1257 = vadd.f32 %v1253, 0.5
  %v1258 = vmul.f32 %v1255, %v1016
  %v1259 = vmul.f32 %v1254, %v1256
  %v1260 = vadd.f32 %v1258, %v1259
  %v1261 = vtanh.pop %v1260
  %v1262 = vmul.f32 %v1257, %v1261
  %v1263 = vpack.c.bf16 %v1262, %v1262
  %v1266 = vunpack.c.l.s4 1966171168
  %v1267 = vunpack.c.0.s8 %v1266
  %v1268 = vlaneseq
  %v1269 = vshrl.u32 %v1268, 7
  %v1270 = vsub.s32 %v1267, %v1269
  %v1271 = vrot.slane %v1263, %v1270
  %v1272 = vcombine.high %v1271, %v1271
  %v1274 = vunpack.c.l.s4 1966171168
  %v1275 = vunpack.c.0.s8 %v1274
  %v1276 = vlaneseq
  %v1277 = vshrl.u32 %v1276, 7
  %v1278 = vsub.s32 %v1275, %v1277
  %v1279 = vrot.slane %v1271, %v1278
  %v1281 = vunpack.c.l.s4 1966171168
  %v1282 = vunpack.c.0.s8 %v1281
  %v1283 = vlaneseq
  %v1284 = vshrl.u32 %v1283, 7
  %v1285 = vsub.s32 %v1282, %v1284
  %v1286 = vrot.slane %v1272, %v1285
  %v1287 = vcombine.high %v1279, %v1279
  %v1288 = vcombine.high %v1286, %v1286
  %v1289 = vunpack.i.l.s16 %v1279
  %v1290 = vunpack.i.h.s16 %v1279
  %v1291 = vunpack.i.l.s16 %v1286
  %v1292 = vunpack.i.h.s16 %v1286
  %v1293 = vunpack.i.l.s16 %v1287
  %v1294 = vunpack.i.h.s16 %v1287
  %v1295 = vunpack.i.l.s16 %v1288
  %v1296 = vunpack.i.h.s16 %v1288
  %v1297 = vpack.i.b16 %v1289, %v1289
  %v1298 = vpack.i.b16 %v1290, %v1290
  %v1299 = vpack.i.b16 %v1291, %v1291
  %v1300 = vpack.i.b16 %v1292, %v1292
  %v1301 = vpack.i.b16 %v1293, %v1293
  %v1302 = vpack.i.b16 %v1294, %v1294
  %v1303 = vpack.i.b16 %v1295, %v1295
  %v1304 = vpack.i.b16 %v1296, %v1296
  %v1306 = vunpack.c.l.s4 286326784
  %v1307 = vunpack.c.0.s8 %v1306
  %v1308 = vlaneseq
  %v1309 = vshrl.u32 %v1308, 7
  %v1310 = vsub.s32 %v1307, %v1309
  %v1311 = vrot.slane %v1297, %v1310
  %v1313 = vunpack.c.l.s4 286326784
  %v1314 = vunpack.c.0.s8 %v1313
  %v1315 = vlaneseq
  %v1316 = vshrl.u32 %v1315, 7
  %v1317 = vsub.s32 %v1314, %v1316
  %v1318 = vrot.slane %v1298, %v1317
  %v1320 = vunpack.c.l.s4 286326784
  %v1321 = vunpack.c.0.s8 %v1320
  %v1322 = vlaneseq
  %v1323 = vshrl.u32 %v1322, 7
  %v1324 = vsub.s32 %v1321, %v1323
  %v1325 = vrot.slane %v1299, %v1324
  %v1327 = vunpack.c.l.s4 286326784
  %v1328 = vunpack.c.0.s8 %v1327
  %v1329 = vlaneseq
  %v1330 = vshrl.u32 %v1329, 7
  %v1331 = vsub.s32 %v1328, %v1330
  %v1332 = vrot.slane %v1300, %v1331
  %v1334 = vunpack.c.l.s4 286326784
  %v1335 = vunpack.c.0.s8 %v1334
  %v1336 = vlaneseq
  %v1337 = vshrl.u32 %v1336, 7
  %v1338 = vsub.s32 %v1335, %v1337
  %v1339 = vrot.slane %v1301, %v1338
  %v1341 = vunpack.c.l.s4 286326784
  %v1342 = vunpack.c.0.s8 %v1341
  %v1343 = vlaneseq
  %v1344 = vshrl.u32 %v1343, 7
  %v1345 = vsub.s32 %v1342, %v1344
  %v1346 = vrot.slane %v1302, %v1345
  %v1348 = vunpack.c.l.s4 286326784
  %v1349 = vunpack.c.0.s8 %v1348
  %v1350 = vlaneseq
  %v1351 = vshrl.u32 %v1350, 7
  %v1352 = vsub.s32 %v1349, %v1351
  %v1353 = vrot.slane %v1303, %v1352
  %v1355 = vunpack.c.l.s4 286326784
  %v1356 = vunpack.c.0.s8 %v1355
  %v1357 = vlaneseq
  %v1358 = vshrl.u32 %v1357, 7
  %v1359 = vsub.s32 %v1356, %v1358
  %v1360 = vrot.slane %v1304, %v1359
  %vm1369 = vcmask 1041409
  %vm1370 = vsmask.f32 1280
  %vm1371 = vmand %vm1369, %vm1370
  %v1372 = vld [vmem:[%s6] sm:$0x2]
  %v1373 = vsel %vm1371, %v1311, %v1372
  %1374 = vst [vmem:[%s6] sm:$0x2] %v1373
  %v1375 = vld [vmem:[%s6 + $0x4] sm:$0x2]
  %v1376 = vsel %vm1371, %v1318, %v1375
  %1377 = vst [vmem:[%s6 + $0x4] sm:$0x2] %v1376
  %v1378 = vld [vmem:[%s6 + $0x8] sm:$0x2]
  %v1379 = vsel %vm1371, %v1325, %v1378
  %1380 = vst [vmem:[%s6 + $0x8] sm:$0x2] %v1379
  %v1381 = vld [vmem:[%s6 + $0xc] sm:$0x2]
  %v1382 = vsel %vm1371, %v1332, %v1381
  %1383 = vst [vmem:[%s6 + $0xc] sm:$0x2] %v1382
  %v1384 = vld [vmem:[%s6 + $0x10] sm:$0x2]
  %v1385 = vsel %vm1371, %v1339, %v1384
  %1386 = vst [vmem:[%s6 + $0x10] sm:$0x2] %v1385
  %v1387 = vld [vmem:[%s6 + $0x14] sm:$0x2]
  %v1388 = vsel %vm1371, %v1346, %v1387
  %1389 = vst [vmem:[%s6 + $0x14] sm:$0x2] %v1388
  %v1390 = vld [vmem:[%s6 + $0x18] sm:$0x2]
  %v1391 = vsel %vm1371, %v1353, %v1390
  %1392 = vst [vmem:[%s6 + $0x18] sm:$0x2] %v1391
  %v1393 = vld [vmem:[%s6 + $0x1c] sm:$0x2]
  %v1394 = vsel %vm1371, %v1360, %v1393
  %1395 = vst [vmem:[%s6 + $0x1c] sm:$0x2] %v1394
  %s1396 = scalar_lea.vmem [#allocation4], 96
  %v1397 = vld [vmem:[%s1396] sm:$0xff]
  %v1398 = vld [vmem:[%s1396 + $0x8] sm:$0xff]
  %v1399 = vld [vmem:[%s1396 + $0x10] sm:$0xff]
  %v1400 = vld [vmem:[%s1396 + $0x18] sm:$0xff]
  %1401 = vmatprep.subr.bf16.mxu0 %v595
  %1402 = vmatpush1.bf16.msra.mxu0 %v594
  %1403 = vmatprep.subr.bf16.mxu0 %v599
  %1404 = vmatpush1.bf16.msra.mxu0 %v598
  %1405 = vmatprep.subr.bf16.mxu0 %v603
  %1406 = vmatpush1.bf16.msra.mxu0 %v602
  %1407 = vmatprep.subr.bf16.mxu0 %v607
  %1408 = vmatpush1.bf16.msra.mxu0 %v606
  %1409 = vmatprep.subr.bf16.mxu0 %v611
  %1410 = vmatpush1.bf16.msra.mxu0 %v610
  %1411 = vmatprep.subr.bf16.mxu0 %v615
  %1412 = vmatpush1.bf16.msra.mxu0 %v614
  %1413 = vmatprep.subr.bf16.mxu0 %v619
  %1414 = vmatpush1.bf16.msra.mxu0 %v618
  %1415 = vmatprep.subr.bf16.mxu0 %v623
  %1416 = vmatpush1.bf16.msra.mxu0 %v622
  %1417 = vmatprep.subr.bf16.mxu0 0
  %1418 = vmatpush1.bf16.msra.mxu0 0
  %1419 = vmatprep.subr.bf16.mxu0 0
  %1420 = vmatpush1.bf16.msra.mxu0 0
  %1421 = vmatprep.subr.bf16.mxu0 0
  %1422 = vmatpush1.bf16.msra.mxu0 0
  %1423 = vmatprep.subr.bf16.mxu0 0
  %1424 = vmatpush1.bf16.msra.mxu0 0
  %1425 = vmatprep.subr.bf16.mxu0 0
  %1426 = vmatpush1.bf16.msra.mxu0 0
  %1427 = vmatprep.subr.bf16.mxu0 0
  %1428 = vmatpush1.bf16.msra.mxu0 0
  %1429 = vmatprep.subr.bf16.mxu0 0
  %1430 = vmatpush1.bf16.msra.mxu0 0
  %1431 = vmatprep.subr.bf16.mxu0 0
  %1432 = vmatpush1.bf16.msra.mxu0 0
  %1433 = vmatprep.mubr.bf16.mxu0 0
  %1434 = vmatmul.mubr.bf16.gmra.mrb[0].mxu0 %v1263
  %v1435 = vpop.f32.mrb[0].mxu0
  %v1436 = vadd.f32 0.0, %v1435
  %v1437 = vpop.f32.mrb[0].mxu0
  %v1438 = vadd.f32 0.0, %v1437
  %v1439 = vpop.f32.mrb[0].mxu0
  %v1440 = vpop.f32.mrb[0].mxu0
  %1441 = vdwg.mxu0
  %1442 = vmatprep.subr.bf16.mxu0 %v597
  %1443 = vmatpush1.bf16.msra.mxu0 %v596
  %1444 = vmatprep.subr.bf16.mxu0 %v601
  %1445 = vmatpush1.bf16.msra.mxu0 %v600
  %1446 = vmatprep.subr.bf16.mxu0 %v605
  %1447 = vmatpush1.bf16.msra.mxu0 %v604
  %1448 = vmatprep.subr.bf16.mxu0 %v609
  %1449 = vmatpush1.bf16.msra.mxu0 %v608
  %1450 = vmatprep.subr.bf16.mxu0 %v613
  %1451 = vmatpush1.bf16.msra.mxu0 %v612
  %1452 = vmatprep.subr.bf16.mxu0 %v617
  %1453 = vmatpush1.bf16.msra.mxu0 %v616
  %1454 = vmatprep.subr.bf16.mxu0 %v621
  %1455 = vmatpush1.bf16.msra.mxu0 %v620
  %1456 = vmatprep.subr.bf16.mxu0 %v625
  %1457 = vmatpush1.bf16.msra.mxu0 %v624
  %1458 = vmatprep.subr.bf16.mxu0 0
  %1459 = vmatpush1.bf16.msra.mxu0 0
  %1460 = vmatprep.subr.bf16.mxu0 0
  %1461 = vmatpush1.bf16.msra.mxu0 0
  %1462 = vmatprep.subr.bf16.mxu0 0
  %1463 = vmatpush1.bf16.msra.mxu0 0
  %1464 = vmatprep.subr.bf16.mxu0 0
  %1465 = vmatpush1.bf16.msra.mxu0 0
  %1466 = vmatprep.subr.bf16.mxu0 0
  %1467 = vmatpush1.bf16.msra.mxu0 0
  %1468 = vmatprep.subr.bf16.mxu0 0
  %1469 = vmatpush1.bf16.msra.mxu0 0
  %1470 = vmatprep.subr.bf16.mxu0 0
  %1471 = vmatpush1.bf16.msra.mxu0 0
  %1472 = vmatprep.subr.bf16.mxu0 0
  %1473 = vmatpush1.bf16.msra.mxu0 0
  %1474 = vmatprep.mubr.bf16.mxu0 0
  %1475 = vmatmul.mubr.bf16.gmra.mrb[0].mxu0 %v1263
  %v1476 = vpop.f32.mrb[0].mxu0
  %v1477 = vadd.f32 0.0, %v1476
  %v1478 = vpop.f32.mrb[0].mxu0
  %v1479 = vadd.f32 0.0, %v1478
  %v1480 = vpop.f32.mrb[0].mxu0
  %v1481 = vpop.f32.mrb[0].mxu0
  %1482 = vdwg.mxu0
  %v1483 = vadd.f32 %v1397, %v1436
  %v1484 = vadd.f32 %v1398, %v1438
  %v1485 = vadd.f32 %v1399, %v1477
  %v1486 = vadd.f32 %v1400, %v1479
  %v1487 = vmul.f32 %v1483, 0.5
  %v1488 = vmul.f32 %v1484, 0.5
  %v1489 = vmul.f32 %v1485, 1.0
  %v1490 = vmul.f32 %v1486, 0.5
  %v1491 = vtanh.pop %v1487
  %v1492 = vtanh.pop %v1488
  %v1493 = vtanh.pop %v1489
  %v1494 = vtanh.pop %v1490
  %v1495 = vmul.f32 %v1491, 0.5
  %v1496 = vmul.f32 %v1492, 0.5
  %v1497 = vmul.f32 %v1493, 1.0
  %v1498 = vmul.f32 %v1494, 0.5
  %v1499 = vadd.f32 %v1495, 0.5
  %v1500 = vadd.f32 %v1496, 0.5
  %v1501 = vadd.f32 %v1497, 0.0
  %v1502 = vadd.f32 %v1498, 0.5
  %v1503 = vmul.f32 %v1500, %v1260
  %v1504 = vmul.f32 %v1499, %v1501
  %v1505 = vadd.f32 %v1503, %v1504
  %v1506 = vtanh.pop %v1505
  %v1507 = vmul.f32 %v1502, %v1506
  %v1508 = vpack.c.bf16 %v1507, %v1507
  %v1511 = vunpack.c.l.s4 1966171168
  %v1512 = vunpack.c.0.s8 %v1511
  %v1513 = vlaneseq
  %v1514 = vshrl.u32 %v1513, 7
  %v1515 = vsub.s32 %v1512, %v1514
  %v1516 = vrot.slane %v1508, %v1515
  %v1517 = vcombine.high %v1516, %v1516
  %v1519 = vunpack.c.l.s4 1966171168
  %v1520 = vunpack.c.0.s8 %v1519
  %v1521 = vlaneseq
  %v1522 = vshrl.u32 %v1521, 7
  %v1523 = vsub.s32 %v1520, %v1522
  %v1524 = vrot.slane %v1516, %v1523
  %v1526 = vunpack.c.l.s4 1966171168
  %v1527 = vunpack.c.0.s8 %v1526
  %v1528 = vlaneseq
  %v1529 = vshrl.u32 %v1528, 7
  %v1530 = vsub.s32 %v1527, %v1529
  %v1531 = vrot.slane %v1517, %v1530
  %v1532 = vcombine.high %v1524, %v1524
  %v1533 = vcombine.high %v1531, %v1531
  %v1534 = vunpack.i.l.s16 %v1524
  %v1535 = vunpack.i.h.s16 %v1524
  %v1536 = vunpack.i.l.s16 %v1531
  %v1537 = vunpack.i.h.s16 %v1531
  %v1538 = vunpack.i.l.s16 %v1532
  %v1539 = vunpack.i.h.s16 %v1532
  %v1540 = vunpack.i.l.s16 %v1533
  %v1541 = vunpack.i.h.s16 %v1533
  %v1542 = vpack.i.b16 %v1534, %v1534
  %v1543 = vpack.i.b16 %v1535, %v1535
  %v1544 = vpack.i.b16 %v1536, %v1536
  %v1545 = vpack.i.b16 %v1537, %v1537
  %v1546 = vpack.i.b16 %v1538, %v1538
  %v1547 = vpack.i.b16 %v1539, %v1539
  %v1548 = vpack.i.b16 %v1540, %v1540
  %v1549 = vpack.i.b16 %v1541, %v1541
  %v1551 = vunpack.c.l.s4 286326784
  %v1552 = vunpack.c.0.s8 %v1551
  %v1553 = vlaneseq
  %v1554 = vshrl.u32 %v1553, 7
  %v1555 = vsub.s32 %v1552, %v1554
  %v1556 = vrot.slane %v1542, %v1555
  %v1558 = vunpack.c.l.s4 286326784
  %v1559 = vunpack.c.0.s8 %v1558
  %v1560 = vlaneseq
  %v1561 = vshrl.u32 %v1560, 7
  %v1562 = vsub.s32 %v1559, %v1561
  %v1563 = vrot.slane %v1543, %v1562
  %v1565 = vunpack.c.l.s4 286326784
  %v1566 = vunpack.c.0.s8 %v1565
  %v1567 = vlaneseq
  %v1568 = vshrl.u32 %v1567, 7
  %v1569 = vsub.s32 %v1566, %v1568
  %v1570 = vrot.slane %v1544, %v1569
  %v1572 = vunpack.c.l.s4 286326784
  %v1573 = vunpack.c.0.s8 %v1572
  %v1574 = vlaneseq
  %v1575 = vshrl.u32 %v1574, 7
  %v1576 = vsub.s32 %v1573, %v1575
  %v1577 = vrot.slane %v1545, %v1576
  %v1579 = vunpack.c.l.s4 286326784
  %v1580 = vunpack.c.0.s8 %v1579
  %v1581 = vlaneseq
  %v1582 = vshrl.u32 %v1581, 7
  %v1583 = vsub.s32 %v1580, %v1582
  %v1584 = vrot.slane %v1546, %v1583
  %v1586 = vunpack.c.l.s4 286326784
  %v1587 = vunpack.c.0.s8 %v1586
  %v1588 = vlaneseq
  %v1589 = vshrl.u32 %v1588, 7
  %v1590 = vsub.s32 %v1587, %v1589
  %v1591 = vrot.slane %v1547, %v1590
  %v1593 = vunpack.c.l.s4 286326784
  %v1594 = vunpack.c.0.s8 %v1593
  %v1595 = vlaneseq
  %v1596 = vshrl.u32 %v1595, 7
  %v1597 = vsub.s32 %v1594, %v1596
  %v1598 = vrot.slane %v1548, %v1597
  %v1600 = vunpack.c.l.s4 286326784
  %v1601 = vunpack.c.0.s8 %v1600
  %v1602 = vlaneseq
  %v1603 = vshrl.u32 %v1602, 7
  %v1604 = vsub.s32 %v1601, %v1603
  %v1605 = vrot.slane %v1549, %v1604
  %vm1614 = vsmask.f32 7942
  %vm1615 = vmand %vm1369, %vm1614
  %v1616 = vld [vmem:[%s6] sm:$0x2]
  %v1617 = vsel %vm1615, %v1556, %v1616
  %1618 = vst [vmem:[%s6] sm:$0x2] %v1617
  %v1619 = vld [vmem:[%s6 + $0x4] sm:$0x2]
  %v1620 = vsel %vm1615, %v1563, %v1619
  %1621 = vst [vmem:[%s6 + $0x4] sm:$0x2] %v1620
  %v1622 = vld [vmem:[%s6 + $0x8] sm:$0x2]
  %v1623 = vsel %vm1615, %v1570, %v1622
  %1624 = vst [vmem:[%s6 + $0x8] sm:$0x2] %v1623
  %v1625 = vld [vmem:[%s6 + $0xc] sm:$0x2]
  %v1626 = vsel %vm1615, %v1577, %v1625
  %1627 = vst [vmem:[%s6 + $0xc] sm:$0x2] %v1626
  %v1628 = vld [vmem:[%s6 + $0x10] sm:$0x2]
  %v1629 = vsel %vm1615, %v1584, %v1628
  %1630 = vst [vmem:[%s6 + $0x10] sm:$0x2] %v1629
  %v1631 = vld [vmem:[%s6 + $0x14] sm:$0x2]
  %v1632 = vsel %vm1615, %v1591, %v1631
  %1633 = vst [vmem:[%s6 + $0x14] sm:$0x2] %v1632
  %v1634 = vld [vmem:[%s6 + $0x18] sm:$0x2]
  %v1635 = vsel %vm1615, %v1598, %v1634
  %1636 = vst [vmem:[%s6 + $0x18] sm:$0x2] %v1635
  %v1637 = vld [vmem:[%s6 + $0x1c] sm:$0x2]
  %v1638 = vsel %vm1615, %v1605, %v1637
  %1639 = vst [vmem:[%s6 + $0x1c] sm:$0x2] %v1638
  %s1640 = scalar_lea.vmem [#allocation4], 128
  %v1641 = vld [vmem:[%s1640] sm:$0xff]
  %v1642 = vld [vmem:[%s1640 + $0x8] sm:$0xff]
  %v1643 = vld [vmem:[%s1640 + $0x10] sm:$0xff]
  %v1644 = vld [vmem:[%s1640 + $0x18] sm:$0xff]
  %1645 = vmatprep.subr.bf16.mxu0 %v595
  %1646 = vmatpush1.bf16.msra.mxu0 %v594
  %1647 = vmatprep.subr.bf16.mxu0 %v599
  %1648 = vmatpush1.bf16.msra.mxu0 %v598
  %1649 = vmatprep.subr.bf16.mxu0 %v603
  %1650 = vmatpush1.bf16.msra.mxu0 %v602
  %1651 = vmatprep.subr.bf16.mxu0 %v607
  %1652 = vmatpush1.bf16.msra.mxu0 %v606
  %1653 = vmatprep.subr.bf16.mxu0 %v611
  %1654 = vmatpush1.bf16.msra.mxu0 %v610
  %1655 = vmatprep.subr.bf16.mxu0 %v615
  %1656 = vmatpush1.bf16.msra.mxu0 %v614
  %1657 = vmatprep.subr.bf16.mxu0 %v619
  %1658 = vmatpush1.bf16.msra.mxu0 %v618
  %1659 = vmatprep.subr.bf16.mxu0 %v623
  %1660 = vmatpush1.bf16.msra.mxu0 %v622
  %1661 = vmatprep.subr.bf16.mxu0 0
  %1662 = vmatpush1.bf16.msra.mxu0 0
  %1663 = vmatprep.subr.bf16.mxu0 0
  %1664 = vmatpush1.bf16.msra.mxu0 0
  %1665 = vmatprep.subr.bf16.mxu0 0
  %1666 = vmatpush1.bf16.msra.mxu0 0
  %1667 = vmatprep.subr.bf16.mxu0 0
  %1668 = vmatpush1.bf16.msra.mxu0 0
  %1669 = vmatprep.subr.bf16.mxu0 0
  %1670 = vmatpush1.bf16.msra.mxu0 0
  %1671 = vmatprep.subr.bf16.mxu0 0
  %1672 = vmatpush1.bf16.msra.mxu0 0
  %1673 = vmatprep.subr.bf16.mxu0 0
  %1674 = vmatpush1.bf16.msra.mxu0 0
  %1675 = vmatprep.subr.bf16.mxu0 0
  %1676 = vmatpush1.bf16.msra.mxu0 0
  %1677 = vmatprep.mubr.bf16.mxu0 0
  %1678 = vmatmul.mubr.bf16.gmra.mrb[0].mxu0 %v1508
  %v1679 = vpop.f32.mrb[0].mxu0
  %v1680 = vadd.f32 0.0, %v1679
  %v1681 = vpop.f32.mrb[0].mxu0
  %v1682 = vadd.f32 0.0, %v1681
  %v1683 = vpop.f32.mrb[0].mxu0
  %v1684 = vpop.f32.mrb[0].mxu0
  %1685 = vdwg.mxu0
  %1686 = vmatprep.subr.bf16.mxu0 %v597
  %1687 = vmatpush1.bf16.msra.mxu0 %v596
  %1688 = vmatprep.subr.bf16.mxu0 %v601
  %1689 = vmatpush1.bf16.msra.mxu0 %v600
  %1690 = vmatprep.subr.bf16.mxu0 %v605
  %1691 = vmatpush1.bf16.msra.mxu0 %v604
  %1692 = vmatprep.subr.bf16.mxu0 %v609
  %1693 = vmatpush1.bf16.msra.mxu0 %v608
  %1694 = vmatprep.subr.bf16.mxu0 %v613
  %1695 = vmatpush1.bf16.msra.mxu0 %v612
  %1696 = vmatprep.subr.bf16.mxu0 %v617
  %1697 = vmatpush1.bf16.msra.mxu0 %v616
  %1698 = vmatprep.subr.bf16.mxu0 %v621
  %1699 = vmatpush1.bf16.msra.mxu0 %v620
  %1700 = vmatprep.subr.bf16.mxu0 %v625
  %1701 = vmatpush1.bf16.msra.mxu0 %v624
  %1702 = vmatprep.subr.bf16.mxu0 0
  %1703 = vmatpush1.bf16.msra.mxu0 0
  %1704 = vmatprep.subr.bf16.mxu0 0
  %1705 = vmatpush1.bf16.msra.mxu0 0
  %1706 = vmatprep.subr.bf16.mxu0 0
  %1707 = vmatpush1.bf16.msra.mxu0 0
  %1708 = vmatprep.subr.bf16.mxu0 0
  %1709 = vmatpush1.bf16.msra.mxu0 0
  %1710 = vmatprep.subr.bf16.mxu0 0
  %1711 = vmatpush1.bf16.msra.mxu0 0
  %1712 = vmatprep.subr.bf16.mxu0 0
  %1713 = vmatpush1.bf16.msra.mxu0 0
  %1714 = vmatprep.subr.bf16.mxu0 0
  %1715 = vmatpush1.bf16.msra.mxu0 0
  %1716 = vmatprep.subr.bf16.mxu0 0
  %1717 = vmatpush1.bf16.msra.mxu0 0
  %1718 = vmatprep.mubr.bf16.mxu0 0
  %1719 = vmatmul.mubr.bf16.gmra.mrb[0].mxu0 %v1508
  %v1720 = vpop.f32.mrb[0].mxu0
  %v1721 = vadd.f32 0.0, %v1720
  %v1722 = vpop.f32.mrb[0].mxu0
  %v1723 = vadd.f32 0.0, %v1722
  %v1724 = vpop.f32.mrb[0].mxu0
  %v1725 = vpop.f32.mrb[0].mxu0
  %1726 = vdwg.mxu0
  %v1727 = vadd.f32 %v1641, %v1680
  %v1728 = vadd.f32 %v1642, %v1682
  %v1729 = vadd.f32 %v1643, %v1721
  %v1730 = vadd.f32 %v1644, %v1723
  %v1731 = vmul.f32 %v1727, 0.5
  %v1732 = vmul.f32 %v1728, 0.5
  %v1733 = vmul.f32 %v1729, 1.0
  %v1734 = vmul.f32 %v1730, 0.5
  %v1735 = vtanh.pop %v1731
  %v1736 = vtanh.pop %v1732
  %v1737 = vtanh.pop %v1733
  %v1738 = vtanh.pop %v1734
  %v1739 = vmul.f32 %v1735, 0.5
  %v1740 = vmul.f32 %v1736, 0.5
  %v1741 = vmul.f32 %v1737, 1.0
  %v1742 = vmul.f32 %v1738, 0.5
  %v1743 = vadd.f32 %v1739, 0.5
  %v1744 = vadd.f32 %v1740, 0.5
  %v1745 = vadd.f32 %v1741, 0.0
  %v1746 = vadd.f32 %v1742, 0.5
  %v1747 = vmul.f32 %v1744, %v1505
  %v1748 = vmul.f32 %v1743, %v1745
  %v1749 = vadd.f32 %v1747, %v1748
  %v1750 = vtanh.pop %v1749
  %v1751 = vmul.f32 %v1746, %v1750
  %v1752 = vpack.c.bf16 %v1751, %v1751
  %v1755 = vunpack.c.l.s4 1966171168
  %v1756 = vunpack.c.0.s8 %v1755
  %v1757 = vlaneseq
  %v1758 = vshrl.u32 %v1757, 7
  %v1759 = vsub.s32 %v1756, %v1758
  %v1760 = vrot.slane %v1752, %v1759
  %v1761 = vcombine.high %v1760, %v1760
  %v1763 = vunpack.c.l.s4 1966171168
  %v1764 = vunpack.c.0.s8 %v1763
  %v1765 = vlaneseq
  %v1766 = vshrl.u32 %v1765, 7
  %v1767 = vsub.s32 %v1764, %v1766
  %v1768 = vrot.slane %v1760, %v1767
  %v1770 = vunpack.c.l.s4 1966171168
  %v1771 = vunpack.c.0.s8 %v1770
  %v1772 = vlaneseq
  %v1773 = vshrl.u32 %v1772, 7
  %v1774 = vsub.s32 %v1771, %v1773
  %v1775 = vrot.slane %v1761, %v1774
  %v1776 = vcombine.high %v1768, %v1768
  %v1777 = vcombine.high %v1775, %v1775
  %v1778 = vunpack.i.l.s16 %v1768
  %v1779 = vunpack.i.h.s16 %v1768
  %v1780 = vunpack.i.l.s16 %v1775
  %v1781 = vunpack.i.h.s16 %v1775
  %v1782 = vunpack.i.l.s16 %v1776
  %v1783 = vunpack.i.h.s16 %v1776
  %v1784 = vunpack.i.l.s16 %v1777
  %v1785 = vunpack.i.h.s16 %v1777
  %v1786 = vpack.i.b16 %v1778, %v1778
  %v1787 = vpack.i.b16 %v1779, %v1779
  %v1788 = vpack.i.b16 %v1780, %v1780
  %v1789 = vpack.i.b16 %v1781, %v1781
  %v1790 = vpack.i.b16 %v1782, %v1782
  %v1791 = vpack.i.b16 %v1783, %v1783
  %v1792 = vpack.i.b16 %v1784, %v1784
  %v1793 = vpack.i.b16 %v1785, %v1785
  %v1795 = vunpack.c.l.s4 286326784
  %v1796 = vunpack.c.0.s8 %v1795
  %v1797 = vlaneseq
  %v1798 = vshrl.u32 %v1797, 7
  %v1799 = vsub.s32 %v1796, %v1798
  %v1800 = vrot.slane %v1786, %v1799
  %v1802 = vunpack.c.l.s4 286326784
  %v1803 = vunpack.c.0.s8 %v1802
  %v1804 = vlaneseq
  %v1805 = vshrl.u32 %v1804, 7
  %v1806 = vsub.s32 %v1803, %v1805
  %v1807 = vrot.slane %v1787, %v1806
  %v1809 = vunpack.c.l.s4 286326784
  %v1810 = vunpack.c.0.s8 %v1809
  %v1811 = vlaneseq
  %v1812 = vshrl.u32 %v1811, 7
  %v1813 = vsub.s32 %v1810, %v1812
  %v1814 = vrot.slane %v1788, %v1813
  %v1816 = vunpack.c.l.s4 286326784
  %v1817 = vunpack.c.0.s8 %v1816
  %v1818 = vlaneseq
  %v1819 = vshrl.u32 %v1818, 7
  %v1820 = vsub.s32 %v1817, %v1819
  %v1821 = vrot.slane %v1789, %v1820
  %v1823 = vunpack.c.l.s4 286326784
  %v1824 = vunpack.c.0.s8 %v1823
  %v1825 = vlaneseq
  %v1826 = vshrl.u32 %v1825, 7
  %v1827 = vsub.s32 %v1824, %v1826
  %v1828 = vrot.slane %v1790, %v1827
  %v1830 = vunpack.c.l.s4 286326784
  %v1831 = vunpack.c.0.s8 %v1830
  %v1832 = vlaneseq
  %v1833 = vshrl.u32 %v1832, 7
  %v1834 = vsub.s32 %v1831, %v1833
  %v1835 = vrot.slane %v1791, %v1834
  %v1837 = vunpack.c.l.s4 286326784
  %v1838 = vunpack.c.0.s8 %v1837
  %v1839 = vlaneseq
  %v1840 = vshrl.u32 %v1839, 7
  %v1841 = vsub.s32 %v1838, %v1840
  %v1842 = vrot.slane %v1792, %v1841
  %v1844 = vunpack.c.l.s4 286326784
  %v1845 = vunpack.c.0.s8 %v1844
  %v1846 = vlaneseq
  %v1847 = vshrl.u32 %v1846, 7
  %v1848 = vsub.s32 %v1845, %v1847
  %v1849 = vrot.slane %v1793, %v1848
  %vm1858 = vcmask 1042434
  %vm1859 = vsmask.f32 2304
  %vm1860 = vmand %vm1858, %vm1859
  %v1861 = vld [vmem:[%s6] sm:$0x4]
  %v1862 = vsel %vm1860, %v1800, %v1861
  %1863 = vst [vmem:[%s6] sm:$0x4] %v1862
  %v1864 = vld [vmem:[%s6 + $0x4] sm:$0x4]
  %v1865 = vsel %vm1860, %v1807, %v1864
  %1866 = vst [vmem:[%s6 + $0x4] sm:$0x4] %v1865
  %v1867 = vld [vmem:[%s6 + $0x8] sm:$0x4]
  %v1868 = vsel %vm1860, %v1814, %v1867
  %1869 = vst [vmem:[%s6 + $0x8] sm:$0x4] %v1868
  %v1870 = vld [vmem:[%s6 + $0xc] sm:$0x4]
  %v1871 = vsel %vm1860, %v1821, %v1870
  %1872 = vst [vmem:[%s6 + $0xc] sm:$0x4] %v1871
  %v1873 = vld [vmem:[%s6 + $0x10] sm:$0x4]
  %v1874 = vsel %vm1860, %v1828, %v1873
  %1875 = vst [vmem:[%s6 + $0x10] sm:$0x4] %v1874
  %v1876 = vld [vmem:[%s6 + $0x14] sm:$0x4]
  %v1877 = vsel %vm1860, %v1835, %v1876
  %1878 = vst [vmem:[%s6 + $0x14] sm:$0x4] %v1877
  %v1879 = vld [vmem:[%s6 + $0x18] sm:$0x4]
  %v1880 = vsel %vm1860, %v1842, %v1879
  %1881 = vst [vmem:[%s6 + $0x18] sm:$0x4] %v1880
  %v1882 = vld [vmem:[%s6 + $0x1c] sm:$0x4]
  %v1883 = vsel %vm1860, %v1849, %v1882
  %1884 = vst [vmem:[%s6 + $0x1c] sm:$0x4] %v1883
  %s1885 = scalar_lea.vmem [#allocation4], 160
  %v1886 = vld [vmem:[%s1885] sm:$0xff]
  %v1887 = vld [vmem:[%s1885 + $0x8] sm:$0xff]
  %v1888 = vld [vmem:[%s1885 + $0x10] sm:$0xff]
  %v1889 = vld [vmem:[%s1885 + $0x18] sm:$0xff]
  %1890 = vmatprep.subr.bf16.mxu0 %v595
  %1891 = vmatpush1.bf16.msra.mxu0 %v594
  %1892 = vmatprep.subr.bf16.mxu0 %v599
  %1893 = vmatpush1.bf16.msra.mxu0 %v598
  %1894 = vmatprep.subr.bf16.mxu0 %v603
  %1895 = vmatpush1.bf16.msra.mxu0 %v602
  %1896 = vmatprep.subr.bf16.mxu0 %v607
  %1897 = vmatpush1.bf16.msra.mxu0 %v606
  %1898 = vmatprep.subr.bf16.mxu0 %v611
  %1899 = vmatpush1.bf16.msra.mxu0 %v610
  %1900 = vmatprep.subr.bf16.mxu0 %v615
  %1901 = vmatpush1.bf16.msra.mxu0 %v614
  %1902 = vmatprep.subr.bf16.mxu0 %v619
  %1903 = vmatpush1.bf16.msra.mxu0 %v618
  %1904 = vmatprep.subr.bf16.mxu0 %v623
  %1905 = vmatpush1.bf16.msra.mxu0 %v622
  %1906 = vmatprep.subr.bf16.mxu0 0
  %1907 = vmatpush1.bf16.msra.mxu0 0
  %1908 = vmatprep.subr.bf16.mxu0 0
  %1909 = vmatpush1.bf16.msra.mxu0 0
  %1910 = vmatprep.subr.bf16.mxu0 0
  %1911 = vmatpush1.bf16.msra.mxu0 0
  %1912 = vmatprep.subr.bf16.mxu0 0
  %1913 = vmatpush1.bf16.msra.mxu0 0
  %1914 = vmatprep.subr.bf16.mxu0 0
  %1915 = vmatpush1.bf16.msra.mxu0 0
  %1916 = vmatprep.subr.bf16.mxu0 0
  %1917 = vmatpush1.bf16.msra.mxu0 0
  %1918 = vmatprep.subr.bf16.mxu0 0
  %1919 = vmatpush1.bf16.msra.mxu0 0
  %1920 = vmatprep.subr.bf16.mxu0 0
  %1921 = vmatpush1.bf16.msra.mxu0 0
  %1922 = vmatprep.mubr.bf16.mxu0 0
  %1923 = vmatmul.mubr.bf16.gmra.mrb[0].mxu0 %v1752
  %v1924 = vpop.f32.mrb[0].mxu0
  %v1925 = vadd.f32 0.0, %v1924
  %v1926 = vpop.f32.mrb[0].mxu0
  %v1927 = vadd.f32 0.0, %v1926
  %v1928 = vpop.f32.mrb[0].mxu0
  %v1929 = vpop.f32.mrb[0].mxu0
  %1930 = vdwg.mxu0
  %1931 = vmatprep.subr.bf16.mxu0 %v597
  %1932 = vmatpush1.bf16.msra.mxu0 %v596
  %1933 = vmatprep.subr.bf16.mxu0 %v601
  %1934 = vmatpush1.bf16.msra.mxu0 %v600
  %1935 = vmatprep.subr.bf16.mxu0 %v605
  %1936 = vmatpush1.bf16.msra.mxu0 %v604
  %1937 = vmatprep.subr.bf16.mxu0 %v609
  %1938 = vmatpush1.bf16.msra.mxu0 %v608
  %1939 = vmatprep.subr.bf16.mxu0 %v613
  %1940 = vmatpush1.bf16.msra.mxu0 %v612
  %1941 = vmatprep.subr.bf16.mxu0 %v617
  %1942 = vmatpush1.bf16.msra.mxu0 %v616
  %1943 = vmatprep.subr.bf16.mxu0 %v621
  %1944 = vmatpush1.bf16.msra.mxu0 %v620
  %1945 = vmatprep.subr.bf16.mxu0 %v625
  %1946 = vmatpush1.bf16.msra.mxu0 %v624
  %1947 = vmatprep.subr.bf16.mxu0 0
  %1948 = vmatpush1.bf16.msra.mxu0 0
  %1949 = vmatprep.subr.bf16.mxu0 0
  %1950 = vmatpush1.bf16.msra.mxu0 0
  %1951 = vmatprep.subr.bf16.mxu0 0
  %1952 = vmatpush1.bf16.msra.mxu0 0
  %1953 = vmatprep.subr.bf16.mxu0 0
  %1954 = vmatpush1.bf16.msra.mxu0 0
  %1955 = vmatprep.subr.bf16.mxu0 0
  %1956 = vmatpush1.bf16.msra.mxu0 0
  %1957 = vmatprep.subr.bf16.mxu0 0
  %1958 = vmatpush1.bf16.msra.mxu0 0
  %1959 = vmatprep.subr.bf16.mxu0 0
  %1960 = vmatpush1.bf16.msra.mxu0 0
  %1961 = vmatprep.subr.bf16.mxu0 0
  %1962 = vmatpush1.bf16.msra.mxu0 0
  %1963 = vmatprep.mubr.bf16.mxu0 0
  %1964 = vmatmul.mubr.bf16.gmra.mrb[0].mxu0 %v1752
  %v1965 = vpop.f32.mrb[0].mxu0
  %v1966 = vadd.f32 0.0, %v1965
  %v1967 = vpop.f32.mrb[0].mxu0
  %v1968 = vadd.f32 0.0, %v1967
  %v1969 = vpop.f32.mrb[0].mxu0
  %v1970 = vpop.f32.mrb[0].mxu0
  %1971 = vdwg.mxu0
  %v1972 = vadd.f32 %v1886, %v1925
  %v1973 = vadd.f32 %v1887, %v1927
  %v1974 = vadd.f32 %v1888, %v1966
  %v1975 = vadd.f32 %v1889, %v1968
  %v1976 = vmul.f32 %v1972, 0.5
  %v1977 = vmul.f32 %v1973, 0.5
  %v1978 = vmul.f32 %v1974, 1.0
  %v1979 = vmul.f32 %v1975, 0.5
  %v1980 = vtanh.pop %v1976
  %v1981 = vtanh.pop %v1977
  %v1982 = vtanh.pop %v1978
  %v1983 = vtanh.pop %v1979
  %v1984 = vmul.f32 %v1980, 0.5
  %v1985 = vmul.f32 %v1981, 0.5
  %v1986 = vmul.f32 %v1982, 1.0
  %v1987 = vmul.f32 %v1983, 0.5
  %v1988 = vadd.f32 %v1984, 0.5
  %v1989 = vadd.f32 %v1985, 0.5
  %v1990 = vadd.f32 %v1986, 0.0
  %v1991 = vadd.f32 %v1987, 0.5
  %v1992 = vmul.f32 %v1989, %v1749
  %v1993 = vmul.f32 %v1988, %v1990
  %v1994 = vadd.f32 %v1992, %v1993
  %v1995 = vtanh.pop %v1994
  %v1996 = vmul.f32 %v1991, %v1995
  %v1997 = vpack.c.bf16 %v1996, %v1996
  %v2000 = vunpack.c.l.s4 1966171168
  %v2001 = vunpack.c.0.s8 %v2000
  %v2002 = vlaneseq
  %v2003 = vshrl.u32 %v2002, 7
  %v2004 = vsub.s32 %v2001, %v2003
  %v2005 = vrot.slane %v1997, %v2004
  %v2006 = vcombine.high %v2005, %v2005
  %v2008 = vunpack.c.l.s4 1966171168
  %v2009 = vunpack.c.0.s8 %v2008
  %v2010 = vlaneseq
  %v2011 = vshrl.u32 %v2010, 7
  %v2012 = vsub.s32 %v2009, %v2011
  %v2013 = vrot.slane %v2005, %v2012
  %v2015 = vunpack.c.l.s4 1966171168
  %v2016 = vunpack.c.0.s8 %v2015
  %v2017 = vlaneseq
  %v2018 = vshrl.u32 %v2017, 7
  %v2019 = vsub.s32 %v2016, %v2018
  %v2020 = vrot.slane %v2006, %v2019
  %v2021 = vcombine.high %v2013, %v2013
  %v2022 = vcombine.high %v2020, %v2020
  %v2023 = vunpack.i.l.s16 %v2013
  %v2024 = vunpack.i.h.s16 %v2013
  %v2025 = vunpack.i.l.s16 %v2020
  %v2026 = vunpack.i.h.s16 %v2020
  %v2027 = vunpack.i.l.s16 %v2021
  %v2028 = vunpack.i.h.s16 %v2021
  %v2029 = vunpack.i.l.s16 %v2022
  %v2030 = vunpack.i.h.s16 %v2022
  %v2031 = vpack.i.b16 %v2023, %v2023
  %v2032 = vpack.i.b16 %v2024, %v2024
  %v2033 = vpack.i.b16 %v2025, %v2025
  %v2034 = vpack.i.b16 %v2026, %v2026
  %v2035 = vpack.i.b16 %v2027, %v2027
  %v2036 = vpack.i.b16 %v2028, %v2028
  %v2037 = vpack.i.b16 %v2029, %v2029
  %v2038 = vpack.i.b16 %v2030, %v2030
  %v2040 = vunpack.c.l.s4 286326784
  %v2041 = vunpack.c.0.s8 %v2040
  %v2042 = vlaneseq
  %v2043 = vshrl.u32 %v2042, 7
  %v2044 = vsub.s32 %v2041, %v2043
  %v2045 = vrot.slane %v2031, %v2044
  %v2047 = vunpack.c.l.s4 286326784
  %v2048 = vunpack.c.0.s8 %v2047
  %v2049 = vlaneseq
  %v2050 = vshrl.u32 %v2049, 7
  %v2051 = vsub.s32 %v2048, %v2050
  %v2052 = vrot.slane %v2032, %v2051
  %v2054 = vunpack.c.l.s4 286326784
  %v2055 = vunpack.c.0.s8 %v2054
  %v2056 = vlaneseq
  %v2057 = vshrl.u32 %v2056, 7
  %v2058 = vsub.s32 %v2055, %v2057
  %v2059 = vrot.slane %v2033, %v2058
  %v2061 = vunpack.c.l.s4 286326784
  %v2062 = vunpack.c.0.s8 %v2061
  %v2063 = vlaneseq
  %v2064 = vshrl.u32 %v2063, 7
  %v2065 = vsub.s32 %v2062, %v2064
  %v2066 = vrot.slane %v2034, %v2065
  %v2068 = vunpack.c.l.s4 286326784
  %v2069 = vunpack.c.0.s8 %v2068
  %v2070 = vlaneseq
  %v2071 = vshrl.u32 %v2070, 7
  %v2072 = vsub.s32 %v2069, %v2071
  %v2073 = vrot.slane %v2035, %v2072
  %v2075 = vunpack.c.l.s4 286326784
  %v2076 = vunpack.c.0.s8 %v2075
  %v2077 = vlaneseq
  %v2078 = vshrl.u32 %v2077, 7
  %v2079 = vsub.s32 %v2076, %v2078
  %v2080 = vrot.slane %v2036, %v2079
  %v2082 = vunpack.c.l.s4 286326784
  %v2083 = vunpack.c.0.s8 %v2082
  %v2084 = vlaneseq
  %v2085 = vshrl.u32 %v2084, 7
  %v2086 = vsub.s32 %v2083, %v2085
  %v2087 = vrot.slane %v2037, %v2086
  %v2089 = vunpack.c.l.s4 286326784
  %v2090 = vunpack.c.0.s8 %v2089
  %v2091 = vlaneseq
  %v2092 = vshrl.u32 %v2091, 7
  %v2093 = vsub.s32 %v2090, %v2092
  %v2094 = vrot.slane %v2038, %v2093
  %vm2103 = vsmask.f32 7946
  %vm2104 = vmand %vm1858, %vm2103
  %v2105 = vld [vmem:[%s6] sm:$0x4]
  %v2106 = vsel %vm2104, %v2045, %v2105
  %2107 = vst [vmem:[%s6] sm:$0x4] %v2106
  %v2108 = vld [vmem:[%s6 + $0x4] sm:$0x4]
  %v2109 = vsel %vm2104, %v2052, %v2108
  %2110 = vst [vmem:[%s6 + $0x4] sm:$0x4] %v2109
  %v2111 = vld [vmem:[%s6 + $0x8] sm:$0x4]
  %v2112 = vsel %vm2104, %v2059, %v2111
  %2113 = vst [vmem:[%s6 + $0x8] sm:$0x4] %v2112
  %v2114 = vld [vmem:[%s6 + $0xc] sm:$0x4]
  %v2115 = vsel %vm2104, %v2066, %v2114
  %2116 = vst [vmem:[%s6 + $0xc] sm:$0x4] %v2115
  %v2117 = vld [vmem:[%s6 + $0x10] sm:$0x4]
  %v2118 = vsel %vm2104, %v2073, %v2117
  %2119 = vst [vmem:[%s6 + $0x10] sm:$0x4] %v2118
  %v2120 = vld [vmem:[%s6 + $0x14] sm:$0x4]
  %v2121 = vsel %vm2104, %v2080, %v2120
  %2122 = vst [vmem:[%s6 + $0x14] sm:$0x4] %v2121
  %v2123 = vld [vmem:[%s6 + $0x18] sm:$0x4]
  %v2124 = vsel %vm2104, %v2087, %v2123
  %2125 = vst [vmem:[%s6 + $0x18] sm:$0x4] %v2124
  %v2126 = vld [vmem:[%s6 + $0x1c] sm:$0x4]
  %v2127 = vsel %vm2104, %v2094, %v2126
  %2128 = vst [vmem:[%s6 + $0x1c] sm:$0x4] %v2127
  %s2129 = scalar_lea.vmem [#allocation4], 192
  %v2130 = vld [vmem:[%s2129] sm:$0xff]
  %v2131 = vld [vmem:[%s2129 + $0x8] sm:$0xff]
  %v2132 = vld [vmem:[%s2129 + $0x10] sm:$0xff]
  %v2133 = vld [vmem:[%s2129 + $0x18] sm:$0xff]
  %2134 = vmatprep.subr.bf16.mxu0 %v595
  %2135 = vmatpush1.bf16.msra.mxu0 %v594
  %2136 = vmatprep.subr.bf16.mxu0 %v599
  %2137 = vmatpush1.bf16.msra.mxu0 %v598
  %2138 = vmatprep.subr.bf16.mxu0 %v603
  %2139 = vmatpush1.bf16.msra.mxu0 %v602
  %2140 = vmatprep.subr.bf16.mxu0 %v607
  %2141 = vmatpush1.bf16.msra.mxu0 %v606
  %2142 = vmatprep.subr.bf16.mxu0 %v611
  %2143 = vmatpush1.bf16.msra.mxu0 %v610
  %2144 = vmatprep.subr.bf16.mxu0 %v615
  %2145 = vmatpush1.bf16.msra.mxu0 %v614
  %2146 = vmatprep.subr.bf16.mxu0 %v619
  %2147 = vmatpush1.bf16.msra.mxu0 %v618
  %2148 = vmatprep.subr.bf16.mxu0 %v623
  %2149 = vmatpush1.bf16.msra.mxu0 %v622
  %2150 = vmatprep.subr.bf16.mxu0 0
  %2151 = vmatpush1.bf16.msra.mxu0 0
  %2152 = vmatprep.subr.bf16.mxu0 0
  %2153 = vmatpush1.bf16.msra.mxu0 0
  %2154 = vmatprep.subr.bf16.mxu0 0
  %2155 = vmatpush1.bf16.msra.mxu0 0
  %2156 = vmatprep.subr.bf16.mxu0 0
  %2157 = vmatpush1.bf16.msra.mxu0 0
  %2158 = vmatprep.subr.bf16.mxu0 0
  %2159 = vmatpush1.bf16.msra.mxu0 0
  %2160 = vmatprep.subr.bf16.mxu0 0
  %2161 = vmatpush1.bf16.msra.mxu0 0
  %2162 = vmatprep.subr.bf16.mxu0 0
  %2163 = vmatpush1.bf16.msra.mxu0 0
  %2164 = vmatprep.subr.bf16.mxu0 0
  %2165 = vmatpush1.bf16.msra.mxu0 0
  %2166 = vmatprep.mubr.bf16.mxu0 0
  %2167 = vmatmul.mubr.bf16.gmra.mrb[0].mxu0 %v1997
  %v2168 = vpop.f32.mrb[0].mxu0
  %v2169 = vadd.f32 0.0, %v2168
  %v2170 = vpop.f32.mrb[0].mxu0
  %v2171 = vadd.f32 0.0, %v2170
  %v2172 = vpop.f32.mrb[0].mxu0
  %v2173 = vpop.f32.mrb[0].mxu0
  %2174 = vdwg.mxu0
  %2175 = vmatprep.subr.bf16.mxu0 %v597
  %2176 = vmatpush1.bf16.msra.mxu0 %v596
  %2177 = vmatprep.subr.bf16.mxu0 %v601
  %2178 = vmatpush1.bf16.msra.mxu0 %v600
  %2179 = vmatprep.subr.bf16.mxu0 %v605
  %2180 = vmatpush1.bf16.msra.mxu0 %v604
  %2181 = vmatprep.subr.bf16.mxu0 %v609
  %2182 = vmatpush1.bf16.msra.mxu0 %v608
  %2183 = vmatprep.subr.bf16.mxu0 %v613
  %2184 = vmatpush1.bf16.msra.mxu0 %v612
  %2185 = vmatprep.subr.bf16.mxu0 %v617
  %2186 = vmatpush1.bf16.msra.mxu0 %v616
  %2187 = vmatprep.subr.bf16.mxu0 %v621
  %2188 = vmatpush1.bf16.msra.mxu0 %v620
  %2189 = vmatprep.subr.bf16.mxu0 %v625
  %2190 = vmatpush1.bf16.msra.mxu0 %v624
  %2191 = vmatprep.subr.bf16.mxu0 0
  %2192 = vmatpush1.bf16.msra.mxu0 0
  %2193 = vmatprep.subr.bf16.mxu0 0
  %2194 = vmatpush1.bf16.msra.mxu0 0
  %2195 = vmatprep.subr.bf16.mxu0 0
  %2196 = vmatpush1.bf16.msra.mxu0 0
  %2197 = vmatprep.subr.bf16.mxu0 0
  %2198 = vmatpush1.bf16.msra.mxu0 0
  %2199 = vmatprep.subr.bf16.mxu0 0
  %2200 = vmatpush1.bf16.msra.mxu0 0
  %2201 = vmatprep.subr.bf16.mxu0 0
  %2202 = vmatpush1.bf16.msra.mxu0 0
  %2203 = vmatprep.subr.bf16.mxu0 0
  %2204 = vmatpush1.bf16.msra.mxu0 0
  %2205 = vmatprep.subr.bf16.mxu0 0
  %2206 = vmatpush1.bf16.msra.mxu0 0
  %2207 = vmatprep.mubr.bf16.mxu0 0
  %2208 = vmatmul.mubr.bf16.gmra.mrb[0].mxu0 %v1997
  %v2209 = vpop.f32.mrb[0].mxu0
  %v2210 = vadd.f32 0.0, %v2209
  %v2211 = vpop.f32.mrb[0].mxu0
  %v2212 = vadd.f32 0.0, %v2211
  %v2213 = vpop.f32.mrb[0].mxu0
  %v2214 = vpop.f32.mrb[0].mxu0
  %2215 = vdwg.mxu0
  %v2216 = vadd.f32 %v2130, %v2169
  %v2217 = vadd.f32 %v2131, %v2171
  %v2218 = vadd.f32 %v2132, %v2210
  %v2219 = vadd.f32 %v2133, %v2212
  %v2220 = vmul.f32 %v2216, 0.5
  %v2221 = vmul.f32 %v2217, 0.5
  %v2222 = vmul.f32 %v2218, 1.0
  %v2223 = vmul.f32 %v2219, 0.5
  %v2224 = vtanh.pop %v2220
  %v2225 = vtanh.pop %v2221
  %v2226 = vtanh.pop %v2222
  %v2227 = vtanh.pop %v2223
  %v2228 = vmul.f32 %v2224, 0.5
  %v2229 = vmul.f32 %v2225, 0.5
  %v2230 = vmul.f32 %v2226, 1.0
  %v2231 = vmul.f32 %v2227, 0.5
  %v2232 = vadd.f32 %v2228, 0.5
  %v2233 = vadd.f32 %v2229, 0.5
  %v2234 = vadd.f32 %v2230, 0.0
  %v2235 = vadd.f32 %v2231, 0.5
  %v2236 = vmul.f32 %v2233, %v1994
  %v2237 = vmul.f32 %v2232, %v2234
  %v2238 = vadd.f32 %v2236, %v2237
  %v2239 = vtanh.pop %v2238
  %v2240 = vmul.f32 %v2235, %v2239
  %v2241 = vpack.c.bf16 %v2240, %v2240
  %v2244 = vunpack.c.l.s4 1966171168
  %v2245 = vunpack.c.0.s8 %v2244
  %v2246 = vlaneseq
  %v2247 = vshrl.u32 %v2246, 7
  %v2248 = vsub.s32 %v2245, %v2247
  %v2249 = vrot.slane %v2241, %v2248
  %v2250 = vcombine.high %v2249, %v2249
  %v2252 = vunpack.c.l.s4 1966171168
  %v2253 = vunpack.c.0.s8 %v2252
  %v2254 = vlaneseq
  %v2255 = vshrl.u32 %v2254, 7
  %v2256 = vsub.s32 %v2253, %v2255
  %v2257 = vrot.slane %v2249, %v2256
  %v2259 = vunpack.c.l.s4 1966171168
  %v2260 = vunpack.c.0.s8 %v2259
  %v2261 = vlaneseq
  %v2262 = vshrl.u32 %v2261, 7
  %v2263 = vsub.s32 %v2260, %v2262
  %v2264 = vrot.slane %v2250, %v2263
  %v2265 = vcombine.high %v2257, %v2257
  %v2266 = vcombine.high %v2264, %v2264
  %v2267 = vunpack.i.l.s16 %v2257
  %v2268 = vunpack.i.h.s16 %v2257
  %v2269 = vunpack.i.l.s16 %v2264
  %v2270 = vunpack.i.h.s16 %v2264
  %v2271 = vunpack.i.l.s16 %v2265
  %v2272 = vunpack.i.h.s16 %v2265
  %v2273 = vunpack.i.l.s16 %v2266
  %v2274 = vunpack.i.h.s16 %v2266
  %v2275 = vpack.i.b16 %v2267, %v2267
  %v2276 = vpack.i.b16 %v2268, %v2268
  %v2277 = vpack.i.b16 %v2269, %v2269
  %v2278 = vpack.i.b16 %v2270, %v2270
  %v2279 = vpack.i.b16 %v2271, %v2271
  %v2280 = vpack.i.b16 %v2272, %v2272
  %v2281 = vpack.i.b16 %v2273, %v2273
  %v2282 = vpack.i.b16 %v2274, %v2274
  %v2284 = vunpack.c.l.s4 286326784
  %v2285 = vunpack.c.0.s8 %v2284
  %v2286 = vlaneseq
  %v2287 = vshrl.u32 %v2286, 7
  %v2288 = vsub.s32 %v2285, %v2287
  %v2289 = vrot.slane %v2275, %v2288
  %v2291 = vunpack.c.l.s4 286326784
  %v2292 = vunpack.c.0.s8 %v2291
  %v2293 = vlaneseq
  %v2294 = vshrl.u32 %v2293, 7
  %v2295 = vsub.s32 %v2292, %v2294
  %v2296 = vrot.slane %v2276, %v2295
  %v2298 = vunpack.c.l.s4 286326784
  %v2299 = vunpack.c.0.s8 %v2298
  %v2300 = vlaneseq
  %v2301 = vshrl.u32 %v2300, 7
  %v2302 = vsub.s32 %v2299, %v2301
  %v2303 = vrot.slane %v2277, %v2302
  %v2305 = vunpack.c.l.s4 286326784
  %v2306 = vunpack.c.0.s8 %v2305
  %v2307 = vlaneseq
  %v2308 = vshrl.u32 %v2307, 7
  %v2309 = vsub.s32 %v2306, %v2308
  %v2310 = vrot.slane %v2278, %v2309
  %v2312 = vunpack.c.l.s4 286326784
  %v2313 = vunpack.c.0.s8 %v2312
  %v2314 = vlaneseq
  %v2315 = vshrl.u32 %v2314, 7
  %v2316 = vsub.s32 %v2313, %v2315
  %v2317 = vrot.slane %v2279, %v2316
  %v2319 = vunpack.c.l.s4 286326784
  %v2320 = vunpack.c.0.s8 %v2319
  %v2321 = vlaneseq
  %v2322 = vshrl.u32 %v2321, 7
  %v2323 = vsub.s32 %v2320, %v2322
  %v2324 = vrot.slane %v2280, %v2323
  %v2326 = vunpack.c.l.s4 286326784
  %v2327 = vunpack.c.0.s8 %v2326
  %v2328 = vlaneseq
  %v2329 = vshrl.u32 %v2328, 7
  %v2330 = vsub.s32 %v2327, %v2329
  %v2331 = vrot.slane %v2281, %v2330
  %v2333 = vunpack.c.l.s4 286326784
  %v2334 = vunpack.c.0.s8 %v2333
  %v2335 = vlaneseq
  %v2336 = vshrl.u32 %v2335, 7
  %v2337 = vsub.s32 %v2334, %v2336
  %v2338 = vrot.slane %v2282, %v2337
  %vm2347 = vcmask 1043459
  %vm2348 = vsmask.f32 3328
  %vm2349 = vmand %vm2347, %vm2348
  %v2350 = vld [vmem:[%s6] sm:$0x8]
  %v2351 = vsel %vm2349, %v2289, %v2350
  %2352 = vst [vmem:[%s6] sm:$0x8] %v2351
  %v2353 = vld [vmem:[%s6 + $0x4] sm:$0x8]
  %v2354 = vsel %vm2349, %v2296, %v2353
  %2355 = vst [vmem:[%s6 + $0x4] sm:$0x8] %v2354
  %v2356 = vld [vmem:[%s6 + $0x8] sm:$0x8]
  %v2357 = vsel %vm2349, %v2303, %v2356
  %2358 = vst [vmem:[%s6 + $0x8] sm:$0x8] %v2357
  %v2359 = vld [vmem:[%s6 + $0xc] sm:$0x8]
  %v2360 = vsel %vm2349, %v2310, %v2359
  %2361 = vst [vmem:[%s6 + $0xc] sm:$0x8] %v2360
  %v2362 = vld [vmem:[%s6 + $0x10] sm:$0x8]
  %v2363 = vsel %vm2349, %v2317, %v2362
  %2364 = vst [vmem:[%s6 + $0x10] sm:$0x8] %v2363
  %v2365 = vld [vmem:[%s6 + $0x14] sm:$0x8]
  %v2366 = vsel %vm2349, %v2324, %v2365
  %2367 = vst [vmem:[%s6 + $0x14] sm:$0x8] %v2366
  %v2368 = vld [vmem:[%s6 + $0x18] sm:$0x8]
  %v2369 = vsel %vm2349, %v2331, %v2368
  %2370 = vst [vmem:[%s6 + $0x18] sm:$0x8] %v2369
  %v2371 = vld [vmem:[%s6 + $0x1c] sm:$0x8]
  %v2372 = vsel %vm2349, %v2338, %v2371
  %2373 = vst [vmem:[%s6 + $0x1c] sm:$0x8] %v2372
  %s2374 = scalar_lea.vmem [#allocation4], 224
  %v2375 = vld [vmem:[%s2374] sm:$0xff]
  %v2376 = vld [vmem:[%s2374 + $0x8] sm:$0xff]
  %v2377 = vld [vmem:[%s2374 + $0x10] sm:$0xff]
  %v2378 = vld [vmem:[%s2374 + $0x18] sm:$0xff]
  %2379 = vmatprep.subr.bf16.mxu0 %v595
  %2380 = vmatpush1.bf16.msra.mxu0 %v594
  %2381 = vmatprep.subr.bf16.mxu0 %v599
  %2382 = vmatpush1.bf16.msra.mxu0 %v598
  %2383 = vmatprep.subr.bf16.mxu0 %v603
  %2384 = vmatpush1.bf16.msra.mxu0 %v602
  %2385 = vmatprep.subr.bf16.mxu0 %v607
  %2386 = vmatpush1.bf16.msra.mxu0 %v606
  %2387 = vmatprep.subr.bf16.mxu0 %v611
  %2388 = vmatpush1.bf16.msra.mxu0 %v610
  %2389 = vmatprep.subr.bf16.mxu0 %v615
  %2390 = vmatpush1.bf16.msra.mxu0 %v614
  %2391 = vmatprep.subr.bf16.mxu0 %v619
  %2392 = vmatpush1.bf16.msra.mxu0 %v618
  %2393 = vmatprep.subr.bf16.mxu0 %v623
  %2394 = vmatpush1.bf16.msra.mxu0 %v622
  %2395 = vmatprep.subr.bf16.mxu0 0
  %2396 = vmatpush1.bf16.msra.mxu0 0
  %2397 = vmatprep.subr.bf16.mxu0 0
  %2398 = vmatpush1.bf16.msra.mxu0 0
  %2399 = vmatprep.subr.bf16.mxu0 0
  %2400 = vmatpush1.bf16.msra.mxu0 0
  %2401 = vmatprep.subr.bf16.mxu0 0
  %2402 = vmatpush1.bf16.msra.mxu0 0
  %2403 = vmatprep.subr.bf16.mxu0 0
  %2404 = vmatpush1.bf16.msra.mxu0 0
  %2405 = vmatprep.subr.bf16.mxu0 0
  %2406 = vmatpush1.bf16.msra.mxu0 0
  %2407 = vmatprep.subr.bf16.mxu0 0
  %2408 = vmatpush1.bf16.msra.mxu0 0
  %2409 = vmatprep.subr.bf16.mxu0 0
  %2410 = vmatpush1.bf16.msra.mxu0 0
  %2411 = vmatprep.mubr.bf16.mxu0 0
  %2412 = vmatmul.mubr.bf16.gmra.mrb[0].mxu0 %v2241
  %v2413 = vpop.f32.mrb[0].mxu0
  %v2414 = vadd.f32 0.0, %v2413
  %v2415 = vpop.f32.mrb[0].mxu0
  %v2416 = vadd.f32 0.0, %v2415
  %v2417 = vpop.f32.mrb[0].mxu0
  %v2418 = vpop.f32.mrb[0].mxu0
  %2419 = vdwg.mxu0
  %2420 = vmatprep.subr.bf16.mxu0 %v597
  %2421 = vmatpush1.bf16.msra.mxu0 %v596
  %2422 = vmatprep.subr.bf16.mxu0 %v601
  %2423 = vmatpush1.bf16.msra.mxu0 %v600
  %2424 = vmatprep.subr.bf16.mxu0 %v605
  %2425 = vmatpush1.bf16.msra.mxu0 %v604
  %2426 = vmatprep.subr.bf16.mxu0 %v609
  %2427 = vmatpush1.bf16.msra.mxu0 %v608
  %2428 = vmatprep.subr.bf16.mxu0 %v613
  %2429 = vmatpush1.bf16.msra.mxu0 %v612
  %2430 = vmatprep.subr.bf16.mxu0 %v617
  %2431 = vmatpush1.bf16.msra.mxu0 %v616
  %2432 = vmatprep.subr.bf16.mxu0 %v621
  %2433 = vmatpush1.bf16.msra.mxu0 %v620
  %2434 = vmatprep.subr.bf16.mxu0 %v625
  %2435 = vmatpush1.bf16.msra.mxu0 %v624
  %2436 = vmatprep.subr.bf16.mxu0 0
  %2437 = vmatpush1.bf16.msra.mxu0 0
  %2438 = vmatprep.subr.bf16.mxu0 0
  %2439 = vmatpush1.bf16.msra.mxu0 0
  %2440 = vmatprep.subr.bf16.mxu0 0
  %2441 = vmatpush1.bf16.msra.mxu0 0
  %2442 = vmatprep.subr.bf16.mxu0 0
  %2443 = vmatpush1.bf16.msra.mxu0 0
  %2444 = vmatprep.subr.bf16.mxu0 0
  %2445 = vmatpush1.bf16.msra.mxu0 0
  %2446 = vmatprep.subr.bf16.mxu0 0
  %2447 = vmatpush1.bf16.msra.mxu0 0
  %2448 = vmatprep.subr.bf16.mxu0 0
  %2449 = vmatpush1.bf16.msra.mxu0 0
  %2450 = vmatprep.subr.bf16.mxu0 0
  %2451 = vmatpush1.bf16.msra.mxu0 0
  %2452 = vmatprep.mubr.bf16.mxu0 0
  %2453 = vmatmul.mubr.bf16.gmra.mrb[0].mxu0 %v2241
  %v2454 = vpop.f32.mrb[0].mxu0
  %v2455 = vadd.f32 0.0, %v2454
  %v2456 = vpop.f32.mrb[0].mxu0
  %v2457 = vadd.f32 0.0, %v2456
  %v2458 = vpop.f32.mrb[0].mxu0
  %v2459 = vpop.f32.mrb[0].mxu0
  %2460 = vdwg.mxu0
  %v2461 = vadd.f32 %v2375, %v2414
  %v2462 = vadd.f32 %v2376, %v2416
  %v2463 = vadd.f32 %v2377, %v2455
  %v2464 = vadd.f32 %v2378, %v2457
  %v2465 = vmul.f32 %v2461, 0.5
  %v2466 = vmul.f32 %v2462, 0.5
  %v2467 = vmul.f32 %v2463, 1.0
  %v2468 = vmul.f32 %v2464, 0.5
  %v2469 = vtanh.pop %v2465
  %v2470 = vtanh.pop %v2466
  %v2471 = vtanh.pop %v2467
  %v2472 = vtanh.pop %v2468
  %v2473 = vmul.f32 %v2469, 0.5
  %v2474 = vmul.f32 %v2470, 0.5
  %v2475 = vmul.f32 %v2471, 1.0
  %v2476 = vmul.f32 %v2472, 0.5
  %v2477 = vadd.f32 %v2473, 0.5
  %v2478 = vadd.f32 %v2474, 0.5
  %v2479 = vadd.f32 %v2475, 0.0
  %v2480 = vadd.f32 %v2476, 0.5
  %v2481 = vmul.f32 %v2478, %v2238
  %v2482 = vmul.f32 %v2477, %v2479
  %v2483 = vadd.f32 %v2481, %v2482
  %v2484 = vtanh.pop %v2483
  %v2485 = vmul.f32 %v2480, %v2484
  %v2486 = vpack.c.bf16 %v2485, %v2485
  %v2489 = vunpack.c.l.s4 1966171168
  %v2490 = vunpack.c.0.s8 %v2489
  %v2491 = vlaneseq
  %v2492 = vshrl.u32 %v2491, 7
  %v2493 = vsub.s32 %v2490, %v2492
  %v2494 = vrot.slane %v2486, %v2493
  %v2495 = vcombine.high %v2494, %v2494
  %v2497 = vunpack.c.l.s4 1966171168
  %v2498 = vunpack.c.0.s8 %v2497
  %v2499 = vlaneseq
  %v2500 = vshrl.u32 %v2499, 7
  %v2501 = vsub.s32 %v2498, %v2500
  %v2502 = vrot.slane %v2494, %v2501
  %v2504 = vunpack.c.l.s4 1966171168
  %v2505 = vunpack.c.0.s8 %v2504
  %v2506 = vlaneseq
  %v2507 = vshrl.u32 %v2506, 7
  %v2508 = vsub.s32 %v2505, %v2507
  %v2509 = vrot.slane %v2495, %v2508
  %v2510 = vcombine.high %v2502, %v2502
  %v2511 = vcombine.high %v2509, %v2509
  %v2512 = vunpack.i.l.s16 %v2502
  %v2513 = vunpack.i.h.s16 %v2502
  %v2514 = vunpack.i.l.s16 %v2509
  %v2515 = vunpack.i.h.s16 %v2509
  %v2516 = vunpack.i.l.s16 %v2510
  %v2517 = vunpack.i.h.s16 %v2510
  %v2518 = vunpack.i.l.s16 %v2511
  %v2519 = vunpack.i.h.s16 %v2511
  %v2520 = vpack.i.b16 %v2512, %v2512
  %v2521 = vpack.i.b16 %v2513, %v2513
  %v2522 = vpack.i.b16 %v2514, %v2514
  %v2523 = vpack.i.b16 %v2515, %v2515
  %v2524 = vpack.i.b16 %v2516, %v2516
  %v2525 = vpack.i.b16 %v2517, %v2517
  %v2526 = vpack.i.b16 %v2518, %v2518
  %v2527 = vpack.i.b16 %v2519, %v2519
  %v2529 = vunpack.c.l.s4 286326784
  %v2530 = vunpack.c.0.s8 %v2529
  %v2531 = vlaneseq
  %v2532 = vshrl.u32 %v2531, 7
  %v2533 = vsub.s32 %v2530, %v2532
  %v2534 = vrot.slane %v2520, %v2533
  %v2536 = vunpack.c.l.s4 286326784
  %v2537 = vunpack.c.0.s8 %v2536
  %v2538 = vlaneseq
  %v2539 = vshrl.u32 %v2538, 7
  %v2540 = vsub.s32 %v2537, %v2539
  %v2541 = vrot.slane %v2521, %v2540
  %v2543 = vunpack.c.l.s4 286326784
  %v2544 = vunpack.c.0.s8 %v2543
  %v2545 = vlaneseq
  %v2546 = vshrl.u32 %v2545, 7
  %v2547 = vsub.s32 %v2544, %v2546
  %v2548 = vrot.slane %v2522, %v2547
  %v2550 = vunpack.c.l.s4 286326784
  %v2551 = vunpack.c.0.s8 %v2550
  %v2552 = vlaneseq
  %v2553 = vshrl.u32 %v2552, 7
  %v2554 = vsub.s32 %v2551, %v2553
  %v2555 = vrot.slane %v2523, %v2554
  %v2557 = vunpack.c.l.s4 286326784
  %v2558 = vunpack.c.0.s8 %v2557
  %v2559 = vlaneseq
  %v2560 = vshrl.u32 %v2559, 7
  %v2561 = vsub.s32 %v2558, %v2560
  %v2562 = vrot.slane %v2524, %v2561
  %v2564 = vunpack.c.l.s4 286326784
  %v2565 = vunpack.c.0.s8 %v2564
  %v2566 = vlaneseq
  %v2567 = vshrl.u32 %v2566, 7
  %v2568 = vsub.s32 %v2565, %v2567
  %v2569 = vrot.slane %v2525, %v2568
  %v2571 = vunpack.c.l.s4 286326784
  %v2572 = vunpack.c.0.s8 %v2571
  %v2573 = vlaneseq
  %v2574 = vshrl.u32 %v2573, 7
  %v2575 = vsub.s32 %v2572, %v2574
  %v2576 = vrot.slane %v2526, %v2575
  %v2578 = vunpack.c.l.s4 286326784
  %v2579 = vunpack.c.0.s8 %v2578
  %v2580 = vlaneseq
  %v2581 = vshrl.u32 %v2580, 7
  %v2582 = vsub.s32 %v2579, %v2581
  %v2583 = vrot.slane %v2527, %v2582
  %vm2592 = vsmask.f32 7950
  %vm2593 = vmand %vm2347, %vm2592
  %v2594 = vld [vmem:[%s6] sm:$0x8]
  %v2595 = vsel %vm2593, %v2534, %v2594
  %2596 = vst [vmem:[%s6] sm:$0x8] %v2595
  %v2597 = vld [vmem:[%s6 + $0x4] sm:$0x8]
  %v2598 = vsel %vm2593, %v2541, %v2597
  %2599 = vst [vmem:[%s6 + $0x4] sm:$0x8] %v2598
  %v2600 = vld [vmem:[%s6 + $0x8] sm:$0x8]
  %v2601 = vsel %vm2593, %v2548, %v2600
  %2602 = vst [vmem:[%s6 + $0x8] sm:$0x8] %v2601
  %v2603 = vld [vmem:[%s6 + $0xc] sm:$0x8]
  %v2604 = vsel %vm2593, %v2555, %v2603
  %2605 = vst [vmem:[%s6 + $0xc] sm:$0x8] %v2604
  %v2606 = vld [vmem:[%s6 + $0x10] sm:$0x8]
  %v2607 = vsel %vm2593, %v2562, %v2606
  %2608 = vst [vmem:[%s6 + $0x10] sm:$0x8] %v2607
  %v2609 = vld [vmem:[%s6 + $0x14] sm:$0x8]
  %v2610 = vsel %vm2593, %v2569, %v2609
  %2611 = vst [vmem:[%s6 + $0x14] sm:$0x8] %v2610
  %v2612 = vld [vmem:[%s6 + $0x18] sm:$0x8]
  %v2613 = vsel %vm2593, %v2576, %v2612
  %2614 = vst [vmem:[%s6 + $0x18] sm:$0x8] %v2613
  %v2615 = vld [vmem:[%s6 + $0x1c] sm:$0x8]
  %v2616 = vsel %vm2593, %v2583, %v2615
  %2617 = vst [vmem:[%s6 + $0x1c] sm:$0x8] %v2616
  // Predicated region
  $region30: #{word_lstm_forward.4} parent=0 // pred_check
    %p2618 = pneg %p27
  $region31: #{word_lstm_forward.4} parent=0 // pred_check_branch
    %2620 = sbr.rel (%p2618) target = $region33
  $region32: #{word_lstm_forward.4} parent=0 // pred_region
    %2621 = vst [vmem:[%s7] sm:$0xff] %v2485
    %2622 = vst [vmem:[%s8] sm:$0xff] %v2483
  $region33: #{word_lstm_forward.4} parent=0 // pred_fallthru
    _
  %2623 = vst [vmem:[#allocation2] sm:$0xff] %v2485
  %2624 = vst [vmem:[#allocation3] sm:$0xff] %v2483
  // Predicated region
  $region34: #{word_lstm_forward.4} parent=0 // pred_check
    _
  $region35: #{word_lstm_forward.4} parent=0 // pred_check_branch
    %2626 = sbr.rel (0) target = $region37
  $region36: #{word_lstm_forward.4} parent=0 // pred_region
    _
  $region37: #{word_lstm_forward.4} parent=0 // pred_fallthru
    _
  // Predicated region
  $region38: #{word_lstm_forward.4} parent=0 // pred_check
    _
  $region39: #{word_lstm_forward.4} parent=0 // pred_check_branch
    %2628 = sbr.rel (0) target = $region41
  $region40: #{word_lstm_forward.4} parent=0 // pred_region
    _
  $region41: #{word_lstm_forward.4} parent=0 // pred_fallthru
    _
  // Predicated region
  $region42: #{word_lstm_forward.4} parent=0 // pred_check
    _
  $region43: #{word_lstm_forward.4} parent=0 // pred_check_branch
    %2630 = sbr.rel (0) target = $region45
  $region44: #{word_lstm_forward.4} parent=0 // pred_region
    _
  $region45: #{word_lstm_forward.4} parent=0 // pred_fallthru
    _
  // Predicated region
  $region46: #{word_lstm_forward.4} parent=0 // pred_check
    _
  $region47: #{word_lstm_forward.4} parent=0 // pred_check_branch
    %2632 = sbr.rel (0) target = $region49
  $region48: #{word_lstm_forward.4} parent=0 // pred_region
    _
  $region49: #{word_lstm_forward.4} parent=0 // pred_fallthru
    _
  // Predicated region
  $region50: #{word_lstm_forward.4} parent=0 // pred_check
    _
  $region51: #{word_lstm_forward.4} parent=0 // pred_check_branch
    %2634 = sbr.rel (0) target = $region53
  $region52: #{word_lstm_forward.4} parent=0 // pred_region
    _
  $region53: #{word_lstm_forward.4} parent=0 // pred_fallthru
    _
  // Predicated region
  $region54: #{word_lstm_forward.4} parent=0 // pred_check
    _
  $region55: #{word_lstm_forward.4} parent=0 // pred_check_branch
    %2636 = sbr.rel (0) target = $region57
  $region56: #{word_lstm_forward.4} parent=0 // pred_region
    _
  $region57: #{word_lstm_forward.4} parent=0 // pred_fallthru
    _

</llo_original>
